<compile_context>
chip_gen: v6e
topology: v6e:2x2x1
jax: 0.10.0
libtpu: 0.0.40
codegen_flags: <defaults>
</compile_context>

<pallas_src>
import functools

import jax
import jax.numpy as jnp
import numpy as np
from jax.experimental import pallas as pl
from jax.experimental.pallas import tpu as pltpu


def _r8(x):
    return (x + 7) // 8 * 8


def _rup(x, m):
    return (x + m - 1) // m * m


def _default_block_b():
    try:
        kind = jax.devices()[0].device_kind.lower()
    except Exception:
        return 2048
    if ('v5' in kind) or ('v6' in kind):
        return 4096          # 128 MiB VMEM parts: amortise per-step overhead more
    return 2048              # v7x (64 MiB VMEM) and unknown parts


def mixer_kernel(feat_ref, qs_ref, w_ent_ref, w_mix_ref, b_mix_ref,
                 w_b1b_ref, b_b1b_ref, out_ref, *,
                 n_agents, n_enemies, entity_dim, attn_dim, mixing_dim, phi):
    NA, NE = n_agents, n_enemies
    NEnt = NA + NE
    E, A, M = entity_dim, attn_dim, mixing_dim
    TR_OFF = _r8(E + 2 * A)          # per-agent trfm_w row inside the fused block
    HW_OFF = TR_OFF + 8              # per-agent hyper_w_1 row
    TRC_OFF = _r8(M)                 # trfm_w(out_mean) row in the mix head
    HWC_OFF = TRC_OFF + 8            # hyper_w_1(out_mean) row
    TB = feat_ref.shape[-1]          # batch chunk on the lane axis
    scale = 1.0 / (float(A) ** 0.5)

    # --- one batched projection for every entity ------------------------------
    # rows per entity = [embed(E) | query(A) | key(A) | trfm row | hyper_w_1 row]
    # biases are folded in via the constant-one feature row, so no broadcast
    # bias adds hit the VALU afterwards.  Output is already a dense slab: the
    # V/Q/K views below are aligned sub-slices, no jnp.stack copies.
    fused = jnp.einsum('erf,efb->erb', w_ent_ref[...], feat_ref[...],
                       preferred_element_type=jnp.float32)   # (NEnt, ROWS, TB)

    V = fused[:, :E, :]                        # (NEnt, E, TB)
    K = fused[:, E + A:E + 2 * A, :]           # (NEnt, A, TB)

    # --- entity self-attention over keys, batch on lanes ----------------------
    # only col[j] = sum_i softmax_i[j] is needed for the mean-pooled output.
    col = jnp.zeros((NEnt, TB), jnp.float32)
    for i in range(NEnt):
        q_i = fused[i, E:E + A, :]                               # (A, TB)
        e_i = jnp.sum(K * q_i[None, :, :], axis=1) * scale       # (NEnt, TB)
        m_i = jnp.max(e_i, axis=0, keepdims=True)                # (1, TB)
        p_i = jnp.exp(e_i - m_i)                                 # (NEnt, TB)
        denom = jnp.sum(p_i, axis=0, keepdims=True)              # (1, TB)
        inv = pl.reciprocal(denom, approx=True)                  # EUP seed
        inv = inv * (2.0 - denom * inv)                          # Newton -> f32
        col = col + p_i * inv
    out_mean = jnp.sum(V * col[:, None, :], axis=0) * (1.0 / NEnt)   # (E, TB)

    # --- hypernetworks: part applied to out_mean -------------------------------
    mix = jnp.dot(w_mix_ref[...], out_mean,
                  preferred_element_type=jnp.float32) + b_mix_ref[...]
    hid = mix[:M]
    hid = jnp.where(hid >= 0.0, hid, 0.01 * hid)                 # LeakyReLU
    # hyper_b_1 second layer; the /n_agents and the later sum over agents cancel
    b_raw = jnp.sum(hid * w_b1b_ref[...], axis=0, keepdims=True) + b_b1b_ref[...]
    tr_c = mix[TRC_OFF:TRC_OFF + 1]                              # (1, TB)
    hw_c = mix[HWC_OFF:HWC_OFF + 1]                              # (1, TB)

    # --- dueling mix -----------------------------------------------------------
    # q_tot = sum_i [ w_i*w1_i*aq_i - w_i*(w1_i-1)*mq_i ] + hyper_b_1(out)
    acc = jnp.zeros((phi, TB), jnp.float32)
    for i in range(NA):
        w_i = jnp.abs(tr_c + fused[i, TR_OFF:TR_OFF + 1, :]) + 1e-10    # (1, TB)
        w1_i = jnp.abs(hw_c + fused[i, HW_OFF:HW_OFF + 1, :]) + 1e-10
        ca = w_i * w1_i                  # w * w1
        cm = ca - w_i                    # w * (w1 - 1)
        acc = acc + qs_ref[i] * ca - qs_ref[NA + i] * cm
    out_ref[...] = (acc + b_raw).astype(out_ref.dtype)


def _pack_entity_weights(params, n_agents, n_enemies, f_al, f_en):
    """Per-entity fused projection weights (encoder/query/key/hypernet rows),
    with the bias folded into an extra 'ones' feature column."""
    w_al, b_al = params['w_ally'], params['b_ally'][0]          # (f_al,E), (E,)
    w_en, b_en = params['w_enemy'], params['b_enemy'][0]
    w_q, b_q = params['w_query'], params['b_query'][0]          # (E,A), (A,)
    w_k, b_k = params['w_key'], params['b_key'][0]
    E = w_al.shape[1]
    A = w_q.shape[1]
    # entity_mixing_input = [out_mean ; ally_embed]: split 1-layer hypernets
    # into the out_mean part (mix head) and the ally_embed part (composed here).
    w_tr_a = params['w_trfm'][E:]                                # (E,1)
    w_hw_a = params['w_hw1'][E:]

    TR_OFF = _r8(E + 2 * A)
    HW_OFF = TR_OFF + 8
    ENT_ROWS = HW_OFF + 8
    Fm = _r8(max(f_al, f_en) + 1)

    def ent_block(w_enc, b_enc, fe, is_ally):
        def rows(w_comp, b_comp, n):
            r = jnp.zeros((n, Fm), jnp.float32)
            r = r.at[:, :fe].set(w_comp.T)
            r = r.at[:, fe].set(b_comp)
            return r
        blk = [rows(w_enc, b_enc, E),
               rows(w_enc @ w_q, b_enc @ w_q + b_q, A),
               rows(w_enc @ w_k, b_enc @ w_k + b_k, A)]
        pad1 = TR_OFF - (E + 2 * A)
        if pad1:
            blk.append(jnp.zeros((pad1, Fm), jnp.float32))
        if is_ally:
            blk.append(rows(w_enc @ w_tr_a, b_enc @ w_tr_a, 1))
            blk.append(jnp.zeros((7, Fm), jnp.float32))
            blk.append(rows(w_enc @ w_hw_a, b_enc @ w_hw_a, 1))
            blk.append(jnp.zeros((7, Fm), jnp.float32))
        else:
            blk.append(jnp.zeros((ENT_ROWS - TR_OFF, Fm), jnp.float32))
        return jnp.concatenate(blk, axis=0)                      # (ENT_ROWS, Fm)

    al_blk = ent_block(w_al, b_al, f_al, True)
    en_blk = ent_block(w_en, b_en, f_en, False)
    w_ent = jnp.stack([al_blk] * n_agents + [en_blk] * n_enemies, axis=0)
    return w_ent                                                 # (NEnt, ENT_ROWS, Fm)


def _pack_mix_head(params):
    """Mix head applied to out_mean: [hyper_b_1 hidden (M) | trfm_c | hyper_w_1_c]."""
    E = params['w_ally'].shape[1]
    M = params['w_b1a'].shape[1]
    w_b1a, b_b1a = params['w_b1a'], params['b_b1a'][0]
    w_tr_c, w_hw_c = params['w_trfm'][:E], params['w_hw1'][:E]
    b_tr, b_hw = params['b_trfm'][0], params['b_hw1'][0]
    pad_m = _r8(M) - M
    z_e = lambda n: jnp.zeros((E, n), jnp.float32)
    z1 = lambda n: jnp.zeros((n,), jnp.float32)
    w_mix = jnp.concatenate(
        [w_b1a, z_e(pad_m), w_tr_c, z_e(7), w_hw_c, z_e(7)], axis=1).T   # (48, E)
    b_mix = jnp.concatenate(
        [b_b1a, z1(pad_m), b_tr, z1(7), b_hw, z1(7)])[:, None]           # (48, 1)
    return w_mix, b_mix


def mt_dmaq_qattn_mixer(agent_qs, max_qs, ally_states, enemy_states, params,
                        *, block_b=None):
    bs, seq_len, n_agents, phi = agent_qs.shape
    n_enemies, f_en = enemy_states.shape[2], enemy_states.shape[3]
    f_al = ally_states.shape[-1]
    E = params['w_ally'].shape[1]
    A = params['w_query'].shape[1]
    M = params['w_b1a'].shape[1]
    n_ent = n_agents + n_enemies
    Fm = _r8(max(f_al, f_en) + 1)

    B = bs * seq_len
    if block_b is None:
        block_b = _default_block_b()
    # Lane tile: as large as possible without over-padding small batches and
    # with >= 2 grid steps when B allows (v7x shards the parallel axis over 2 TCs).
    Bp128 = _rup(B, 128)
    if Bp128 <= 128:
        bb = 128
    else:
        bb = max(128, min(block_b, _rup(Bp128 // 2, 128)))
    Bp = _rup(B, bb)
    grid = (Bp // bb,)

    # --- merged wrapper-side layout: (entity, feature+ones, B) and (aq|mq) ----
    def pad_feat(x, f):
        x = x.reshape(B, x.shape[2], f).astype(jnp.float32)
        ones = jnp.ones((B, x.shape[1], 1), jnp.float32)
        pad = jnp.zeros((B, x.shape[1], Fm - f - 1), jnp.float32)
        return jnp.concatenate([x, ones, pad], axis=-1)

    feat = jnp.concatenate([pad_feat(ally_states, f_al),
                            pad_feat(enemy_states, f_en)], axis=1)   # (B, NEnt, Fm)
    feat = feat.transpose(1, 2, 0)                                   # (NEnt, Fm, B)
    qs = jnp.concatenate([agent_qs.reshape(B, n_agents, phi),
                          max_qs.reshape(B, n_agents, phi)],
                         axis=1).astype(jnp.float32)                 # (B, 2NA, phi)
    qs = qs.transpose(1, 2, 0)                                       # (2NA, phi, B)
    if Bp != B:
        feat = jnp.pad(feat, ((0, 0), (0, 0), (0, Bp - B)))
        qs = jnp.pad(qs, ((0, 0), (0, 0), (0, Bp - B)))

    w_ent = _pack_entity_weights(params, n_agents, n_enemies, f_al, f_en)
    w_mix, b_mix = _pack_mix_head(params)
    w_b1b, b_b1b = params['w_b1b'], params['b_b1b']
    weights = (w_ent, w_mix, b_mix, w_b1b, b_b1b)

    in_specs = [
        pl.BlockSpec((n_ent, Fm, bb), lambda i: (0, 0, i)),
        pl.BlockSpec((2 * n_agents, phi, bb), lambda i: (0, 0, i)),
        pl.BlockSpec(w_ent.shape, lambda i: (0, 0, 0)),
        pl.BlockSpec(w_mix.shape, lambda i: (0, 0)),
        pl.BlockSpec(b_mix.shape, lambda i: (0, 0)),
        pl.BlockSpec(w_b1b.shape, lambda i: (0, 0)),
        pl.BlockSpec(b_b1b.shape, lambda i: (0, 0)),
    ]
    out_spec = pl.BlockSpec((phi, bb), lambda i: (0, i))

    kernel = functools.partial(
        mixer_kernel, n_agents=n_agents, n_enemies=n_enemies,
        entity_dim=E, attn_dim=A, mixing_dim=M, phi=phi)

    ent_rows = w_ent.shape[1]
    mix_rows = w_mix.shape[0]
    flops_per_t = (
        2 * n_ent * ent_rows * Fm                      # batched entity projection
        + 2 * n_ent * n_ent * A + 8 * n_ent * n_ent    # energy + softmax
        + 4 * n_ent * E                                # value mix
        + 2 * mix_rows * E + 4 * M                     # hypernet mix head
        + n_agents * (8 + 4 * phi))                    # dueling mix
    bytes_accessed = int(feat.size + qs.size + phi * Bp
                         + sum(int(w.size) for w in weights)) * 4
    # 64 MiB scoped VMEM only for the big tiles on 128-MiB parts; 32 MiB
    # (safely under v7x's 64 MiB physical) otherwise.
    vmem_limit = (64 if bb >= 4096 else 32) * 1024 * 1024

    out = pl.pallas_call(
        kernel,
        grid=grid,
        in_specs=in_specs,
        out_specs=out_spec,
        out_shape=jax.ShapeDtypeStruct((phi, Bp), jnp.float32),
        compiler_params=pltpu.CompilerParams(
            dimension_semantics=("parallel",),
            vmem_limit_bytes=vmem_limit),
        cost_estimate=pl.CostEstimate(
            flops=int(flops_per_t) * Bp,
            transcendentals=(n_ent * n_ent + n_ent) * Bp,
            bytes_accessed=bytes_accessed),
    )(feat, qs, *weights)

    return out[:, :B].T.reshape(bs, seq_len, phi)


def init_params(key, f_al, f_en, entity_embed_dim, attn_embed_dim, mixing_embed_dim):
    specs = [
        ('ally', f_al, entity_embed_dim),
        ('enemy', f_en, entity_embed_dim),
        ('query', entity_embed_dim, attn_embed_dim),
        ('key', entity_embed_dim, attn_embed_dim),
        ('trfm', 2 * entity_embed_dim, 1),
        ('hw1', 2 * entity_embed_dim, 1),
        ('b1a', entity_embed_dim, mixing_embed_dim),
        ('b1b', mixing_embed_dim, 1),
    ]
    params = {}
    keys = jax.random.split(key, len(specs))
    for k, (name, fin, fout) in zip(keys, specs):
        kw, kb = jax.random.split(k)
        bound = 1.0 / np.sqrt(fin)
        params['w_' + name] = jax.random.uniform(kw, (fin, fout), jnp.float32, -bound, bound)
        params['b_' + name] = jax.random.uniform(kb, (1, fout), jnp.float32, -bound, bound)
    return params


def reference_forward(agent_qs, max_qs, ally_states, enemy_states, params):
    """Plain-JAX mirror of the PyTorch forward (for verification)."""
    p = params
    bs, seq, na, phi = agent_qs.shape
    ne = enemy_states.shape[2]
    A = p['w_query'].shape[1]
    E = p['w_ally'].shape[1]
    B = bs * seq

    ally_embed = ally_states @ p['w_ally'] + p['b_ally']
    enemy_embed = enemy_states @ p['w_enemy'] + p['b_enemy']
    entity = jnp.concatenate([ally_embed, enemy_embed], axis=2)

    q = (entity @ p['w_query'] + p['b_query']).reshape(B, na + ne, A)
    k = (entity @ p['w_key'] + p['b_key']).reshape(B, na + ne, A)
    energy = jnp.einsum('bia,bja->bij', q, k) / (A ** 0.5)
    score = jax.nn.softmax(energy, axis=-1)
    value = entity.reshape(B, na + ne, E)
    out = jnp.einsum('bij,bje->bie', score, value).mean(axis=1)       # (B, E)

    ally_e = ally_embed.reshape(B, na, E)
    emi = jnp.concatenate(
        [jnp.broadcast_to(out[:, None, :], (B, na, E)), ally_e], axis=-1)

    aq = agent_qs.reshape(B, na, phi)
    mq = max_qs.reshape(B, na, phi)

    w = jnp.abs(emi @ p['w_trfm'] + p['b_trfm']) + 1e-10
    pre = out @ p['w_b1a'] + p['b_b1a']
    hid = jnp.where(pre >= 0, pre, 0.01 * pre)
    b = ((hid @ p['w_b1b'] + p['b_b1b'])[:, :, None]) / na

    aq2 = w * aq + b
    mq2 = w * mq + b
    adv = aq2 - mq2
    w1 = jnp.abs(emi @ p['w_hw1'] + p['b_hw1']) + 1e-10
    adv_tot = jnp.einsum('bip,bio->bpo', adv, w1 - 1.0)[..., 0]
    q_sum = aq2.sum(axis=1)
    return (adv_tot + q_sum).reshape(bs, seq, phi)


if __name__ == "__main__":
    key = jax.random.PRNGKey(0)
    bs, seq_len = 2, 8
    n_agents, n_enemies = 4, 5
    f_al, f_en = 8, 6                 # state_nf_al, state_nf_en (no last-action feats)
    entity_embed_dim = 32
    attn_embed_dim = 16
    mixing_embed_dim = 32
    phi = 4

    k_in, k_p = jax.random.split(key)
    k1, k2, k3, k4 = jax.random.split(k_in, 4)
    agent_qs = jax.random.normal(k1, (bs, seq_len, n_agents, phi), jnp.float32)
    max_qs = agent_qs + jnp.abs(
        jax.random.normal(k2, (bs, seq_len, n_agents, phi), jnp.float32))
    ally_states = jax.random.normal(k3, (bs, seq_len, n_agents, f_al), jnp.float32)
    enemy_states = jax.random.normal(k4, (bs, seq_len, n_enemies, f_en), jnp.float32)

    params = init_params(k_p, f_al, f_en, entity_embed_dim, attn_embed_dim,
                         mixing_embed_dim)

    q_tot = mt_dmaq_qattn_mixer(agent_qs, max_qs, ally_states, enemy_states, params)
    q_tot = jax.block_until_ready(q_tot)

    ref = reference_forward(agent_qs, max_qs, ally_states, enemy_states, params)
    np.testing.assert_allclose(np.asarray(q_tot), np.asarray(ref),
                               rtol=2e-3, atol=2e-3)
    print("KERNEL_OK")
</pallas_src>

<mosaic_0001>
module attributes {stable_mosaic.version = 11 : i64} {
  func.func @mixer_kernel(%arg0: i32, %arg1: memref<9x16x128xf32, #tpu.memory_space<vmem>>, %arg2: memref<8x4x128xf32, #tpu.memory_space<vmem>>, %arg3: memref<9x80x16xf32, #tpu.memory_space<vmem>>, %arg4: memref<48x32xf32, #tpu.memory_space<vmem>>, %arg5: memref<48x1xf32, #tpu.memory_space<vmem>>, %arg6: memref<32x1xf32, #tpu.memory_space<vmem>>, %arg7: memref<1x1xf32, #tpu.memory_space<vmem>>, %arg8: memref<4x128xf32, #tpu.memory_space<vmem>>) attributes {dimension_semantics = [#tpu.dimension_semantics<parallel>], iteration_bounds = array<i64: 1>, scalar_prefetch = 0 : i64, scratch_operands = 0 : i64, tpu.core_type = #tpu.core_type<tc>, window_params = [{transform_indices = @transform_0, window_bounds = array<i64: 9, 16, 128>}, {transform_indices = @transform_1, window_bounds = array<i64: 8, 4, 128>}, {pipeline_mode = #tpu.pipeline_mode<synchronous>, transform_indices = @transform_2, window_bounds = array<i64: 9, 80, 16>}, {pipeline_mode = #tpu.pipeline_mode<synchronous>, transform_indices = @transform_3, window_bounds = array<i64: 48, 32>}, {pipeline_mode = #tpu.pipeline_mode<synchronous>, transform_indices = @transform_4, window_bounds = array<i64: 48, 1>}, {pipeline_mode = #tpu.pipeline_mode<synchronous>, transform_indices = @transform_5, window_bounds = array<i64: 32, 1>}, {pipeline_mode = #tpu.pipeline_mode<synchronous>, transform_indices = @transform_6, window_bounds = array<i64: 1, 1>}, {transform_indices = @transform_7, window_bounds = array<i64: 4, 128>}]} {
    %c0 = arith.constant 0 : index
    %c0_0 = arith.constant 0 : index
    %c0_1 = arith.constant 0 : index
    %0 = vector.load %arg3[%c0, %c0_0, %c0_1] : memref<9x80x16xf32, #tpu.memory_space<vmem>>, vector<9x80x16xf32>
    %c0_2 = arith.constant 0 : index
    %c0_3 = arith.constant 0 : index
    %c0_4 = arith.constant 0 : index
    %1 = vector.load %arg1[%c0_2, %c0_3, %c0_4] : memref<9x16x128xf32, #tpu.memory_space<vmem>>, vector<9x16x128xf32>
    "tpu.trace_start"() <{level = 10 : i32, message = "erf,efb->erb"}> : () -> ()
    %cst = arith.constant dense<0.000000e+00> : vector<9x80x128xf32>
    %2 = tpu.matmul %0, %1, %cst {dimension_numbers = #tpu.dot_dimension_numbers<[2], [1], [1], [2], [0, 0, 0, 1, 1, 2], [0], [0]>} : vector<9x80x16xf32>, vector<9x16x128xf32>, vector<9x80x128xf32> -> vector<9x80x128xf32>
    "tpu.trace_stop"() : () -> ()
    %3 = vector.extract_strided_slice %2 {offsets = [0, 0, 0], sizes = [9, 32, 128], strides = [1, 1, 1]} : vector<9x80x128xf32> to vector<9x32x128xf32>
    %4 = vector.extract_strided_slice %2 {offsets = [0, 48, 0], sizes = [9, 16, 128], strides = [1, 1, 1]} : vector<9x80x128xf32> to vector<9x16x128xf32>
    %cst_5 = arith.constant 0.000000e+00 : f32
    %5 = vector.broadcast %cst_5 : f32 to vector<9x128xf32>
    %6 = vector.extract_strided_slice %2 {offsets = [0, 32, 0], sizes = [1, 16, 128], strides = [1, 1, 1]} : vector<9x80x128xf32> to vector<1x16x128xf32>
    %7 = vector.shape_cast %6 : vector<1x16x128xf32> to vector<16x128xf32>
    %8 = vector.shape_cast %7 : vector<16x128xf32> to vector<1x16x128xf32>
    %9 = vector.broadcast %8 : vector<1x16x128xf32> to vector<9x16x128xf32>
    %10 = arith.mulf %4, %9 : vector<9x16x128xf32>
    %cst_6 = arith.constant dense<0.000000e+00> : vector<9x128xf32>
    %11 = vector.multi_reduction <add>, %10, %cst_6 [1] : vector<9x16x128xf32> to vector<9x128xf32>
    %cst_7 = arith.constant 2.500000e-01 : f32
    %12 = vector.broadcast %cst_7 : f32 to vector<9x128xf32>
    %13 = arith.mulf %11, %12 : vector<9x128xf32>
    %cst_8 = arith.constant dense<0xFF800000> : vector<128xf32>
    %14 = vector.multi_reduction <maximumf>, %13, %cst_8 [0] : vector<9x128xf32> to vector<128xf32>
    %15 = vector.shape_cast %14 : vector<128xf32> to vector<1x128xf32>
    %16 = vector.broadcast %15 : vector<1x128xf32> to vector<9x128xf32>
    %17 = arith.subf %13, %16 : vector<9x128xf32>
    %18 = math.exp %17 : vector<9x128xf32>
    %cst_9 = arith.constant dense<0.000000e+00> : vector<128xf32>
    %19 = vector.multi_reduction <add>, %18, %cst_9 [0] : vector<9x128xf32> to vector<128xf32>
    %20 = vector.shape_cast %19 : vector<128xf32> to vector<1x128xf32>
    %21 = tpu.reciprocal %20 {approx = true} : vector<1x128xf32> -> vector<1x128xf32>
    %22 = arith.mulf %20, %21 : vector<1x128xf32>
    %cst_10 = arith.constant 2.000000e+00 : f32
    %23 = vector.broadcast %cst_10 : f32 to vector<1x128xf32>
    %24 = arith.subf %23, %22 : vector<1x128xf32>
    %25 = arith.mulf %21, %24 : vector<1x128xf32>
    %26 = vector.broadcast %25 : vector<1x128xf32> to vector<9x128xf32>
    %27 = arith.mulf %18, %26 : vector<9x128xf32>
    %28 = arith.addf %5, %27 : vector<9x128xf32>
    %29 = vector.extract_strided_slice %2 {offsets = [1, 32, 0], sizes = [1, 16, 128], strides = [1, 1, 1]} : vector<9x80x128xf32> to vector<1x16x128xf32>
    %30 = vector.shape_cast %29 : vector<1x16x128xf32> to vector<16x128xf32>
    %31 = vector.shape_cast %30 : vector<16x128xf32> to vector<1x16x128xf32>
    %32 = vector.broadcast %31 : vector<1x16x128xf32> to vector<9x16x128xf32>
    %33 = arith.mulf %4, %32 : vector<9x16x128xf32>
    %cst_11 = arith.constant dense<0.000000e+00> : vector<9x128xf32>
    %34 = vector.multi_reduction <add>, %33, %cst_11 [1] : vector<9x16x128xf32> to vector<9x128xf32>
    %cst_12 = arith.constant 2.500000e-01 : f32
    %35 = vector.broadcast %cst_12 : f32 to vector<9x128xf32>
    %36 = arith.mulf %34, %35 : vector<9x128xf32>
    %cst_13 = arith.constant dense<0xFF800000> : vector<128xf32>
    %37 = vector.multi_reduction <maximumf>, %36, %cst_13 [0] : vector<9x128xf32> to vector<128xf32>
    %38 = vector.shape_cast %37 : vector<128xf32> to vector<1x128xf32>
    %39 = vector.broadcast %38 : vector<1x128xf32> to vector<9x128xf32>
    %40 = arith.subf %36, %39 : vector<9x128xf32>
    %41 = math.exp %40 : vector<9x128xf32>
    %cst_14 = arith.constant dense<0.000000e+00> : vector<128xf32>
    %42 = vector.multi_reduction <add>, %41, %cst_14 [0] : vector<9x128xf32> to vector<128xf32>
    %43 = vector.shape_cast %42 : vector<128xf32> to vector<1x128xf32>
    %44 = tpu.reciprocal %43 {approx = true} : vector<1x128xf32> -> vector<1x128xf32>
    %45 = arith.mulf %43, %44 : vector<1x128xf32>
    %cst_15 = arith.constant 2.000000e+00 : f32
    %46 = vector.broadcast %cst_15 : f32 to vector<1x128xf32>
    %47 = arith.subf %46, %45 : vector<1x128xf32>
    %48 = arith.mulf %44, %47 : vector<1x128xf32>
    %49 = vector.broadcast %48 : vector<1x128xf32> to vector<9x128xf32>
    %50 = arith.mulf %41, %49 : vector<9x128xf32>
    %51 = arith.addf %28, %50 : vector<9x128xf32>
    %52 = vector.extract_strided_slice %2 {offsets = [2, 32, 0], sizes = [1, 16, 128], strides = [1, 1, 1]} : vector<9x80x128xf32> to vector<1x16x128xf32>
    %53 = vector.shape_cast %52 : vector<1x16x128xf32> to vector<16x128xf32>
    %54 = vector.shape_cast %53 : vector<16x128xf32> to vector<1x16x128xf32>
    %55 = vector.broadcast %54 : vector<1x16x128xf32> to vector<9x16x128xf32>
    %56 = arith.mulf %4, %55 : vector<9x16x128xf32>
    %cst_16 = arith.constant dense<0.000000e+00> : vector<9x128xf32>
    %57 = vector.multi_reduction <add>, %56, %cst_16 [1] : vector<9x16x128xf32> to vector<9x128xf32>
    %cst_17 = arith.constant 2.500000e-01 : f32
    %58 = vector.broadcast %cst_17 : f32 to vector<9x128xf32>
    %59 = arith.mulf %57, %58 : vector<9x128xf32>
    %cst_18 = arith.constant dense<0xFF800000> : vector<128xf32>
    %60 = vector.multi_reduction <maximumf>, %59, %cst_18 [0] : vector<9x128xf32> to vector<128xf32>
    %61 = vector.shape_cast %60 : vector<128xf32> to vector<1x128xf32>
    %62 = vector.broadcast %61 : vector<1x128xf32> to vector<9x128xf32>
    %63 = arith.subf %59, %62 : vector<9x128xf32>
    %64 = math.exp %63 : vector<9x128xf32>
    %cst_19 = arith.constant dense<0.000000e+00> : vector<128xf32>
    %65 = vector.multi_reduction <add>, %64, %cst_19 [0] : vector<9x128xf32> to vector<128xf32>
    %66 = vector.shape_cast %65 : vector<128xf32> to vector<1x128xf32>
    %67 = tpu.reciprocal %66 {approx = true} : vector<1x128xf32> -> vector<1x128xf32>
    %68 = arith.mulf %66, %67 : vector<1x128xf32>
    %cst_20 = arith.constant 2.000000e+00 : f32
    %69 = vector.broadcast %cst_20 : f32 to vector<1x128xf32>
    %70 = arith.subf %69, %68 : vector<1x128xf32>
    %71 = arith.mulf %67, %70 : vector<1x128xf32>
    %72 = vector.broadcast %71 : vector<1x128xf32> to vector<9x128xf32>
    %73 = arith.mulf %64, %72 : vector<9x128xf32>
    %74 = arith.addf %51, %73 : vector<9x128xf32>
    %75 = vector.extract_strided_slice %2 {offsets = [3, 32, 0], sizes = [1, 16, 128], strides = [1, 1, 1]} : vector<9x80x128xf32> to vector<1x16x128xf32>
    %76 = vector.shape_cast %75 : vector<1x16x128xf32> to vector<16x128xf32>
    %77 = vector.shape_cast %76 : vector<16x128xf32> to vector<1x16x128xf32>
    %78 = vector.broadcast %77 : vector<1x16x128xf32> to vector<9x16x128xf32>
    %79 = arith.mulf %4, %78 : vector<9x16x128xf32>
    %cst_21 = arith.constant dense<0.000000e+00> : vector<9x128xf32>
    %80 = vector.multi_reduction <add>, %79, %cst_21 [1] : vector<9x16x128xf32> to vector<9x128xf32>
    %cst_22 = arith.constant 2.500000e-01 : f32
    %81 = vector.broadcast %cst_22 : f32 to vector<9x128xf32>
    %82 = arith.mulf %80, %81 : vector<9x128xf32>
    %cst_23 = arith.constant dense<0xFF800000> : vector<128xf32>
    %83 = vector.multi_reduction <maximumf>, %82, %cst_23 [0] : vector<9x128xf32> to vector<128xf32>
    %84 = vector.shape_cast %83 : vector<128xf32> to vector<1x128xf32>
    %85 = vector.broadcast %84 : vector<1x128xf32> to vector<9x128xf32>
    %86 = arith.subf %82, %85 : vector<9x128xf32>
    %87 = math.exp %86 : vector<9x128xf32>
    %cst_24 = arith.constant dense<0.000000e+00> : vector<128xf32>
    %88 = vector.multi_reduction <add>, %87, %cst_24 [0] : vector<9x128xf32> to vector<128xf32>
    %89 = vector.shape_cast %88 : vector<128xf32> to vector<1x128xf32>
    %90 = tpu.reciprocal %89 {approx = true} : vector<1x128xf32> -> vector<1x128xf32>
    %91 = arith.mulf %89, %90 : vector<1x128xf32>
    %cst_25 = arith.constant 2.000000e+00 : f32
    %92 = vector.broadcast %cst_25 : f32 to vector<1x128xf32>
    %93 = arith.subf %92, %91 : vector<1x128xf32>
    %94 = arith.mulf %90, %93 : vector<1x128xf32>
    %95 = vector.broadcast %94 : vector<1x128xf32> to vector<9x128xf32>
    %96 = arith.mulf %87, %95 : vector<9x128xf32>
    %97 = arith.addf %74, %96 : vector<9x128xf32>
    %98 = vector.extract_strided_slice %2 {offsets = [4, 32, 0], sizes = [1, 16, 128], strides = [1, 1, 1]} : vector<9x80x128xf32> to vector<1x16x128xf32>
    %99 = vector.shape_cast %98 : vector<1x16x128xf32> to vector<16x128xf32>
    %100 = vector.shape_cast %99 : vector<16x128xf32> to vector<1x16x128xf32>
    %101 = vector.broadcast %100 : vector<1x16x128xf32> to vector<9x16x128xf32>
    %102 = arith.mulf %4, %101 : vector<9x16x128xf32>
    %cst_26 = arith.constant dense<0.000000e+00> : vector<9x128xf32>
    %103 = vector.multi_reduction <add>, %102, %cst_26 [1] : vector<9x16x128xf32> to vector<9x128xf32>
    %cst_27 = arith.constant 2.500000e-01 : f32
    %104 = vector.broadcast %cst_27 : f32 to vector<9x128xf32>
    %105 = arith.mulf %103, %104 : vector<9x128xf32>
    %cst_28 = arith.constant dense<0xFF800000> : vector<128xf32>
    %106 = vector.multi_reduction <maximumf>, %105, %cst_28 [0] : vector<9x128xf32> to vector<128xf32>
    %107 = vector.shape_cast %106 : vector<128xf32> to vector<1x128xf32>
    %108 = vector.broadcast %107 : vector<1x128xf32> to vector<9x128xf32>
    %109 = arith.subf %105, %108 : vector<9x128xf32>
    %110 = math.exp %109 : vector<9x128xf32>
    %cst_29 = arith.constant dense<0.000000e+00> : vector<128xf32>
    %111 = vector.multi_reduction <add>, %110, %cst_29 [0] : vector<9x128xf32> to vector<128xf32>
    %112 = vector.shape_cast %111 : vector<128xf32> to vector<1x128xf32>
    %113 = tpu.reciprocal %112 {approx = true} : vector<1x128xf32> -> vector<1x128xf32>
    %114 = arith.mulf %112, %113 : vector<1x128xf32>
    %cst_30 = arith.constant 2.000000e+00 : f32
    %115 = vector.broadcast %cst_30 : f32 to vector<1x128xf32>
    %116 = arith.subf %115, %114 : vector<1x128xf32>
    %117 = arith.mulf %113, %116 : vector<1x128xf32>
    %118 = vector.broadcast %117 : vector<1x128xf32> to vector<9x128xf32>
    %119 = arith.mulf %110, %118 : vector<9x128xf32>
    %120 = arith.addf %97, %119 : vector<9x128xf32>
    %121 = vector.extract_strided_slice %2 {offsets = [5, 32, 0], sizes = [1, 16, 128], strides = [1, 1, 1]} : vector<9x80x128xf32> to vector<1x16x128xf32>
    %122 = vector.shape_cast %121 : vector<1x16x128xf32> to vector<16x128xf32>
    %123 = vector.shape_cast %122 : vector<16x128xf32> to vector<1x16x128xf32>
    %124 = vector.broadcast %123 : vector<1x16x128xf32> to vector<9x16x128xf32>
    %125 = arith.mulf %4, %124 : vector<9x16x128xf32>
    %cst_31 = arith.constant dense<0.000000e+00> : vector<9x128xf32>
    %126 = vector.multi_reduction <add>, %125, %cst_31 [1] : vector<9x16x128xf32> to vector<9x128xf32>
    %cst_32 = arith.constant 2.500000e-01 : f32
    %127 = vector.broadcast %cst_32 : f32 to vector<9x128xf32>
    %128 = arith.mulf %126, %127 : vector<9x128xf32>
    %cst_33 = arith.constant dense<0xFF800000> : vector<128xf32>
    %129 = vector.multi_reduction <maximumf>, %128, %cst_33 [0] : vector<9x128xf32> to vector<128xf32>
    %130 = vector.shape_cast %129 : vector<128xf32> to vector<1x128xf32>
    %131 = vector.broadcast %130 : vector<1x128xf32> to vector<9x128xf32>
    %132 = arith.subf %128, %131 : vector<9x128xf32>
    %133 = math.exp %132 : vector<9x128xf32>
    %cst_34 = arith.constant dense<0.000000e+00> : vector<128xf32>
    %134 = vector.multi_reduction <add>, %133, %cst_34 [0] : vector<9x128xf32> to vector<128xf32>
    %135 = vector.shape_cast %134 : vector<128xf32> to vector<1x128xf32>
    %136 = tpu.reciprocal %135 {approx = true} : vector<1x128xf32> -> vector<1x128xf32>
    %137 = arith.mulf %135, %136 : vector<1x128xf32>
    %cst_35 = arith.constant 2.000000e+00 : f32
    %138 = vector.broadcast %cst_35 : f32 to vector<1x128xf32>
    %139 = arith.subf %138, %137 : vector<1x128xf32>
    %140 = arith.mulf %136, %139 : vector<1x128xf32>
    %141 = vector.broadcast %140 : vector<1x128xf32> to vector<9x128xf32>
    %142 = arith.mulf %133, %141 : vector<9x128xf32>
    %143 = arith.addf %120, %142 : vector<9x128xf32>
    %144 = vector.extract_strided_slice %2 {offsets = [6, 32, 0], sizes = [1, 16, 128], strides = [1, 1, 1]} : vector<9x80x128xf32> to vector<1x16x128xf32>
    %145 = vector.shape_cast %144 : vector<1x16x128xf32> to vector<16x128xf32>
    %146 = vector.shape_cast %145 : vector<16x128xf32> to vector<1x16x128xf32>
    %147 = vector.broadcast %146 : vector<1x16x128xf32> to vector<9x16x128xf32>
    %148 = arith.mulf %4, %147 : vector<9x16x128xf32>
    %cst_36 = arith.constant dense<0.000000e+00> : vector<9x128xf32>
    %149 = vector.multi_reduction <add>, %148, %cst_36 [1] : vector<9x16x128xf32> to vector<9x128xf32>
    %cst_37 = arith.constant 2.500000e-01 : f32
    %150 = vector.broadcast %cst_37 : f32 to vector<9x128xf32>
    %151 = arith.mulf %149, %150 : vector<9x128xf32>
    %cst_38 = arith.constant dense<0xFF800000> : vector<128xf32>
    %152 = vector.multi_reduction <maximumf>, %151, %cst_38 [0] : vector<9x128xf32> to vector<128xf32>
    %153 = vector.shape_cast %152 : vector<128xf32> to vector<1x128xf32>
    %154 = vector.broadcast %153 : vector<1x128xf32> to vector<9x128xf32>
    %155 = arith.subf %151, %154 : vector<9x128xf32>
    %156 = math.exp %155 : vector<9x128xf32>
    %cst_39 = arith.constant dense<0.000000e+00> : vector<128xf32>
    %157 = vector.multi_reduction <add>, %156, %cst_39 [0] : vector<9x128xf32> to vector<128xf32>
    %158 = vector.shape_cast %157 : vector<128xf32> to vector<1x128xf32>
    %159 = tpu.reciprocal %158 {approx = true} : vector<1x128xf32> -> vector<1x128xf32>
    %160 = arith.mulf %158, %159 : vector<1x128xf32>
    %cst_40 = arith.constant 2.000000e+00 : f32
    %161 = vector.broadcast %cst_40 : f32 to vector<1x128xf32>
    %162 = arith.subf %161, %160 : vector<1x128xf32>
    %163 = arith.mulf %159, %162 : vector<1x128xf32>
    %164 = vector.broadcast %163 : vector<1x128xf32> to vector<9x128xf32>
    %165 = arith.mulf %156, %164 : vector<9x128xf32>
    %166 = arith.addf %143, %165 : vector<9x128xf32>
    %167 = vector.extract_strided_slice %2 {offsets = [7, 32, 0], sizes = [1, 16, 128], strides = [1, 1, 1]} : vector<9x80x128xf32> to vector<1x16x128xf32>
    %168 = vector.shape_cast %167 : vector<1x16x128xf32> to vector<16x128xf32>
    %169 = vector.shape_cast %168 : vector<16x128xf32> to vector<1x16x128xf32>
    %170 = vector.broadcast %169 : vector<1x16x128xf32> to vector<9x16x128xf32>
    %171 = arith.mulf %4, %170 : vector<9x16x128xf32>
    %cst_41 = arith.constant dense<0.000000e+00> : vector<9x128xf32>
    %172 = vector.multi_reduction <add>, %171, %cst_41 [1] : vector<9x16x128xf32> to vector<9x128xf32>
    %cst_42 = arith.constant 2.500000e-01 : f32
    %173 = vector.broadcast %cst_42 : f32 to vector<9x128xf32>
    %174 = arith.mulf %172, %173 : vector<9x128xf32>
    %cst_43 = arith.constant dense<0xFF800000> : vector<128xf32>
    %175 = vector.multi_reduction <maximumf>, %174, %cst_43 [0] : vector<9x128xf32> to vector<128xf32>
    %176 = vector.shape_cast %175 : vector<128xf32> to vector<1x128xf32>
    %177 = vector.broadcast %176 : vector<1x128xf32> to vector<9x128xf32>
    %178 = arith.subf %174, %177 : vector<9x128xf32>
    %179 = math.exp %178 : vector<9x128xf32>
    %cst_44 = arith.constant dense<0.000000e+00> : vector<128xf32>
    %180 = vector.multi_reduction <add>, %179, %cst_44 [0] : vector<9x128xf32> to vector<128xf32>
    %181 = vector.shape_cast %180 : vector<128xf32> to vector<1x128xf32>
    %182 = tpu.reciprocal %181 {approx = true} : vector<1x128xf32> -> vector<1x128xf32>
    %183 = arith.mulf %181, %182 : vector<1x128xf32>
    %cst_45 = arith.constant 2.000000e+00 : f32
    %184 = vector.broadcast %cst_45 : f32 to vector<1x128xf32>
    %185 = arith.subf %184, %183 : vector<1x128xf32>
    %186 = arith.mulf %182, %185 : vector<1x128xf32>
    %187 = vector.broadcast %186 : vector<1x128xf32> to vector<9x128xf32>
    %188 = arith.mulf %179, %187 : vector<9x128xf32>
    %189 = arith.addf %166, %188 : vector<9x128xf32>
    %190 = vector.extract_strided_slice %2 {offsets = [8, 32, 0], sizes = [1, 16, 128], strides = [1, 1, 1]} : vector<9x80x128xf32> to vector<1x16x128xf32>
    %191 = vector.shape_cast %190 : vector<1x16x128xf32> to vector<16x128xf32>
    %192 = vector.shape_cast %191 : vector<16x128xf32> to vector<1x16x128xf32>
    %193 = vector.broadcast %192 : vector<1x16x128xf32> to vector<9x16x128xf32>
    %194 = arith.mulf %4, %193 : vector<9x16x128xf32>
    %cst_46 = arith.constant dense<0.000000e+00> : vector<9x128xf32>
    %195 = vector.multi_reduction <add>, %194, %cst_46 [1] : vector<9x16x128xf32> to vector<9x128xf32>
    %cst_47 = arith.constant 2.500000e-01 : f32
    %196 = vector.broadcast %cst_47 : f32 to vector<9x128xf32>
    %197 = arith.mulf %195, %196 : vector<9x128xf32>
    %cst_48 = arith.constant dense<0xFF800000> : vector<128xf32>
    %198 = vector.multi_reduction <maximumf>, %197, %cst_48 [0] : vector<9x128xf32> to vector<128xf32>
    %199 = vector.shape_cast %198 : vector<128xf32> to vector<1x128xf32>
    %200 = vector.broadcast %199 : vector<1x128xf32> to vector<9x128xf32>
    %201 = arith.subf %197, %200 : vector<9x128xf32>
    %202 = math.exp %201 : vector<9x128xf32>
    %cst_49 = arith.constant dense<0.000000e+00> : vector<128xf32>
    %203 = vector.multi_reduction <add>, %202, %cst_49 [0] : vector<9x128xf32> to vector<128xf32>
    %204 = vector.shape_cast %203 : vector<128xf32> to vector<1x128xf32>
    %205 = tpu.reciprocal %204 {approx = true} : vector<1x128xf32> -> vector<1x128xf32>
    %206 = arith.mulf %204, %205 : vector<1x128xf32>
    %cst_50 = arith.constant 2.000000e+00 : f32
    %207 = vector.broadcast %cst_50 : f32 to vector<1x128xf32>
    %208 = arith.subf %207, %206 : vector<1x128xf32>
    %209 = arith.mulf %205, %208 : vector<1x128xf32>
    %210 = vector.broadcast %209 : vector<1x128xf32> to vector<9x128xf32>
    %211 = arith.mulf %202, %210 : vector<9x128xf32>
    %212 = arith.addf %189, %211 : vector<9x128xf32>
    %213 = vector.shape_cast %212 : vector<9x128xf32> to vector<9x1x128xf32>
    %214 = vector.broadcast %213 : vector<9x1x128xf32> to vector<9x32x128xf32>
    %215 = arith.mulf %3, %214 : vector<9x32x128xf32>
    %cst_51 = arith.constant dense<0.000000e+00> : vector<32x128xf32>
    %216 = vector.multi_reduction <add>, %215, %cst_51 [0] : vector<9x32x128xf32> to vector<32x128xf32>
    %cst_52 = arith.constant 0.111111112 : f32
    %217 = vector.broadcast %cst_52 : f32 to vector<32x128xf32>
    %218 = arith.mulf %216, %217 : vector<32x128xf32>
    %c0_53 = arith.constant 0 : index
    %c0_54 = arith.constant 0 : index
    %219 = vector.load %arg4[%c0_53, %c0_54] : memref<48x32xf32, #tpu.memory_space<vmem>>, vector<48x32xf32>
    %cst_55 = arith.constant dense<0.000000e+00> : vector<48x128xf32>
    %220 = tpu.matmul %219, %218, %cst_55 {dimension_numbers = #tpu.dot_dimension_numbers<[1], [0], [0], [1], [0, 0, 1, 1], [], []>} : vector<48x32xf32>, vector<32x128xf32>, vector<48x128xf32> -> vector<48x128xf32>
    %c0_56 = arith.constant 0 : index
    %c0_57 = arith.constant 0 : index
    %221 = vector.load %arg5[%c0_56, %c0_57] : memref<48x1xf32, #tpu.memory_space<vmem>>, vector<48x1xf32>
    %222 = vector.broadcast %221 : vector<48x1xf32> to vector<48x128xf32>
    %223 = arith.addf %220, %222 : vector<48x128xf32>
    %224 = vector.extract_strided_slice %223 {offsets = [0, 0], sizes = [32, 128], strides = [1, 1]} : vector<48x128xf32> to vector<32x128xf32>
    %cst_58 = arith.constant 0.000000e+00 : f32
    %225 = vector.broadcast %cst_58 : f32 to vector<32x128xf32>
    %226 = arith.cmpf oge, %224, %225 : vector<32x128xf32>
    %cst_59 = arith.constant 0.00999999977 : f32
    %227 = vector.broadcast %cst_59 : f32 to vector<32x128xf32>
    %228 = arith.mulf %227, %224 : vector<32x128xf32>
    %229 = arith.select %226, %224, %228 : vector<32x128xi1>, vector<32x128xf32>
    %c0_60 = arith.constant 0 : index
    %c0_61 = arith.constant 0 : index
    %230 = vector.load %arg6[%c0_60, %c0_61] : memref<32x1xf32, #tpu.memory_space<vmem>>, vector<32x1xf32>
    %231 = vector.broadcast %230 : vector<32x1xf32> to vector<32x128xf32>
    %232 = arith.mulf %229, %231 : vector<32x128xf32>
    %cst_62 = arith.constant dense<0.000000e+00> : vector<128xf32>
    %233 = vector.multi_reduction <add>, %232, %cst_62 [0] : vector<32x128xf32> to vector<128xf32>
    %234 = vector.shape_cast %233 : vector<128xf32> to vector<1x128xf32>
    %c0_63 = arith.constant 0 : index
    %c0_64 = arith.constant 0 : index
    %235 = vector.load %arg7[%c0_63, %c0_64] : memref<1x1xf32, #tpu.memory_space<vmem>>, vector<1x1xf32>
    %236 = vector.broadcast %235 : vector<1x1xf32> to vector<1x128xf32>
    %237 = arith.addf %234, %236 : vector<1x128xf32>
    %238 = vector.extract_strided_slice %223 {offsets = [32, 0], sizes = [1, 128], strides = [1, 1]} : vector<48x128xf32> to vector<1x128xf32>
    %239 = vector.extract_strided_slice %223 {offsets = [40, 0], sizes = [1, 128], strides = [1, 1]} : vector<48x128xf32> to vector<1x128xf32>
    %cst_65 = arith.constant 0.000000e+00 : f32
    %240 = vector.broadcast %cst_65 : f32 to vector<4x128xf32>
    %241 = vector.extract_strided_slice %2 {offsets = [0, 64, 0], sizes = [1, 1, 128], strides = [1, 1, 1]} : vector<9x80x128xf32> to vector<1x1x128xf32>
    %242 = vector.shape_cast %241 : vector<1x1x128xf32> to vector<1x128xf32>
    %243 = arith.addf %238, %242 : vector<1x128xf32>
    %244 = math.absf %243 : vector<1x128xf32>
    %cst_66 = arith.constant 1.000000e-10 : f32
    %245 = vector.broadcast %cst_66 : f32 to vector<1x128xf32>
    %246 = arith.addf %244, %245 : vector<1x128xf32>
    %247 = vector.extract_strided_slice %2 {offsets = [0, 72, 0], sizes = [1, 1, 128], strides = [1, 1, 1]} : vector<9x80x128xf32> to vector<1x1x128xf32>
    %248 = vector.shape_cast %247 : vector<1x1x128xf32> to vector<1x128xf32>
    %249 = arith.addf %239, %248 : vector<1x128xf32>
    %250 = math.absf %249 : vector<1x128xf32>
    %cst_67 = arith.constant 1.000000e-10 : f32
    %251 = vector.broadcast %cst_67 : f32 to vector<1x128xf32>
    %252 = arith.addf %250, %251 : vector<1x128xf32>
    %253 = arith.mulf %246, %252 : vector<1x128xf32>
    %254 = arith.subf %253, %246 : vector<1x128xf32>
    %c0_68 = arith.constant 0 : index
    %c0_69 = arith.constant 0 : index
    %c0_70 = arith.constant 0 : index
    %255 = vector.load %arg2[%c0_68, %c0_69, %c0_70] : memref<8x4x128xf32, #tpu.memory_space<vmem>>, vector<1x4x128xf32>
    %256 = vector.shape_cast %255 : vector<1x4x128xf32> to vector<4x128xf32>
    %257 = vector.broadcast %253 : vector<1x128xf32> to vector<4x128xf32>
    %258 = arith.mulf %256, %257 : vector<4x128xf32>
    %259 = arith.addf %240, %258 : vector<4x128xf32>
    %c4 = arith.constant 4 : index
    %c0_71 = arith.constant 0 : index
    %c0_72 = arith.constant 0 : index
    %260 = vector.load %arg2[%c4, %c0_71, %c0_72] : memref<8x4x128xf32, #tpu.memory_space<vmem>>, vector<1x4x128xf32>
    %261 = vector.shape_cast %260 : vector<1x4x128xf32> to vector<4x128xf32>
    %262 = vector.broadcast %254 : vector<1x128xf32> to vector<4x128xf32>
    %263 = arith.mulf %261, %262 : vector<4x128xf32>
    %264 = arith.subf %259, %263 : vector<4x128xf32>
    %265 = vector.extract_strided_slice %2 {offsets = [1, 64, 0], sizes = [1, 1, 128], strides = [1, 1, 1]} : vector<9x80x128xf32> to vector<1x1x128xf32>
    %266 = vector.shape_cast %265 : vector<1x1x128xf32> to vector<1x128xf32>
    %267 = arith.addf %238, %266 : vector<1x128xf32>
    %268 = math.absf %267 : vector<1x128xf32>
    %cst_73 = arith.constant 1.000000e-10 : f32
    %269 = vector.broadcast %cst_73 : f32 to vector<1x128xf32>
    %270 = arith.addf %268, %269 : vector<1x128xf32>
    %271 = vector.extract_strided_slice %2 {offsets = [1, 72, 0], sizes = [1, 1, 128], strides = [1, 1, 1]} : vector<9x80x128xf32> to vector<1x1x128xf32>
    %272 = vector.shape_cast %271 : vector<1x1x128xf32> to vector<1x128xf32>
    %273 = arith.addf %239, %272 : vector<1x128xf32>
    %274 = math.absf %273 : vector<1x128xf32>
    %cst_74 = arith.constant 1.000000e-10 : f32
    %275 = vector.broadcast %cst_74 : f32 to vector<1x128xf32>
    %276 = arith.addf %274, %275 : vector<1x128xf32>
    %277 = arith.mulf %270, %276 : vector<1x128xf32>
    %278 = arith.subf %277, %270 : vector<1x128xf32>
    %c1 = arith.constant 1 : index
    %c0_75 = arith.constant 0 : index
    %c0_76 = arith.constant 0 : index
    %279 = vector.load %arg2[%c1, %c0_75, %c0_76] : memref<8x4x128xf32, #tpu.memory_space<vmem>>, vector<1x4x128xf32>
    %280 = vector.shape_cast %279 : vector<1x4x128xf32> to vector<4x128xf32>
    %281 = vector.broadcast %277 : vector<1x128xf32> to vector<4x128xf32>
    %282 = arith.mulf %280, %281 : vector<4x128xf32>
    %283 = arith.addf %264, %282 : vector<4x128xf32>
    %c5 = arith.constant 5 : index
    %c0_77 = arith.constant 0 : index
    %c0_78 = arith.constant 0 : index
    %284 = vector.load %arg2[%c5, %c0_77, %c0_78] : memref<8x4x128xf32, #tpu.memory_space<vmem>>, vector<1x4x128xf32>
    %285 = vector.shape_cast %284 : vector<1x4x128xf32> to vector<4x128xf32>
    %286 = vector.broadcast %278 : vector<1x128xf32> to vector<4x128xf32>
    %287 = arith.mulf %285, %286 : vector<4x128xf32>
    %288 = arith.subf %283, %287 : vector<4x128xf32>
    %289 = vector.extract_strided_slice %2 {offsets = [2, 64, 0], sizes = [1, 1, 128], strides = [1, 1, 1]} : vector<9x80x128xf32> to vector<1x1x128xf32>
    %290 = vector.shape_cast %289 : vector<1x1x128xf32> to vector<1x128xf32>
    %291 = arith.addf %238, %290 : vector<1x128xf32>
    %292 = math.absf %291 : vector<1x128xf32>
    %cst_79 = arith.constant 1.000000e-10 : f32
    %293 = vector.broadcast %cst_79 : f32 to vector<1x128xf32>
    %294 = arith.addf %292, %293 : vector<1x128xf32>
    %295 = vector.extract_strided_slice %2 {offsets = [2, 72, 0], sizes = [1, 1, 128], strides = [1, 1, 1]} : vector<9x80x128xf32> to vector<1x1x128xf32>
    %296 = vector.shape_cast %295 : vector<1x1x128xf32> to vector<1x128xf32>
    %297 = arith.addf %239, %296 : vector<1x128xf32>
    %298 = math.absf %297 : vector<1x128xf32>
    %cst_80 = arith.constant 1.000000e-10 : f32
    %299 = vector.broadcast %cst_80 : f32 to vector<1x128xf32>
    %300 = arith.addf %298, %299 : vector<1x128xf32>
    %301 = arith.mulf %294, %300 : vector<1x128xf32>
    %302 = arith.subf %301, %294 : vector<1x128xf32>
    %c2 = arith.constant 2 : index
    %c0_81 = arith.constant 0 : index
    %c0_82 = arith.constant 0 : index
    %303 = vector.load %arg2[%c2, %c0_81, %c0_82] : memref<8x4x128xf32, #tpu.memory_space<vmem>>, vector<1x4x128xf32>
    %304 = vector.shape_cast %303 : vector<1x4x128xf32> to vector<4x128xf32>
    %305 = vector.broadcast %301 : vector<1x128xf32> to vector<4x128xf32>
    %306 = arith.mulf %304, %305 : vector<4x128xf32>
    %307 = arith.addf %288, %306 : vector<4x128xf32>
    %c6 = arith.constant 6 : index
    %c0_83 = arith.constant 0 : index
    %c0_84 = arith.constant 0 : index
    %308 = vector.load %arg2[%c6, %c0_83, %c0_84] : memref<8x4x128xf32, #tpu.memory_space<vmem>>, vector<1x4x128xf32>
    %309 = vector.shape_cast %308 : vector<1x4x128xf32> to vector<4x128xf32>
    %310 = vector.broadcast %302 : vector<1x128xf32> to vector<4x128xf32>
    %311 = arith.mulf %309, %310 : vector<4x128xf32>
    %312 = arith.subf %307, %311 : vector<4x128xf32>
    %313 = vector.extract_strided_slice %2 {offsets = [3, 64, 0], sizes = [1, 1, 128], strides = [1, 1, 1]} : vector<9x80x128xf32> to vector<1x1x128xf32>
    %314 = vector.shape_cast %313 : vector<1x1x128xf32> to vector<1x128xf32>
    %315 = arith.addf %238, %314 : vector<1x128xf32>
    %316 = math.absf %315 : vector<1x128xf32>
    %cst_85 = arith.constant 1.000000e-10 : f32
    %317 = vector.broadcast %cst_85 : f32 to vector<1x128xf32>
    %318 = arith.addf %316, %317 : vector<1x128xf32>
    %319 = vector.extract_strided_slice %2 {offsets = [3, 72, 0], sizes = [1, 1, 128], strides = [1, 1, 1]} : vector<9x80x128xf32> to vector<1x1x128xf32>
    %320 = vector.shape_cast %319 : vector<1x1x128xf32> to vector<1x128xf32>
    %321 = arith.addf %239, %320 : vector<1x128xf32>
    %322 = math.absf %321 : vector<1x128xf32>
    %cst_86 = arith.constant 1.000000e-10 : f32
    %323 = vector.broadcast %cst_86 : f32 to vector<1x128xf32>
    %324 = arith.addf %322, %323 : vector<1x128xf32>
    %325 = arith.mulf %318, %324 : vector<1x128xf32>
    %326 = arith.subf %325, %318 : vector<1x128xf32>
    %c3 = arith.constant 3 : index
    %c0_87 = arith.constant 0 : index
    %c0_88 = arith.constant 0 : index
    %327 = vector.load %arg2[%c3, %c0_87, %c0_88] : memref<8x4x128xf32, #tpu.memory_space<vmem>>, vector<1x4x128xf32>
    %328 = vector.shape_cast %327 : vector<1x4x128xf32> to vector<4x128xf32>
    %329 = vector.broadcast %325 : vector<1x128xf32> to vector<4x128xf32>
    %330 = arith.mulf %328, %329 : vector<4x128xf32>
    %331 = arith.addf %312, %330 : vector<4x128xf32>
    %c7 = arith.constant 7 : index
    %c0_89 = arith.constant 0 : index
    %c0_90 = arith.constant 0 : index
    %332 = vector.load %arg2[%c7, %c0_89, %c0_90] : memref<8x4x128xf32, #tpu.memory_space<vmem>>, vector<1x4x128xf32>
    %333 = vector.shape_cast %332 : vector<1x4x128xf32> to vector<4x128xf32>
    %334 = vector.broadcast %326 : vector<1x128xf32> to vector<4x128xf32>
    %335 = arith.mulf %333, %334 : vector<4x128xf32>
    %336 = arith.subf %331, %335 : vector<4x128xf32>
    %337 = vector.broadcast %237 : vector<1x128xf32> to vector<4x128xf32>
    %338 = arith.addf %336, %337 : vector<4x128xf32>
    %c0_91 = arith.constant 0 : index
    %c0_92 = arith.constant 0 : index
    %339 = vector.load %arg8[%c0_91, %c0_92] : memref<4x128xf32, #tpu.memory_space<vmem>>, vector<4x128xf32>
    tpu.vector_store %arg8[%c0_91, %c0_92], %338 {strides = array<i32>} : memref<4x128xf32, #tpu.memory_space<vmem>>, vector<4x128xf32>,
    return
  }
  func.func @transform_0(%arg0: i32) -> (i32, i32, i32) {
    %c0_i32 = arith.constant 0 : i32
    %c0_i32_0 = arith.constant 0 : i32
    %c0_i32_1 = arith.constant 0 : i32
    return %c0_i32, %c0_i32_0, %arg0 : i32, i32, i32
  }
  func.func @transform_1(%arg0: i32) -> (i32, i32, i32) {
    %c0_i32 = arith.constant 0 : i32
    %c0_i32_0 = arith.constant 0 : i32
    %c0_i32_1 = arith.constant 0 : i32
    return %c0_i32, %c0_i32_0, %arg0 : i32, i32, i32
  }
  func.func @transform_2(%arg0: i32) -> (i32, i32, i32) {
    %c0_i32 = arith.constant 0 : i32
    %c0_i32_0 = arith.constant 0 : i32
    %c0_i32_1 = arith.constant 0 : i32
    %c0_i32_2 = arith.constant 0 : i32
    return %c0_i32, %c0_i32_0, %c0_i32_1 : i32, i32, i32
  }
  func.func @transform_3(%arg0: i32) -> (i32, i32) {
    %c0_i32 = arith.constant 0 : i32
    %c0_i32_0 = arith.constant 0 : i32
    %c0_i32_1 = arith.constant 0 : i32
    return %c0_i32, %c0_i32_0 : i32, i32
  }
  func.func @transform_4(%arg0: i32) -> (i32, i32) {
    %c0_i32 = arith.constant 0 : i32
    %c0_i32_0 = arith.constant 0 : i32
    %c0_i32_1 = arith.constant 0 : i32
    return %c0_i32, %c0_i32_0 : i32, i32
  }
  func.func @transform_5(%arg0: i32) -> (i32, i32) {
    %c0_i32 = arith.constant 0 : i32
    %c0_i32_0 = arith.constant 0 : i32
    %c0_i32_1 = arith.constant 0 : i32
    return %c0_i32, %c0_i32_0 : i32, i32
  }
  func.func @transform_6(%arg0: i32) -> (i32, i32) {
    %c0_i32 = arith.constant 0 : i32
    %c0_i32_0 = arith.constant 0 : i32
    %c0_i32_1 = arith.constant 0 : i32
    return %c0_i32, %c0_i32_0 : i32, i32
  }
  func.func @transform_7(%arg0: i32) -> (i32, i32) {
    %c0_i32 = arith.constant 0 : i32
    %c0_i32_0 = arith.constant 0 : i32
    return %c0_i32, %arg0 : i32, i32
  }
}

</mosaic_0001>

<llo_original>
// kernel: tpu_custom_call.1
$region0: #{tpu_custom_call.1}
  #allocation0 [shape = 'u32[]', space=smem, size = 0x4, offset = 0x4, fixed_abs, tag = 'smem constant byte address 0x4 - core index']
  #allocation1 [shape = 'u32[144,128]{1,0:T(1,128)}', space=vmem, size = 0x12000, scoped, tag = 'internal scratch']
  #allocation2 [shape = 'f32[1,1]{1,0:T(1,128)S(1)}', space=vmem, size = 0x200, scoped, tag = 'scoped memory for tpu_custom_call.1']
  %s0 = inlined_call_operand.vmem [shape: f32[9,16,128], index: 0, kind: input, shape index: {}]
  %s1 = inlined_call_operand.vmem [shape: f32[8,4,128], index: 1, kind: input, shape index: {}]
  %s2 = inlined_call_operand.vmem [shape: f32[9,80,16], index: 2, kind: input, shape index: {}]
  %s3 = inlined_call_operand.vmem [shape: f32[48,32], index: 3, kind: input, shape index: {}]
  %s4 = inlined_call_operand.vmem [shape: f32[48,1], index: 4, kind: input, shape index: {}]
  %s5 = inlined_call_operand.vmem [shape: f32[32,1], index: 5, kind: input, shape index: {}]
  %s6 = inlined_call_operand.<no memory space> [shape: f32[1,1], index: 6, kind: input, shape index: {}]
  %s7 = inlined_call_operand.hbm [shape: f32[4,128], index: 7, kind: output, shape index: {}]
  %s8 = sld [smem:[#allocation0]]
  $region38: #{tpu_custom_call.1} parent=0
    _
  %s10 = ssub.s32 1, %s8
  %s11 = scalar_select 0, %s10, %s8
  %v12 = vstv %s6
  %13 = vst [vmem:[#allocation2] sm:$0x1] %v12
  $region1: #{tpu_custom_call.1} parent=0
    #allocation3 [shape = 'u8[2048]{0}', space=vmem, size = 0x800, scoped, tag = 'output window, operand 0, single buffered']
    #allocation4 [shape = 's32[1]{0}', space=sflag, size = 0x4, scoped, tag = 'scoped memory for tpu_custom_call.1']
    %14 = vsyncpa [#allocation4], 0
    // Predicated region
    $region2: #{tpu_custom_call.1} parent=1 // pred_check
      _
    $region3: #{tpu_custom_call.1} parent=1 // pred_check_branch
      %16 = sbr.rel (0) target = $region5
    $region4: #{tpu_custom_call.1} parent=1 // pred_region
      _
    $region5: #{tpu_custom_call.1} parent=1 // pred_fallthru
      _
    // Predicated region
    $region6: #{tpu_custom_call.1} parent=1 // pred_check
      _
    $region7: #{tpu_custom_call.1} parent=1 // pred_check_branch
      %18 = sbr.rel (0) target = $region9
    $region8: #{tpu_custom_call.1} parent=1 // pred_region
      _
    $region9: #{tpu_custom_call.1} parent=1 // pred_fallthru
      _
    // Predicated region
    $region10: #{tpu_custom_call.1} parent=1 // pred_check
      _
    $region11: #{tpu_custom_call.1} parent=1 // pred_check_branch
      %20 = sbr.rel (0) target = $region13
    $region12: #{tpu_custom_call.1} parent=1 // pred_region
      _
    $region13: #{tpu_custom_call.1} parent=1 // pred_fallthru
      _
    // Predicated region
    $region14: #{tpu_custom_call.1} parent=1 // pred_check
      _
    $region15: #{tpu_custom_call.1} parent=1 // pred_check_branch
      %22 = sbr.rel (0) target = $region17
    $region16: #{tpu_custom_call.1} parent=1 // pred_region
      _
    $region17: #{tpu_custom_call.1} parent=1 // pred_fallthru
      _
    // Predicated region
    $region18: #{tpu_custom_call.1} parent=1 // pred_check
      _
    $region19: #{tpu_custom_call.1} parent=1 // pred_check_branch
      %24 = sbr.rel (0) target = $region21
    $region20: #{tpu_custom_call.1} parent=1 // pred_region
      _
    $region21: #{tpu_custom_call.1} parent=1 // pred_fallthru
      _
    // Predicated region
    $region22: #{tpu_custom_call.1} parent=1 // pred_check
      _
    $region23: #{tpu_custom_call.1} parent=1 // pred_check_branch
      %26 = sbr.rel (0) target = $region25
    $region24: #{tpu_custom_call.1} parent=1 // pred_region
      _
    $region25: #{tpu_custom_call.1} parent=1 // pred_fallthru
      _
    // Predicated region
    $region26: #{tpu_custom_call.1} parent=1 // pred_check
      _
    $region27: #{tpu_custom_call.1} parent=1 // pred_check_branch
      %28 = sbr.rel (0) target = $region29
    $region28: #{tpu_custom_call.1} parent=1 // pred_region
      _
    $region29: #{tpu_custom_call.1} parent=1 // pred_fallthru
      _
    %v29 = vld [vmem:[%s2] sm:$0xff]
    %v30 = vld [vmem:[%s2 + $0x8] sm:$0xff]
    %v31 = vld [vmem:[%s2 + $0x10] sm:$0xff]
    %v32 = vld [vmem:[%s2 + $0x18] sm:$0xff]
    %v33 = vld [vmem:[%s2 + $0x20] sm:$0xff]
    %v34 = vld [vmem:[%s2 + $0x28] sm:$0xff]
    %v35 = vld [vmem:[%s2 + $0x30] sm:$0xff]
    %v36 = vld [vmem:[%s2 + $0x38] sm:$0xff]
    %v37 = vld [vmem:[%s2 + $0x40] sm:$0xff]
    %v38 = vld [vmem:[%s2 + $0x48] sm:$0xff]
    %v39 = vld [vmem:[%s2 + $0x50] sm:$0xff]
    %v40 = vld [vmem:[%s2 + $0x58] sm:$0xff]
    %v41 = vld [vmem:[%s2 + $0x60] sm:$0xff]
    %v42 = vld [vmem:[%s2 + $0x68] sm:$0xff]
    %v43 = vld [vmem:[%s2 + $0x70] sm:$0xff]
    %v44 = vld [vmem:[%s2 + $0x78] sm:$0xff]
    %v45 = vld [vmem:[%s2 + $0x80] sm:$0xff]
    %v46 = vld [vmem:[%s2 + $0x88] sm:$0xff]
    %v47 = vld [vmem:[%s2 + $0x90] sm:$0xff]
    %v48 = vld [vmem:[%s2 + $0x98] sm:$0xff]
    %v49 = vld [vmem:[%s2 + $0xa0] sm:$0xff]
    %v50 = vld [vmem:[%s2 + $0xa8] sm:$0xff]
    %v51 = vld [vmem:[%s2 + $0xb0] sm:$0xff]
    %v52 = vld [vmem:[%s2 + $0xb8] sm:$0xff]
    %v53 = vld [vmem:[%s2 + $0xc0] sm:$0xff]
    %v54 = vld [vmem:[%s2 + $0xc8] sm:$0xff]
    %v55 = vld [vmem:[%s2 + $0xd0] sm:$0xff]
    %v56 = vld [vmem:[%s2 + $0xd8] sm:$0xff]
    %v57 = vld [vmem:[%s2 + $0xe0] sm:$0xff]
    %v58 = vld [vmem:[%s2 + $0xe8] sm:$0xff]
    %v59 = vld [vmem:[%s2 + $0xf0] sm:$0xff]
    %v60 = vld [vmem:[%s2 + $0xf8] sm:$0xff]
    %v61 = vld [vmem:[%s2 + $0x100] sm:$0xff]
    %v62 = vld [vmem:[%s2 + $0x108] sm:$0xff]
    %v63 = vld [vmem:[%s2 + $0x110] sm:$0xff]
    %v64 = vld [vmem:[%s2 + $0x118] sm:$0xff]
    %v65 = vld [vmem:[%s2 + $0x120] sm:$0xff]
    %v66 = vld [vmem:[%s2 + $0x128] sm:$0xff]
    %v67 = vld [vmem:[%s2 + $0x130] sm:$0xff]
    %v68 = vld [vmem:[%s2 + $0x138] sm:$0xff]
    %v69 = vld [vmem:[%s2 + $0x140] sm:$0xff]
    %v70 = vld [vmem:[%s2 + $0x148] sm:$0xff]
    %v71 = vld [vmem:[%s2 + $0x150] sm:$0xff]
    %v72 = vld [vmem:[%s2 + $0x158] sm:$0xff]
    %v73 = vld [vmem:[%s2 + $0x160] sm:$0xff]
    %v74 = vld [vmem:[%s2 + $0x168] sm:$0xff]
    %v75 = vld [vmem:[%s2 + $0x170] sm:$0xff]
    %v76 = vld [vmem:[%s2 + $0x178] sm:$0xff]
    %v77 = vld [vmem:[%s2 + $0x180] sm:$0xff]
    %v78 = vld [vmem:[%s2 + $0x188] sm:$0xff]
    %v79 = vld [vmem:[%s2 + $0x190] sm:$0xff]
    %v80 = vld [vmem:[%s2 + $0x198] sm:$0xff]
    %v81 = vld [vmem:[%s2 + $0x1a0] sm:$0xff]
    %v82 = vld [vmem:[%s2 + $0x1a8] sm:$0xff]
    %v83 = vld [vmem:[%s2 + $0x1b0] sm:$0xff]
    %v84 = vld [vmem:[%s2 + $0x1b8] sm:$0xff]
    %v85 = vld [vmem:[%s2 + $0x1c0] sm:$0xff]
    %v86 = vld [vmem:[%s2 + $0x1c8] sm:$0xff]
    %v87 = vld [vmem:[%s2 + $0x1d0] sm:$0xff]
    %v88 = vld [vmem:[%s2 + $0x1d8] sm:$0xff]
    %v89 = vld [vmem:[%s2 + $0x1e0] sm:$0xff]
    %v90 = vld [vmem:[%s2 + $0x1e8] sm:$0xff]
    %v91 = vld [vmem:[%s2 + $0x1f0] sm:$0xff]
    %v92 = vld [vmem:[%s2 + $0x1f8] sm:$0xff]
    %v93 = vld [vmem:[%s2 + $0x200] sm:$0xff]
    %v94 = vld [vmem:[%s2 + $0x208] sm:$0xff]
    %v95 = vld [vmem:[%s2 + $0x210] sm:$0xff]
    %v96 = vld [vmem:[%s2 + $0x218] sm:$0xff]
    %v97 = vld [vmem:[%s2 + $0x220] sm:$0xff]
    %v98 = vld [vmem:[%s2 + $0x228] sm:$0xff]
    %v99 = vld [vmem:[%s2 + $0x230] sm:$0xff]
    %v100 = vld [vmem:[%s2 + $0x238] sm:$0xff]
    %v101 = vld [vmem:[%s2 + $0x240] sm:$0xff]
    %v102 = vld [vmem:[%s2 + $0x248] sm:$0xff]
    %v103 = vld [vmem:[%s2 + $0x250] sm:$0xff]
    %v104 = vld [vmem:[%s2 + $0x258] sm:$0xff]
    %v105 = vld [vmem:[%s2 + $0x260] sm:$0xff]
    %v106 = vld [vmem:[%s2 + $0x268] sm:$0xff]
    %v107 = vld [vmem:[%s2 + $0x270] sm:$0xff]
    %v108 = vld [vmem:[%s2 + $0x278] sm:$0xff]
    %v109 = vld [vmem:[%s2 + $0x280] sm:$0xff]
    %v110 = vld [vmem:[%s2 + $0x288] sm:$0xff]
    %v111 = vld [vmem:[%s2 + $0x290] sm:$0xff]
    %v112 = vld [vmem:[%s2 + $0x298] sm:$0xff]
    %v113 = vld [vmem:[%s2 + $0x2a0] sm:$0xff]
    %v114 = vld [vmem:[%s2 + $0x2a8] sm:$0xff]
    %v115 = vld [vmem:[%s2 + $0x2b0] sm:$0xff]
    %v116 = vld [vmem:[%s2 + $0x2b8] sm:$0xff]
    %v117 = vld [vmem:[%s2 + $0x2c0] sm:$0xff]
    %v118 = vld [vmem:[%s2 + $0x2c8] sm:$0xff]
    %v119 = vld [vmem:[%s0] sm:$0xff]
    %v120 = vld [vmem:[%s0 + $0x8] sm:$0xff]
    %v121 = vld [vmem:[%s0 + $0x10] sm:$0xff]
    %v122 = vld [vmem:[%s0 + $0x18] sm:$0xff]
    %v123 = vld [vmem:[%s0 + $0x20] sm:$0xff]
    %v124 = vld [vmem:[%s0 + $0x28] sm:$0xff]
    %v125 = vld [vmem:[%s0 + $0x30] sm:$0xff]
    %v126 = vld [vmem:[%s0 + $0x38] sm:$0xff]
    %v127 = vld [vmem:[%s0 + $0x40] sm:$0xff]
    %v128 = vld [vmem:[%s0 + $0x48] sm:$0xff]
    %v129 = vld [vmem:[%s0 + $0x50] sm:$0xff]
    %v130 = vld [vmem:[%s0 + $0x58] sm:$0xff]
    %v131 = vld [vmem:[%s0 + $0x60] sm:$0xff]
    %v132 = vld [vmem:[%s0 + $0x68] sm:$0xff]
    %v133 = vld [vmem:[%s0 + $0x70] sm:$0xff]
    %v134 = vld [vmem:[%s0 + $0x78] sm:$0xff]
    %v135 = vld [vmem:[%s0 + $0x80] sm:$0xff]
    %v136 = vld [vmem:[%s0 + $0x88] sm:$0xff]
    %vm137 = vcmask 130048
    %v139 = vsel %vm137, %v29, 0
    %v142 = vsel %vm137, %v30, 0
    %v145 = vsel %vm137, %v31, 0
    %v148 = vsel %vm137, %v32, 0
    %v151 = vsel %vm137, %v33, 0
    %v154 = vsel %vm137, %v34, 0
    %v157 = vsel %vm137, %v35, 0
    %v160 = vsel %vm137, %v36, 0
    %v163 = vsel %vm137, %v37, 0
    %v166 = vsel %vm137, %v38, 0
    %168 = vmatprep.subr.mxu0 0.0
    %169 = vmatpush1.msra.mxu0 0.0
    %170 = vmatprep.subr.mxu0 0.0
    %171 = vmatpush1.msra.mxu0 0.0
    %172 = vmatprep.subr.mxu0 0.0
    %173 = vmatpush1.msra.mxu0 0.0
    %174 = vmatprep.subr.mxu0 0.0
    %175 = vmatpush1.msra.mxu0 0.0
    %176 = vmatprep.subr.mxu0 0.0
    %177 = vmatpush1.msra.mxu0 0.0
    %178 = vmatprep.subr.mxu0 0.0
    %179 = vmatpush1.msra.mxu0 0.0
    %180 = vmatprep.subr.mxu0 0.0
    %181 = vmatpush1.msra.mxu0 0.0
    %182 = vmatprep.subr.mxu0 0.0
    %183 = vmatpush1.msra.mxu0 0.0
    %184 = vmatprep.subr.mxu0 0.0
    %185 = vmatpush1.msra.mxu0 0.0
    %186 = vmatprep.subr.mxu0 0.0
    %187 = vmatpush1.msra.mxu0 0.0
    %188 = vmatprep.subr.mxu0 0.0
    %189 = vmatpush1.msra.mxu0 0.0
    %190 = vmatprep.subr.mxu0 0.0
    %191 = vmatpush1.msra.mxu0 0.0
    %192 = vmatprep.subr.mxu0 0.0
    %193 = vmatpush1.msra.mxu0 0.0
    %194 = vmatprep.subr.mxu0 0.0
    %195 = vmatpush1.msra.mxu0 0.0
    %196 = vmatprep.subr.mxu0 0.0
    %197 = vmatpush1.msra.mxu0 %v120
    %198 = vmatprep.subr.mxu0 0.0
    %199 = vmatpush1.msra.mxu0 %v119
    %200 = vmatprep.subr.mxu0 0.0
    %201 = vmatpush2.msra.mxu0 0.0
    %202 = vmatprep.subr.mxu0 0.0
    %203 = vmatpush2.msra.mxu0 0.0
    %204 = vmatprep.subr.mxu0 0.0
    %205 = vmatpush2.msra.mxu0 0.0
    %206 = vmatprep.subr.mxu0 0.0
    %207 = vmatpush2.msra.mxu0 0.0
    %208 = vmatprep.subr.mxu0 0.0
    %209 = vmatpush2.msra.mxu0 0.0
    %210 = vmatprep.subr.mxu0 0.0
    %211 = vmatpush2.msra.mxu0 0.0
    %212 = vmatprep.subr.mxu0 0.0
    %213 = vmatpush2.msra.mxu0 0.0
    %214 = vmatprep.subr.mxu0 0.0
    %215 = vmatpush2.msra.mxu0 0.0
    %216 = vmatprep.subr.mxu0 0.0
    %217 = vmatpush2.msra.mxu0 0.0
    %218 = vmatprep.subr.mxu0 0.0
    %219 = vmatpush2.msra.mxu0 0.0
    %220 = vmatprep.subr.mxu0 0.0
    %221 = vmatpush2.msra.mxu0 0.0
    %222 = vmatprep.subr.mxu0 0.0
    %223 = vmatpush2.msra.mxu0 0.0
    %224 = vmatprep.subr.mxu0 0.0
    %225 = vmatpush2.msra.mxu0 0.0
    %226 = vmatprep.subr.mxu0 0.0
    %227 = vmatpush2.msra.mxu0 0.0
    %228 = vmatprep.subr.mxu0 0.0
    %229 = vmatpush2.msra.mxu0 0.0
    %230 = vmatprep.subr.mxu0 0.0
    %231 = vmatpush2.msra.mxu0 0.0
    %232 = vmatprep.mubr.f32.mxu0 0.0
    %233 = vmatmul.mubr.f32.gmra.mxu0 %v139
    %v234 = vpop.f32.mrf.mxu0
    %v235 = vadd.f32 0.0, %v234
    %v236 = vpop.f32.mrf.mxu0
    %237 = vmatprep.mubr.f32.mxu0 0.0
    %238 = vmatmul.mubr.f32.gmra.mxu0 %v142
    %v239 = vpop.f32.mrf.mxu0
    %v240 = vadd.f32 0.0, %v239
    %v241 = vpop.f32.mrf.mxu0
    %242 = vmatprep.mubr.f32.mxu0 0.0
    %243 = vmatmul.mubr.f32.gmra.mxu0 %v145
    %v244 = vpop.f32.mrf.mxu0
    %v245 = vadd.f32 0.0, %v244
    %v246 = vpop.f32.mrf.mxu0
    %247 = vmatprep.mubr.f32.mxu0 0.0
    %248 = vmatmul.mubr.f32.gmra.mxu0 %v148
    %v249 = vpop.f32.mrf.mxu0
    %v250 = vadd.f32 0.0, %v249
    %v251 = vpop.f32.mrf.mxu0
    %252 = vmatprep.mubr.f32.mxu0 0.0
    %253 = vmatmul.mubr.f32.gmra.mxu0 %v151
    %v254 = vpop.f32.mrf.mxu0
    %v255 = vadd.f32 0.0, %v254
    %v256 = vpop.f32.mrf.mxu0
    %257 = vmatprep.mubr.f32.mxu0 0.0
    %258 = vmatmul.mubr.f32.gmra.mxu0 %v154
    %v259 = vpop.f32.mrf.mxu0
    %v260 = vadd.f32 0.0, %v259
    %v261 = vpop.f32.mrf.mxu0
    %262 = vmatprep.mubr.f32.mxu0 0.0
    %263 = vmatmul.mubr.f32.gmra.mxu0 %v157
    %v264 = vpop.f32.mrf.mxu0
    %v265 = vadd.f32 0.0, %v264
    %v266 = vpop.f32.mrf.mxu0
    %267 = vmatprep.mubr.f32.mxu0 0.0
    %268 = vmatmul.mubr.f32.gmra.mxu0 %v160
    %v269 = vpop.f32.mrf.mxu0
    %v270 = vadd.f32 0.0, %v269
    %v271 = vpop.f32.mrf.mxu0
    %272 = vmatprep.mubr.f32.mxu0 0.0
    %273 = vmatmul.mubr.f32.gmra.mxu0 %v163
    %v274 = vpop.f32.mrf.mxu0
    %v275 = vadd.f32 0.0, %v274
    %v276 = vpop.f32.mrf.mxu0
    %277 = vmatprep.mubr.f32.mxu0 0.0
    %278 = vmatmul.mubr.f32.gmra.mxu0 %v166
    %v279 = vpop.f32.mrf.mxu0
    %v280 = vadd.f32 0.0, %v279
    %v281 = vpop.f32.mrf.mxu0
    %282 = vdwg.mxu0
    %v284 = vsel %vm137, %v39, 0
    %v287 = vsel %vm137, %v40, 0
    %v290 = vsel %vm137, %v41, 0
    %v293 = vsel %vm137, %v42, 0
    %v296 = vsel %vm137, %v43, 0
    %v299 = vsel %vm137, %v44, 0
    %v302 = vsel %vm137, %v45, 0
    %v305 = vsel %vm137, %v46, 0
    %v308 = vsel %vm137, %v47, 0
    %v311 = vsel %vm137, %v48, 0
    %313 = vmatprep.subr.mxu0 0.0
    %314 = vmatpush1.msra.mxu0 0.0
    %315 = vmatprep.subr.mxu0 0.0
    %316 = vmatpush1.msra.mxu0 0.0
    %317 = vmatprep.subr.mxu0 0.0
    %318 = vmatpush1.msra.mxu0 0.0
    %319 = vmatprep.subr.mxu0 0.0
    %320 = vmatpush1.msra.mxu0 0.0
    %321 = vmatprep.subr.mxu0 0.0
    %322 = vmatpush1.msra.mxu0 0.0
    %323 = vmatprep.subr.mxu0 0.0
    %324 = vmatpush1.msra.mxu0 0.0
    %325 = vmatprep.subr.mxu0 0.0
    %326 = vmatpush1.msra.mxu0 0.0
    %327 = vmatprep.subr.mxu0 0.0
    %328 = vmatpush1.msra.mxu0 0.0
    %329 = vmatprep.subr.mxu0 0.0
    %330 = vmatpush1.msra.mxu0 0.0
    %331 = vmatprep.subr.mxu0 0.0
    %332 = vmatpush1.msra.mxu0 0.0
    %333 = vmatprep.subr.mxu0 0.0
    %334 = vmatpush1.msra.mxu0 0.0
    %335 = vmatprep.subr.mxu0 0.0
    %336 = vmatpush1.msra.mxu0 0.0
    %337 = vmatprep.subr.mxu0 0.0
    %338 = vmatpush1.msra.mxu0 0.0
    %339 = vmatprep.subr.mxu0 0.0
    %340 = vmatpush1.msra.mxu0 0.0
    %341 = vmatprep.subr.mxu0 0.0
    %342 = vmatpush1.msra.mxu0 %v122
    %343 = vmatprep.subr.mxu0 0.0
    %344 = vmatpush1.msra.mxu0 %v121
    %345 = vmatprep.subr.mxu0 0.0
    %346 = vmatpush2.msra.mxu0 0.0
    %347 = vmatprep.subr.mxu0 0.0
    %348 = vmatpush2.msra.mxu0 0.0
    %349 = vmatprep.subr.mxu0 0.0
    %350 = vmatpush2.msra.mxu0 0.0
    %351 = vmatprep.subr.mxu0 0.0
    %352 = vmatpush2.msra.mxu0 0.0
    %353 = vmatprep.subr.mxu0 0.0
    %354 = vmatpush2.msra.mxu0 0.0
    %355 = vmatprep.subr.mxu0 0.0
    %356 = vmatpush2.msra.mxu0 0.0
    %357 = vmatprep.subr.mxu0 0.0
    %358 = vmatpush2.msra.mxu0 0.0
    %359 = vmatprep.subr.mxu0 0.0
    %360 = vmatpush2.msra.mxu0 0.0
    %361 = vmatprep.subr.mxu0 0.0
    %362 = vmatpush2.msra.mxu0 0.0
    %363 = vmatprep.subr.mxu0 0.0
    %364 = vmatpush2.msra.mxu0 0.0
    %365 = vmatprep.subr.mxu0 0.0
    %366 = vmatpush2.msra.mxu0 0.0
    %367 = vmatprep.subr.mxu0 0.0
    %368 = vmatpush2.msra.mxu0 0.0
    %369 = vmatprep.subr.mxu0 0.0
    %370 = vmatpush2.msra.mxu0 0.0
    %371 = vmatprep.subr.mxu0 0.0
    %372 = vmatpush2.msra.mxu0 0.0
    %373 = vmatprep.subr.mxu0 0.0
    %374 = vmatpush2.msra.mxu0 0.0
    %375 = vmatprep.subr.mxu0 0.0
    %376 = vmatpush2.msra.mxu0 0.0
    %377 = vmatprep.mubr.f32.mxu0 0.0
    %378 = vmatmul.mubr.f32.gmra.mxu0 %v284
    %v379 = vpop.f32.mrf.mxu0
    %v380 = vadd.f32 0.0, %v379
    %v381 = vpop.f32.mrf.mxu0
    %382 = vmatprep.mubr.f32.mxu0 0.0
    %383 = vmatmul.mubr.f32.gmra.mxu0 %v287
    %v384 = vpop.f32.mrf.mxu0
    %v385 = vadd.f32 0.0, %v384
    %v386 = vpop.f32.mrf.mxu0
    %387 = vmatprep.mubr.f32.mxu0 0.0
    %388 = vmatmul.mubr.f32.gmra.mxu0 %v290
    %v389 = vpop.f32.mrf.mxu0
    %v390 = vadd.f32 0.0, %v389
    %v391 = vpop.f32.mrf.mxu0
    %392 = vmatprep.mubr.f32.mxu0 0.0
    %393 = vmatmul.mubr.f32.gmra.mxu0 %v293
    %v394 = vpop.f32.mrf.mxu0
    %v395 = vadd.f32 0.0, %v394
    %v396 = vpop.f32.mrf.mxu0
    %397 = vmatprep.mubr.f32.mxu0 0.0
    %398 = vmatmul.mubr.f32.gmra.mxu0 %v296
    %v399 = vpop.f32.mrf.mxu0
    %v400 = vadd.f32 0.0, %v399
    %v401 = vpop.f32.mrf.mxu0
    %402 = vmatprep.mubr.f32.mxu0 0.0
    %403 = vmatmul.mubr.f32.gmra.mxu0 %v299
    %v404 = vpop.f32.mrf.mxu0
    %v405 = vadd.f32 0.0, %v404
    %v406 = vpop.f32.mrf.mxu0
    %407 = vmatprep.mubr.f32.mxu0 0.0
    %408 = vmatmul.mubr.f32.gmra.mxu0 %v302
    %v409 = vpop.f32.mrf.mxu0
    %v410 = vadd.f32 0.0, %v409
    %v411 = vpop.f32.mrf.mxu0
    %412 = vmatprep.mubr.f32.mxu0 0.0
    %413 = vmatmul.mubr.f32.gmra.mxu0 %v305
    %v414 = vpop.f32.mrf.mxu0
    %v415 = vadd.f32 0.0, %v414
    %v416 = vpop.f32.mrf.mxu0
    %417 = vmatprep.mubr.f32.mxu0 0.0
    %418 = vmatmul.mubr.f32.gmra.mxu0 %v308
    %v419 = vpop.f32.mrf.mxu0
    %v420 = vadd.f32 0.0, %v419
    %v421 = vpop.f32.mrf.mxu0
    %422 = vmatprep.mubr.f32.mxu0 0.0
    %423 = vmatmul.mubr.f32.gmra.mxu0 %v311
    %v424 = vpop.f32.mrf.mxu0
    %v425 = vadd.f32 0.0, %v424
    %v426 = vpop.f32.mrf.mxu0
    %427 = vdwg.mxu0
    %v429 = vsel %vm137, %v49, 0
    %v432 = vsel %vm137, %v50, 0
    %v435 = vsel %vm137, %v51, 0
    %v438 = vsel %vm137, %v52, 0
    %v441 = vsel %vm137, %v53, 0
    %v444 = vsel %vm137, %v54, 0
    %v447 = vsel %vm137, %v55, 0
    %v450 = vsel %vm137, %v56, 0
    %v453 = vsel %vm137, %v57, 0
    %v456 = vsel %vm137, %v58, 0
    %458 = vmatprep.subr.mxu0 0.0
    %459 = vmatpush1.msra.mxu0 0.0
    %460 = vmatprep.subr.mxu0 0.0
    %461 = vmatpush1.msra.mxu0 0.0
    %462 = vmatprep.subr.mxu0 0.0
    %463 = vmatpush1.msra.mxu0 0.0
    %464 = vmatprep.subr.mxu0 0.0
    %465 = vmatpush1.msra.mxu0 0.0
    %466 = vmatprep.subr.mxu0 0.0
    %467 = vmatpush1.msra.mxu0 0.0
    %468 = vmatprep.subr.mxu0 0.0
    %469 = vmatpush1.msra.mxu0 0.0
    %470 = vmatprep.subr.mxu0 0.0
    %471 = vmatpush1.msra.mxu0 0.0
    %472 = vmatprep.subr.mxu0 0.0
    %473 = vmatpush1.msra.mxu0 0.0
    %474 = vmatprep.subr.mxu0 0.0
    %475 = vmatpush1.msra.mxu0 0.0
    %476 = vmatprep.subr.mxu0 0.0
    %477 = vmatpush1.msra.mxu0 0.0
    %478 = vmatprep.subr.mxu0 0.0
    %479 = vmatpush1.msra.mxu0 0.0
    %480 = vmatprep.subr.mxu0 0.0
    %481 = vmatpush1.msra.mxu0 0.0
    %482 = vmatprep.subr.mxu0 0.0
    %483 = vmatpush1.msra.mxu0 0.0
    %484 = vmatprep.subr.mxu0 0.0
    %485 = vmatpush1.msra.mxu0 0.0
    %486 = vmatprep.subr.mxu0 0.0
    %487 = vmatpush1.msra.mxu0 %v124
    %488 = vmatprep.subr.mxu0 0.0
    %489 = vmatpush1.msra.mxu0 %v123
    %490 = vmatprep.subr.mxu0 0.0
    %491 = vmatpush2.msra.mxu0 0.0
    %492 = vmatprep.subr.mxu0 0.0
    %493 = vmatpush2.msra.mxu0 0.0
    %494 = vmatprep.subr.mxu0 0.0
    %495 = vmatpush2.msra.mxu0 0.0
    %496 = vmatprep.subr.mxu0 0.0
    %497 = vmatpush2.msra.mxu0 0.0
    %498 = vmatprep.subr.mxu0 0.0
    %499 = vmatpush2.msra.mxu0 0.0
    %500 = vmatprep.subr.mxu0 0.0
    %501 = vmatpush2.msra.mxu0 0.0
    %502 = vmatprep.subr.mxu0 0.0
    %503 = vmatpush2.msra.mxu0 0.0
    %504 = vmatprep.subr.mxu0 0.0
    %505 = vmatpush2.msra.mxu0 0.0
    %506 = vmatprep.subr.mxu0 0.0
    %507 = vmatpush2.msra.mxu0 0.0
    %508 = vmatprep.subr.mxu0 0.0
    %509 = vmatpush2.msra.mxu0 0.0
    %510 = vmatprep.subr.mxu0 0.0
    %511 = vmatpush2.msra.mxu0 0.0
    %512 = vmatprep.subr.mxu0 0.0
    %513 = vmatpush2.msra.mxu0 0.0
    %514 = vmatprep.subr.mxu0 0.0
    %515 = vmatpush2.msra.mxu0 0.0
    %516 = vmatprep.subr.mxu0 0.0
    %517 = vmatpush2.msra.mxu0 0.0
    %518 = vmatprep.subr.mxu0 0.0
    %519 = vmatpush2.msra.mxu0 0.0
    %520 = vmatprep.subr.mxu0 0.0
    %521 = vmatpush2.msra.mxu0 0.0
    %522 = vmatprep.mubr.f32.mxu0 0.0
    %523 = vmatmul.mubr.f32.gmra.mxu0 %v429
    %v524 = vpop.f32.mrf.mxu0
    %v525 = vadd.f32 0.0, %v524
    %v526 = vpop.f32.mrf.mxu0
    %527 = vmatprep.mubr.f32.mxu0 0.0
    %528 = vmatmul.mubr.f32.gmra.mxu0 %v432
    %v529 = vpop.f32.mrf.mxu0
    %v530 = vadd.f32 0.0, %v529
    %v531 = vpop.f32.mrf.mxu0
    %532 = vmatprep.mubr.f32.mxu0 0.0
    %533 = vmatmul.mubr.f32.gmra.mxu0 %v435
    %v534 = vpop.f32.mrf.mxu0
    %v535 = vadd.f32 0.0, %v534
    %v536 = vpop.f32.mrf.mxu0
    %537 = vmatprep.mubr.f32.mxu0 0.0
    %538 = vmatmul.mubr.f32.gmra.mxu0 %v438
    %v539 = vpop.f32.mrf.mxu0
    %v540 = vadd.f32 0.0, %v539
    %v541 = vpop.f32.mrf.mxu0
    %542 = vmatprep.mubr.f32.mxu0 0.0
    %543 = vmatmul.mubr.f32.gmra.mxu0 %v441
    %v544 = vpop.f32.mrf.mxu0
    %v545 = vadd.f32 0.0, %v544
    %v546 = vpop.f32.mrf.mxu0
    %547 = vmatprep.mubr.f32.mxu0 0.0
    %548 = vmatmul.mubr.f32.gmra.mxu0 %v444
    %v549 = vpop.f32.mrf.mxu0
    %v550 = vadd.f32 0.0, %v549
    %v551 = vpop.f32.mrf.mxu0
    %552 = vmatprep.mubr.f32.mxu0 0.0
    %553 = vmatmul.mubr.f32.gmra.mxu0 %v447
    %v554 = vpop.f32.mrf.mxu0
    %v555 = vadd.f32 0.0, %v554
    %v556 = vpop.f32.mrf.mxu0
    %557 = vmatprep.mubr.f32.mxu0 0.0
    %558 = vmatmul.mubr.f32.gmra.mxu0 %v450
    %v559 = vpop.f32.mrf.mxu0
    %v560 = vadd.f32 0.0, %v559
    %v561 = vpop.f32.mrf.mxu0
    %562 = vmatprep.mubr.f32.mxu0 0.0
    %563 = vmatmul.mubr.f32.gmra.mxu0 %v453
    %v564 = vpop.f32.mrf.mxu0
    %v565 = vadd.f32 0.0, %v564
    %v566 = vpop.f32.mrf.mxu0
    %567 = vmatprep.mubr.f32.mxu0 0.0
    %568 = vmatmul.mubr.f32.gmra.mxu0 %v456
    %v569 = vpop.f32.mrf.mxu0
    %v570 = vadd.f32 0.0, %v569
    %v571 = vpop.f32.mrf.mxu0
    %572 = vdwg.mxu0
    %v574 = vsel %vm137, %v59, 0
    %v577 = vsel %vm137, %v60, 0
    %v580 = vsel %vm137, %v61, 0
    %v583 = vsel %vm137, %v62, 0
    %v586 = vsel %vm137, %v63, 0
    %v589 = vsel %vm137, %v64, 0
    %v592 = vsel %vm137, %v65, 0
    %v595 = vsel %vm137, %v66, 0
    %v598 = vsel %vm137, %v67, 0
    %v601 = vsel %vm137, %v68, 0
    %603 = vmatprep.subr.mxu0 0.0
    %604 = vmatpush1.msra.mxu0 0.0
    %605 = vmatprep.subr.mxu0 0.0
    %606 = vmatpush1.msra.mxu0 0.0
    %607 = vmatprep.subr.mxu0 0.0
    %608 = vmatpush1.msra.mxu0 0.0
    %609 = vmatprep.subr.mxu0 0.0
    %610 = vmatpush1.msra.mxu0 0.0
    %611 = vmatprep.subr.mxu0 0.0
    %612 = vmatpush1.msra.mxu0 0.0
    %613 = vmatprep.subr.mxu0 0.0
    %614 = vmatpush1.msra.mxu0 0.0
    %615 = vmatprep.subr.mxu0 0.0
    %616 = vmatpush1.msra.mxu0 0.0
    %617 = vmatprep.subr.mxu0 0.0
    %618 = vmatpush1.msra.mxu0 0.0
    %619 = vmatprep.subr.mxu0 0.0
    %620 = vmatpush1.msra.mxu0 0.0
    %621 = vmatprep.subr.mxu0 0.0
    %622 = vmatpush1.msra.mxu0 0.0
    %623 = vmatprep.subr.mxu0 0.0
    %624 = vmatpush1.msra.mxu0 0.0
    %625 = vmatprep.subr.mxu0 0.0
    %626 = vmatpush1.msra.mxu0 0.0
    %627 = vmatprep.subr.mxu0 0.0
    %628 = vmatpush1.msra.mxu0 0.0
    %629 = vmatprep.subr.mxu0 0.0
    %630 = vmatpush1.msra.mxu0 0.0
    %631 = vmatprep.subr.mxu0 0.0
    %632 = vmatpush1.msra.mxu0 %v126
    %633 = vmatprep.subr.mxu0 0.0
    %634 = vmatpush1.msra.mxu0 %v125
    %635 = vmatprep.subr.mxu0 0.0
    %636 = vmatpush2.msra.mxu0 0.0
    %637 = vmatprep.subr.mxu0 0.0
    %638 = vmatpush2.msra.mxu0 0.0
    %639 = vmatprep.subr.mxu0 0.0
    %640 = vmatpush2.msra.mxu0 0.0
    %641 = vmatprep.subr.mxu0 0.0
    %642 = vmatpush2.msra.mxu0 0.0
    %643 = vmatprep.subr.mxu0 0.0
    %644 = vmatpush2.msra.mxu0 0.0
    %645 = vmatprep.subr.mxu0 0.0
    %646 = vmatpush2.msra.mxu0 0.0
    %647 = vmatprep.subr.mxu0 0.0
    %648 = vmatpush2.msra.mxu0 0.0
    %649 = vmatprep.subr.mxu0 0.0
    %650 = vmatpush2.msra.mxu0 0.0
    %651 = vmatprep.subr.mxu0 0.0
    %652 = vmatpush2.msra.mxu0 0.0
    %653 = vmatprep.subr.mxu0 0.0
    %654 = vmatpush2.msra.mxu0 0.0
    %655 = vmatprep.subr.mxu0 0.0
    %656 = vmatpush2.msra.mxu0 0.0
    %657 = vmatprep.subr.mxu0 0.0
    %658 = vmatpush2.msra.mxu0 0.0
    %659 = vmatprep.subr.mxu0 0.0
    %660 = vmatpush2.msra.mxu0 0.0
    %661 = vmatprep.subr.mxu0 0.0
    %662 = vmatpush2.msra.mxu0 0.0
    %663 = vmatprep.subr.mxu0 0.0
    %664 = vmatpush2.msra.mxu0 0.0
    %665 = vmatprep.subr.mxu0 0.0
    %666 = vmatpush2.msra.mxu0 0.0
    %667 = vmatprep.mubr.f32.mxu0 0.0
    %668 = vmatmul.mubr.f32.gmra.mxu0 %v574
    %v669 = vpop.f32.mrf.mxu0
    %v670 = vadd.f32 0.0, %v669
    %v671 = vpop.f32.mrf.mxu0
    %672 = vmatprep.mubr.f32.mxu0 0.0
    %673 = vmatmul.mubr.f32.gmra.mxu0 %v577
    %v674 = vpop.f32.mrf.mxu0
    %v675 = vadd.f32 0.0, %v674
    %v676 = vpop.f32.mrf.mxu0
    %677 = vmatprep.mubr.f32.mxu0 0.0
    %678 = vmatmul.mubr.f32.gmra.mxu0 %v580
    %v679 = vpop.f32.mrf.mxu0
    %v680 = vadd.f32 0.0, %v679
    %v681 = vpop.f32.mrf.mxu0
    %682 = vmatprep.mubr.f32.mxu0 0.0
    %683 = vmatmul.mubr.f32.gmra.mxu0 %v583
    %v684 = vpop.f32.mrf.mxu0
    %v685 = vadd.f32 0.0, %v684
    %v686 = vpop.f32.mrf.mxu0
    %687 = vmatprep.mubr.f32.mxu0 0.0
    %688 = vmatmul.mubr.f32.gmra.mxu0 %v586
    %v689 = vpop.f32.mrf.mxu0
    %v690 = vadd.f32 0.0, %v689
    %v691 = vpop.f32.mrf.mxu0
    %692 = vmatprep.mubr.f32.mxu0 0.0
    %693 = vmatmul.mubr.f32.gmra.mxu0 %v589
    %v694 = vpop.f32.mrf.mxu0
    %v695 = vadd.f32 0.0, %v694
    %v696 = vpop.f32.mrf.mxu0
    %697 = vmatprep.mubr.f32.mxu0 0.0
    %698 = vmatmul.mubr.f32.gmra.mxu0 %v592
    %v699 = vpop.f32.mrf.mxu0
    %v700 = vadd.f32 0.0, %v699
    %v701 = vpop.f32.mrf.mxu0
    %702 = vmatprep.mubr.f32.mxu0 0.0
    %703 = vmatmul.mubr.f32.gmra.mxu0 %v595
    %v704 = vpop.f32.mrf.mxu0
    %v705 = vadd.f32 0.0, %v704
    %v706 = vpop.f32.mrf.mxu0
    %707 = vmatprep.mubr.f32.mxu0 0.0
    %708 = vmatmul.mubr.f32.gmra.mxu0 %v598
    %v709 = vpop.f32.mrf.mxu0
    %v710 = vadd.f32 0.0, %v709
    %v711 = vpop.f32.mrf.mxu0
    %712 = vmatprep.mubr.f32.mxu0 0.0
    %713 = vmatmul.mubr.f32.gmra.mxu0 %v601
    %v714 = vpop.f32.mrf.mxu0
    %v715 = vadd.f32 0.0, %v714
    %v716 = vpop.f32.mrf.mxu0
    %717 = vdwg.mxu0
    %v719 = vsel %vm137, %v69, 0
    %v722 = vsel %vm137, %v70, 0
    %v725 = vsel %vm137, %v71, 0
    %v728 = vsel %vm137, %v72, 0
    %v731 = vsel %vm137, %v73, 0
    %v734 = vsel %vm137, %v74, 0
    %v737 = vsel %vm137, %v75, 0
    %v740 = vsel %vm137, %v76, 0
    %v743 = vsel %vm137, %v77, 0
    %v746 = vsel %vm137, %v78, 0
    %748 = vmatprep.subr.mxu0 0.0
    %749 = vmatpush1.msra.mxu0 0.0
    %750 = vmatprep.subr.mxu0 0.0
    %751 = vmatpush1.msra.mxu0 0.0
    %752 = vmatprep.subr.mxu0 0.0
    %753 = vmatpush1.msra.mxu0 0.0
    %754 = vmatprep.subr.mxu0 0.0
    %755 = vmatpush1.msra.mxu0 0.0
    %756 = vmatprep.subr.mxu0 0.0
    %757 = vmatpush1.msra.mxu0 0.0
    %758 = vmatprep.subr.mxu0 0.0
    %759 = vmatpush1.msra.mxu0 0.0
    %760 = vmatprep.subr.mxu0 0.0
    %761 = vmatpush1.msra.mxu0 0.0
    %762 = vmatprep.subr.mxu0 0.0
    %763 = vmatpush1.msra.mxu0 0.0
    %764 = vmatprep.subr.mxu0 0.0
    %765 = vmatpush1.msra.mxu0 0.0
    %766 = vmatprep.subr.mxu0 0.0
    %767 = vmatpush1.msra.mxu0 0.0
    %768 = vmatprep.subr.mxu0 0.0
    %769 = vmatpush1.msra.mxu0 0.0
    %770 = vmatprep.subr.mxu0 0.0
    %771 = vmatpush1.msra.mxu0 0.0
    %772 = vmatprep.subr.mxu0 0.0
    %773 = vmatpush1.msra.mxu0 0.0
    %774 = vmatprep.subr.mxu0 0.0
    %775 = vmatpush1.msra.mxu0 0.0
    %776 = vmatprep.subr.mxu0 0.0
    %777 = vmatpush1.msra.mxu0 %v128
    %778 = vmatprep.subr.mxu0 0.0
    %779 = vmatpush1.msra.mxu0 %v127
    %780 = vmatprep.subr.mxu0 0.0
    %781 = vmatpush2.msra.mxu0 0.0
    %782 = vmatprep.subr.mxu0 0.0
    %783 = vmatpush2.msra.mxu0 0.0
    %784 = vmatprep.subr.mxu0 0.0
    %785 = vmatpush2.msra.mxu0 0.0
    %786 = vmatprep.subr.mxu0 0.0
    %787 = vmatpush2.msra.mxu0 0.0
    %788 = vmatprep.subr.mxu0 0.0
    %789 = vmatpush2.msra.mxu0 0.0
    %790 = vmatprep.subr.mxu0 0.0
    %791 = vmatpush2.msra.mxu0 0.0
    %792 = vmatprep.subr.mxu0 0.0
    %793 = vmatpush2.msra.mxu0 0.0
    %794 = vmatprep.subr.mxu0 0.0
    %795 = vmatpush2.msra.mxu0 0.0
    %796 = vmatprep.subr.mxu0 0.0
    %797 = vmatpush2.msra.mxu0 0.0
    %798 = vmatprep.subr.mxu0 0.0
    %799 = vmatpush2.msra.mxu0 0.0
    %800 = vmatprep.subr.mxu0 0.0
    %801 = vmatpush2.msra.mxu0 0.0
    %802 = vmatprep.subr.mxu0 0.0
    %803 = vmatpush2.msra.mxu0 0.0
    %804 = vmatprep.subr.mxu0 0.0
    %805 = vmatpush2.msra.mxu0 0.0
    %806 = vmatprep.subr.mxu0 0.0
    %807 = vmatpush2.msra.mxu0 0.0
    %808 = vmatprep.subr.mxu0 0.0
    %809 = vmatpush2.msra.mxu0 0.0
    %810 = vmatprep.subr.mxu0 0.0
    %811 = vmatpush2.msra.mxu0 0.0
    %812 = vmatprep.mubr.f32.mxu0 0.0
    %813 = vmatmul.mubr.f32.gmra.mxu0 %v719
    %v814 = vpop.f32.mrf.mxu0
    %v815 = vadd.f32 0.0, %v814
    %v816 = vpop.f32.mrf.mxu0
    %817 = vmatprep.mubr.f32.mxu0 0.0
    %818 = vmatmul.mubr.f32.gmra.mxu0 %v722
    %v819 = vpop.f32.mrf.mxu0
    %v820 = vadd.f32 0.0, %v819
    %v821 = vpop.f32.mrf.mxu0
    %822 = vmatprep.mubr.f32.mxu0 0.0
    %823 = vmatmul.mubr.f32.gmra.mxu0 %v725
    %v824 = vpop.f32.mrf.mxu0
    %v825 = vadd.f32 0.0, %v824
    %v826 = vpop.f32.mrf.mxu0
    %827 = vmatprep.mubr.f32.mxu0 0.0
    %828 = vmatmul.mubr.f32.gmra.mxu0 %v728
    %v829 = vpop.f32.mrf.mxu0
    %v830 = vadd.f32 0.0, %v829
    %v831 = vpop.f32.mrf.mxu0
    %832 = vmatprep.mubr.f32.mxu0 0.0
    %833 = vmatmul.mubr.f32.gmra.mxu0 %v731
    %v834 = vpop.f32.mrf.mxu0
    %v835 = vadd.f32 0.0, %v834
    %v836 = vpop.f32.mrf.mxu0
    %837 = vmatprep.mubr.f32.mxu0 0.0
    %838 = vmatmul.mubr.f32.gmra.mxu0 %v734
    %v839 = vpop.f32.mrf.mxu0
    %v840 = vadd.f32 0.0, %v839
    %v841 = vpop.f32.mrf.mxu0
    %842 = vmatprep.mubr.f32.mxu0 0.0
    %843 = vmatmul.mubr.f32.gmra.mxu0 %v737
    %v844 = vpop.f32.mrf.mxu0
    %v845 = vadd.f32 0.0, %v844
    %v846 = vpop.f32.mrf.mxu0
    %847 = vmatprep.mubr.f32.mxu0 0.0
    %848 = vmatmul.mubr.f32.gmra.mxu0 %v740
    %v849 = vpop.f32.mrf.mxu0
    %v850 = vadd.f32 0.0, %v849
    %v851 = vpop.f32.mrf.mxu0
    %852 = vmatprep.mubr.f32.mxu0 0.0
    %853 = vmatmul.mubr.f32.gmra.mxu0 %v743
    %v854 = vpop.f32.mrf.mxu0
    %v855 = vpop.f32.mrf.mxu0
    %856 = vmatprep.mubr.f32.mxu0 0.0
    %857 = vmatmul.mubr.f32.gmra.mxu0 %v746
    %v858 = vpop.f32.mrf.mxu0
    %v859 = vpop.f32.mrf.mxu0
    %860 = vdwg.mxu0
    %v862 = vsel %vm137, %v79, 0
    %v865 = vsel %vm137, %v80, 0
    %v868 = vsel %vm137, %v81, 0
    %v871 = vsel %vm137, %v82, 0
    %v874 = vsel %vm137, %v83, 0
    %v877 = vsel %vm137, %v84, 0
    %v880 = vsel %vm137, %v85, 0
    %v883 = vsel %vm137, %v86, 0
    %v886 = vsel %vm137, %v87, 0
    %v889 = vsel %vm137, %v88, 0
    %891 = vmatprep.subr.mxu0 0.0
    %892 = vmatpush1.msra.mxu0 0.0
    %893 = vmatprep.subr.mxu0 0.0
    %894 = vmatpush1.msra.mxu0 0.0
    %895 = vmatprep.subr.mxu0 0.0
    %896 = vmatpush1.msra.mxu0 0.0
    %897 = vmatprep.subr.mxu0 0.0
    %898 = vmatpush1.msra.mxu0 0.0
    %899 = vmatprep.subr.mxu0 0.0
    %900 = vmatpush1.msra.mxu0 0.0
    %901 = vmatprep.subr.mxu0 0.0
    %902 = vmatpush1.msra.mxu0 0.0
    %903 = vmatprep.subr.mxu0 0.0
    %904 = vmatpush1.msra.mxu0 0.0
    %905 = vmatprep.subr.mxu0 0.0
    %906 = vmatpush1.msra.mxu0 0.0
    %907 = vmatprep.subr.mxu0 0.0
    %908 = vmatpush1.msra.mxu0 0.0
    %909 = vmatprep.subr.mxu0 0.0
    %910 = vmatpush1.msra.mxu0 0.0
    %911 = vmatprep.subr.mxu0 0.0
    %912 = vmatpush1.msra.mxu0 0.0
    %913 = vmatprep.subr.mxu0 0.0
    %914 = vmatpush1.msra.mxu0 0.0
    %915 = vmatprep.subr.mxu0 0.0
    %916 = vmatpush1.msra.mxu0 0.0
    %917 = vmatprep.subr.mxu0 0.0
    %918 = vmatpush1.msra.mxu0 0.0
    %919 = vmatprep.subr.mxu0 0.0
    %920 = vmatpush1.msra.mxu0 %v130
    %921 = vmatprep.subr.mxu0 0.0
    %922 = vmatpush1.msra.mxu0 %v129
    %923 = vmatprep.subr.mxu0 0.0
    %924 = vmatpush2.msra.mxu0 0.0
    %925 = vmatprep.subr.mxu0 0.0
    %926 = vmatpush2.msra.mxu0 0.0
    %927 = vmatprep.subr.mxu0 0.0
    %928 = vmatpush2.msra.mxu0 0.0
    %929 = vmatprep.subr.mxu0 0.0
    %930 = vmatpush2.msra.mxu0 0.0
    %931 = vmatprep.subr.mxu0 0.0
    %932 = vmatpush2.msra.mxu0 0.0
    %933 = vmatprep.subr.mxu0 0.0
    %934 = vmatpush2.msra.mxu0 0.0
    %935 = vmatprep.subr.mxu0 0.0
    %936 = vmatpush2.msra.mxu0 0.0
    %937 = vmatprep.subr.mxu0 0.0
    %938 = vmatpush2.msra.mxu0 0.0
    %939 = vmatprep.subr.mxu0 0.0
    %940 = vmatpush2.msra.mxu0 0.0
    %941 = vmatprep.subr.mxu0 0.0
    %942 = vmatpush2.msra.mxu0 0.0
    %943 = vmatprep.subr.mxu0 0.0
    %944 = vmatpush2.msra.mxu0 0.0
    %945 = vmatprep.subr.mxu0 0.0
    %946 = vmatpush2.msra.mxu0 0.0
    %947 = vmatprep.subr.mxu0 0.0
    %948 = vmatpush2.msra.mxu0 0.0
    %949 = vmatprep.subr.mxu0 0.0
    %950 = vmatpush2.msra.mxu0 0.0
    %951 = vmatprep.subr.mxu0 0.0
    %952 = vmatpush2.msra.mxu0 0.0
    %953 = vmatprep.subr.mxu0 0.0
    %954 = vmatpush2.msra.mxu0 0.0
    %955 = vmatprep.mubr.f32.mxu0 0.0
    %956 = vmatmul.mubr.f32.gmra.mxu0 %v862
    %v957 = vpop.f32.mrf.mxu0
    %v958 = vadd.f32 0.0, %v957
    %v959 = vpop.f32.mrf.mxu0
    %960 = vmatprep.mubr.f32.mxu0 0.0
    %961 = vmatmul.mubr.f32.gmra.mxu0 %v865
    %v962 = vpop.f32.mrf.mxu0
    %v963 = vadd.f32 0.0, %v962
    %v964 = vpop.f32.mrf.mxu0
    %965 = vmatprep.mubr.f32.mxu0 0.0
    %966 = vmatmul.mubr.f32.gmra.mxu0 %v868
    %v967 = vpop.f32.mrf.mxu0
    %v968 = vadd.f32 0.0, %v967
    %v969 = vpop.f32.mrf.mxu0
    %970 = vmatprep.mubr.f32.mxu0 0.0
    %971 = vmatmul.mubr.f32.gmra.mxu0 %v871
    %v972 = vpop.f32.mrf.mxu0
    %v973 = vadd.f32 0.0, %v972
    %v974 = vpop.f32.mrf.mxu0
    %975 = vmatprep.mubr.f32.mxu0 0.0
    %976 = vmatmul.mubr.f32.gmra.mxu0 %v874
    %v977 = vpop.f32.mrf.mxu0
    %v978 = vadd.f32 0.0, %v977
    %v979 = vpop.f32.mrf.mxu0
    %980 = vmatprep.mubr.f32.mxu0 0.0
    %981 = vmatmul.mubr.f32.gmra.mxu0 %v877
    %v982 = vpop.f32.mrf.mxu0
    %v983 = vadd.f32 0.0, %v982
    %v984 = vpop.f32.mrf.mxu0
    %985 = vmatprep.mubr.f32.mxu0 0.0
    %986 = vmatmul.mubr.f32.gmra.mxu0 %v880
    %v987 = vpop.f32.mrf.mxu0
    %v988 = vadd.f32 0.0, %v987
    %v989 = vpop.f32.mrf.mxu0
    %990 = vmatprep.mubr.f32.mxu0 0.0
    %991 = vmatmul.mubr.f32.gmra.mxu0 %v883
    %v992 = vpop.f32.mrf.mxu0
    %v993 = vadd.f32 0.0, %v992
    %v994 = vpop.f32.mrf.mxu0
    %995 = vmatprep.mubr.f32.mxu0 0.0
    %996 = vmatmul.mubr.f32.gmra.mxu0 %v886
    %v997 = vpop.f32.mrf.mxu0
    %v998 = vpop.f32.mrf.mxu0
    %999 = vmatprep.mubr.f32.mxu0 0.0
    %1000 = vmatmul.mubr.f32.gmra.mxu0 %v889
    %v1001 = vpop.f32.mrf.mxu0
    %v1002 = vpop.f32.mrf.mxu0
    %1003 = vdwg.mxu0
    %v1005 = vsel %vm137, %v89, 0
    %v1008 = vsel %vm137, %v90, 0
    %v1011 = vsel %vm137, %v91, 0
    %v1014 = vsel %vm137, %v92, 0
    %v1017 = vsel %vm137, %v93, 0
    %v1020 = vsel %vm137, %v94, 0
    %v1023 = vsel %vm137, %v95, 0
    %v1026 = vsel %vm137, %v96, 0
    %v1029 = vsel %vm137, %v97, 0
    %v1032 = vsel %vm137, %v98, 0
    %1034 = vmatprep.subr.mxu0 0.0
    %1035 = vmatpush1.msra.mxu0 0.0
    %1036 = vmatprep.subr.mxu0 0.0
    %1037 = vmatpush1.msra.mxu0 0.0
    %1038 = vmatprep.subr.mxu0 0.0
    %1039 = vmatpush1.msra.mxu0 0.0
    %1040 = vmatprep.subr.mxu0 0.0
    %1041 = vmatpush1.msra.mxu0 0.0
    %1042 = vmatprep.subr.mxu0 0.0
    %1043 = vmatpush1.msra.mxu0 0.0
    %1044 = vmatprep.subr.mxu0 0.0
    %1045 = vmatpush1.msra.mxu0 0.0
    %1046 = vmatprep.subr.mxu0 0.0
    %1047 = vmatpush1.msra.mxu0 0.0
    %1048 = vmatprep.subr.mxu0 0.0
    %1049 = vmatpush1.msra.mxu0 0.0
    %1050 = vmatprep.subr.mxu0 0.0
    %1051 = vmatpush1.msra.mxu0 0.0
    %1052 = vmatprep.subr.mxu0 0.0
    %1053 = vmatpush1.msra.mxu0 0.0
    %1054 = vmatprep.subr.mxu0 0.0
    %1055 = vmatpush1.msra.mxu0 0.0
    %1056 = vmatprep.subr.mxu0 0.0
    %1057 = vmatpush1.msra.mxu0 0.0
    %1058 = vmatprep.subr.mxu0 0.0
    %1059 = vmatpush1.msra.mxu0 0.0
    %1060 = vmatprep.subr.mxu0 0.0
    %1061 = vmatpush1.msra.mxu0 0.0
    %1062 = vmatprep.subr.mxu0 0.0
    %1063 = vmatpush1.msra.mxu0 %v132
    %1064 = vmatprep.subr.mxu0 0.0
    %1065 = vmatpush1.msra.mxu0 %v131
    %1066 = vmatprep.subr.mxu0 0.0
    %1067 = vmatpush2.msra.mxu0 0.0
    %1068 = vmatprep.subr.mxu0 0.0
    %1069 = vmatpush2.msra.mxu0 0.0
    %1070 = vmatprep.subr.mxu0 0.0
    %1071 = vmatpush2.msra.mxu0 0.0
    %1072 = vmatprep.subr.mxu0 0.0
    %1073 = vmatpush2.msra.mxu0 0.0
    %1074 = vmatprep.subr.mxu0 0.0
    %1075 = vmatpush2.msra.mxu0 0.0
    %1076 = vmatprep.subr.mxu0 0.0
    %1077 = vmatpush2.msra.mxu0 0.0
    %1078 = vmatprep.subr.mxu0 0.0
    %1079 = vmatpush2.msra.mxu0 0.0
    %1080 = vmatprep.subr.mxu0 0.0
    %1081 = vmatpush2.msra.mxu0 0.0
    %1082 = vmatprep.subr.mxu0 0.0
    %1083 = vmatpush2.msra.mxu0 0.0
    %1084 = vmatprep.subr.mxu0 0.0
    %1085 = vmatpush2.msra.mxu0 0.0
    %1086 = vmatprep.subr.mxu0 0.0
    %1087 = vmatpush2.msra.mxu0 0.0
    %1088 = vmatprep.subr.mxu0 0.0
    %1089 = vmatpush2.msra.mxu0 0.0
    %1090 = vmatprep.subr.mxu0 0.0
    %1091 = vmatpush2.msra.mxu0 0.0
    %1092 = vmatprep.subr.mxu0 0.0
    %1093 = vmatpush2.msra.mxu0 0.0
    %1094 = vmatprep.subr.mxu0 0.0
    %1095 = vmatpush2.msra.mxu0 0.0
    %1096 = vmatprep.subr.mxu0 0.0
    %1097 = vmatpush2.msra.mxu0 0.0
    %1098 = vmatprep.mubr.f32.mxu0 0.0
    %1099 = vmatmul.mubr.f32.gmra.mxu0 %v1005
    %v1100 = vpop.f32.mrf.mxu0
    %v1101 = vadd.f32 0.0, %v1100
    %v1102 = vpop.f32.mrf.mxu0
    %1103 = vmatprep.mubr.f32.mxu0 0.0
    %1104 = vmatmul.mubr.f32.gmra.mxu0 %v1008
    %v1105 = vpop.f32.mrf.mxu0
    %v1106 = vadd.f32 0.0, %v1105
    %v1107 = vpop.f32.mrf.mxu0
    %1108 = vmatprep.mubr.f32.mxu0 0.0
    %1109 = vmatmul.mubr.f32.gmra.mxu0 %v1011
    %v1110 = vpop.f32.mrf.mxu0
    %v1111 = vadd.f32 0.0, %v1110
    %v1112 = vpop.f32.mrf.mxu0
    %1113 = vmatprep.mubr.f32.mxu0 0.0
    %1114 = vmatmul.mubr.f32.gmra.mxu0 %v1014
    %v1115 = vpop.f32.mrf.mxu0
    %v1116 = vadd.f32 0.0, %v1115
    %v1117 = vpop.f32.mrf.mxu0
    %1118 = vmatprep.mubr.f32.mxu0 0.0
    %1119 = vmatmul.mubr.f32.gmra.mxu0 %v1017
    %v1120 = vpop.f32.mrf.mxu0
    %v1121 = vadd.f32 0.0, %v1120
    %v1122 = vpop.f32.mrf.mxu0
    %1123 = vmatprep.mubr.f32.mxu0 0.0
    %1124 = vmatmul.mubr.f32.gmra.mxu0 %v1020
    %v1125 = vpop.f32.mrf.mxu0
    %v1126 = vadd.f32 0.0, %v1125
    %v1127 = vpop.f32.mrf.mxu0
    %1128 = vmatprep.mubr.f32.mxu0 0.0
    %1129 = vmatmul.mubr.f32.gmra.mxu0 %v1023
    %v1130 = vpop.f32.mrf.mxu0
    %v1131 = vadd.f32 0.0, %v1130
    %v1132 = vpop.f32.mrf.mxu0
    %1133 = vmatprep.mubr.f32.mxu0 0.0
    %1134 = vmatmul.mubr.f32.gmra.mxu0 %v1026
    %v1135 = vpop.f32.mrf.mxu0
    %v1136 = vadd.f32 0.0, %v1135
    %v1137 = vpop.f32.mrf.mxu0
    %1138 = vmatprep.mubr.f32.mxu0 0.0
    %1139 = vmatmul.mubr.f32.gmra.mxu0 %v1029
    %v1140 = vpop.f32.mrf.mxu0
    %v1141 = vpop.f32.mrf.mxu0
    %1142 = vmatprep.mubr.f32.mxu0 0.0
    %1143 = vmatmul.mubr.f32.gmra.mxu0 %v1032
    %v1144 = vpop.f32.mrf.mxu0
    %v1145 = vpop.f32.mrf.mxu0
    %1146 = vdwg.mxu0
    %v1148 = vsel %vm137, %v99, 0
    %v1151 = vsel %vm137, %v100, 0
    %v1154 = vsel %vm137, %v101, 0
    %v1157 = vsel %vm137, %v102, 0
    %v1160 = vsel %vm137, %v103, 0
    %v1163 = vsel %vm137, %v104, 0
    %v1166 = vsel %vm137, %v105, 0
    %v1169 = vsel %vm137, %v106, 0
    %v1172 = vsel %vm137, %v107, 0
    %v1175 = vsel %vm137, %v108, 0
    %1177 = vmatprep.subr.mxu0 0.0
    %1178 = vmatpush1.msra.mxu0 0.0
    %1179 = vmatprep.subr.mxu0 0.0
    %1180 = vmatpush1.msra.mxu0 0.0
    %1181 = vmatprep.subr.mxu0 0.0
    %1182 = vmatpush1.msra.mxu0 0.0
    %1183 = vmatprep.subr.mxu0 0.0
    %1184 = vmatpush1.msra.mxu0 0.0
    %1185 = vmatprep.subr.mxu0 0.0
    %1186 = vmatpush1.msra.mxu0 0.0
    %1187 = vmatprep.subr.mxu0 0.0
    %1188 = vmatpush1.msra.mxu0 0.0
    %1189 = vmatprep.subr.mxu0 0.0
    %1190 = vmatpush1.msra.mxu0 0.0
    %1191 = vmatprep.subr.mxu0 0.0
    %1192 = vmatpush1.msra.mxu0 0.0
    %1193 = vmatprep.subr.mxu0 0.0
    %1194 = vmatpush1.msra.mxu0 0.0
    %1195 = vmatprep.subr.mxu0 0.0
    %1196 = vmatpush1.msra.mxu0 0.0
    %1197 = vmatprep.subr.mxu0 0.0
    %1198 = vmatpush1.msra.mxu0 0.0
    %1199 = vmatprep.subr.mxu0 0.0
    %1200 = vmatpush1.msra.mxu0 0.0
    %1201 = vmatprep.subr.mxu0 0.0
    %1202 = vmatpush1.msra.mxu0 0.0
    %1203 = vmatprep.subr.mxu0 0.0
    %1204 = vmatpush1.msra.mxu0 0.0
    %1205 = vmatprep.subr.mxu0 0.0
    %1206 = vmatpush1.msra.mxu0 %v134
    %1207 = vmatprep.subr.mxu0 0.0
    %1208 = vmatpush1.msra.mxu0 %v133
    %1209 = vmatprep.subr.mxu0 0.0
    %1210 = vmatpush2.msra.mxu0 0.0
    %1211 = vmatprep.subr.mxu0 0.0
    %1212 = vmatpush2.msra.mxu0 0.0
    %1213 = vmatprep.subr.mxu0 0.0
    %1214 = vmatpush2.msra.mxu0 0.0
    %1215 = vmatprep.subr.mxu0 0.0
    %1216 = vmatpush2.msra.mxu0 0.0
    %1217 = vmatprep.subr.mxu0 0.0
    %1218 = vmatpush2.msra.mxu0 0.0
    %1219 = vmatprep.subr.mxu0 0.0
    %1220 = vmatpush2.msra.mxu0 0.0
    %1221 = vmatprep.subr.mxu0 0.0
    %1222 = vmatpush2.msra.mxu0 0.0
    %1223 = vmatprep.subr.mxu0 0.0
    %1224 = vmatpush2.msra.mxu0 0.0
    %1225 = vmatprep.subr.mxu0 0.0
    %1226 = vmatpush2.msra.mxu0 0.0
    %1227 = vmatprep.subr.mxu0 0.0
    %1228 = vmatpush2.msra.mxu0 0.0
    %1229 = vmatprep.subr.mxu0 0.0
    %1230 = vmatpush2.msra.mxu0 0.0
    %1231 = vmatprep.subr.mxu0 0.0
    %1232 = vmatpush2.msra.mxu0 0.0
    %1233 = vmatprep.subr.mxu0 0.0
    %1234 = vmatpush2.msra.mxu0 0.0
    %1235 = vmatprep.subr.mxu0 0.0
    %1236 = vmatpush2.msra.mxu0 0.0
    %1237 = vmatprep.subr.mxu0 0.0
    %1238 = vmatpush2.msra.mxu0 0.0
    %1239 = vmatprep.subr.mxu0 0.0
    %1240 = vmatpush2.msra.mxu0 0.0
    %1241 = vmatprep.mubr.f32.mxu0 0.0
    %1242 = vmatmul.mubr.f32.gmra.mxu0 %v1148
    %v1243 = vpop.f32.mrf.mxu0
    %v1244 = vadd.f32 0.0, %v1243
    %v1245 = vpop.f32.mrf.mxu0
    %1246 = vmatprep.mubr.f32.mxu0 0.0
    %1247 = vmatmul.mubr.f32.gmra.mxu0 %v1151
    %v1248 = vpop.f32.mrf.mxu0
    %v1249 = vadd.f32 0.0, %v1248
    %v1250 = vpop.f32.mrf.mxu0
    %1251 = vmatprep.mubr.f32.mxu0 0.0
    %1252 = vmatmul.mubr.f32.gmra.mxu0 %v1154
    %v1253 = vpop.f32.mrf.mxu0
    %v1254 = vadd.f32 0.0, %v1253
    %v1255 = vpop.f32.mrf.mxu0
    %1256 = vmatprep.mubr.f32.mxu0 0.0
    %1257 = vmatmul.mubr.f32.gmra.mxu0 %v1157
    %v1258 = vpop.f32.mrf.mxu0
    %v1259 = vadd.f32 0.0, %v1258
    %v1260 = vpop.f32.mrf.mxu0
    %1261 = vmatprep.mubr.f32.mxu0 0.0
    %1262 = vmatmul.mubr.f32.gmra.mxu0 %v1160
    %v1263 = vpop.f32.mrf.mxu0
    %v1264 = vadd.f32 0.0, %v1263
    %v1265 = vpop.f32.mrf.mxu0
    %1266 = vmatprep.mubr.f32.mxu0 0.0
    %1267 = vmatmul.mubr.f32.gmra.mxu0 %v1163
    %v1268 = vpop.f32.mrf.mxu0
    %v1269 = vadd.f32 0.0, %v1268
    %v1270 = vpop.f32.mrf.mxu0
    %1271 = vmatprep.mubr.f32.mxu0 0.0
    %1272 = vmatmul.mubr.f32.gmra.mxu0 %v1166
    %v1273 = vpop.f32.mrf.mxu0
    %v1274 = vadd.f32 0.0, %v1273
    %v1275 = vpop.f32.mrf.mxu0
    %1276 = vmatprep.mubr.f32.mxu0 0.0
    %1277 = vmatmul.mubr.f32.gmra.mxu0 %v1169
    %v1278 = vpop.f32.mrf.mxu0
    %v1279 = vadd.f32 0.0, %v1278
    %v1280 = vpop.f32.mrf.mxu0
    %1281 = vmatprep.mubr.f32.mxu0 0.0
    %1282 = vmatmul.mubr.f32.gmra.mxu0 %v1172
    %v1283 = vpop.f32.mrf.mxu0
    %v1284 = vpop.f32.mrf.mxu0
    %1285 = vmatprep.mubr.f32.mxu0 0.0
    %1286 = vmatmul.mubr.f32.gmra.mxu0 %v1175
    %v1287 = vpop.f32.mrf.mxu0
    %v1288 = vpop.f32.mrf.mxu0
    %1289 = vdwg.mxu0
    %v1291 = vsel %vm137, %v109, 0
    %v1294 = vsel %vm137, %v110, 0
    %v1297 = vsel %vm137, %v111, 0
    %v1300 = vsel %vm137, %v112, 0
    %v1303 = vsel %vm137, %v113, 0
    %v1306 = vsel %vm137, %v114, 0
    %v1309 = vsel %vm137, %v115, 0
    %v1312 = vsel %vm137, %v116, 0
    %v1315 = vsel %vm137, %v117, 0
    %v1318 = vsel %vm137, %v118, 0
    %1320 = vmatprep.subr.mxu0 0.0
    %1321 = vmatpush1.msra.mxu0 0.0
    %1322 = vmatprep.subr.mxu0 0.0
    %1323 = vmatpush1.msra.mxu0 0.0
    %1324 = vmatprep.subr.mxu0 0.0
    %1325 = vmatpush1.msra.mxu0 0.0
    %1326 = vmatprep.subr.mxu0 0.0
    %1327 = vmatpush1.msra.mxu0 0.0
    %1328 = vmatprep.subr.mxu0 0.0
    %1329 = vmatpush1.msra.mxu0 0.0
    %1330 = vmatprep.subr.mxu0 0.0
    %1331 = vmatpush1.msra.mxu0 0.0
    %1332 = vmatprep.subr.mxu0 0.0
    %1333 = vmatpush1.msra.mxu0 0.0
    %1334 = vmatprep.subr.mxu0 0.0
    %1335 = vmatpush1.msra.mxu0 0.0
    %1336 = vmatprep.subr.mxu0 0.0
    %1337 = vmatpush1.msra.mxu0 0.0
    %1338 = vmatprep.subr.mxu0 0.0
    %1339 = vmatpush1.msra.mxu0 0.0
    %1340 = vmatprep.subr.mxu0 0.0
    %1341 = vmatpush1.msra.mxu0 0.0
    %1342 = vmatprep.subr.mxu0 0.0
    %1343 = vmatpush1.msra.mxu0 0.0
    %1344 = vmatprep.subr.mxu0 0.0
    %1345 = vmatpush1.msra.mxu0 0.0
    %1346 = vmatprep.subr.mxu0 0.0
    %1347 = vmatpush1.msra.mxu0 0.0
    %1348 = vmatprep.subr.mxu0 0.0
    %1349 = vmatpush1.msra.mxu0 %v136
    %1350 = vmatprep.subr.mxu0 0.0
    %1351 = vmatpush1.msra.mxu0 %v135
    %1352 = vmatprep.subr.mxu0 0.0
    %1353 = vmatpush2.msra.mxu0 0.0
    %1354 = vmatprep.subr.mxu0 0.0
    %1355 = vmatpush2.msra.mxu0 0.0
    %1356 = vmatprep.subr.mxu0 0.0
    %1357 = vmatpush2.msra.mxu0 0.0
    %1358 = vmatprep.subr.mxu0 0.0
    %1359 = vmatpush2.msra.mxu0 0.0
    %1360 = vmatprep.subr.mxu0 0.0
    %1361 = vmatpush2.msra.mxu0 0.0
    %1362 = vmatprep.subr.mxu0 0.0
    %1363 = vmatpush2.msra.mxu0 0.0
    %1364 = vmatprep.subr.mxu0 0.0
    %1365 = vmatpush2.msra.mxu0 0.0
    %1366 = vmatprep.subr.mxu0 0.0
    %1367 = vmatpush2.msra.mxu0 0.0
    %1368 = vmatprep.subr.mxu0 0.0
    %1369 = vmatpush2.msra.mxu0 0.0
    %1370 = vmatprep.subr.mxu0 0.0
    %1371 = vmatpush2.msra.mxu0 0.0
    %1372 = vmatprep.subr.mxu0 0.0
    %1373 = vmatpush2.msra.mxu0 0.0
    %1374 = vmatprep.subr.mxu0 0.0
    %1375 = vmatpush2.msra.mxu0 0.0
    %1376 = vmatprep.subr.mxu0 0.0
    %1377 = vmatpush2.msra.mxu0 0.0
    %1378 = vmatprep.subr.mxu0 0.0
    %1379 = vmatpush2.msra.mxu0 0.0
    %1380 = vmatprep.subr.mxu0 0.0
    %1381 = vmatpush2.msra.mxu0 0.0
    %1382 = vmatprep.subr.mxu0 0.0
    %1383 = vmatpush2.msra.mxu0 0.0
    %1384 = vmatprep.mubr.f32.mxu0 0.0
    %1385 = vmatmul.mubr.f32.gmra.mxu0 %v1291
    %v1386 = vpop.f32.mrf.mxu0
    %v1387 = vadd.f32 0.0, %v1386
    %v1388 = vpop.f32.mrf.mxu0
    %1389 = vmatprep.mubr.f32.mxu0 0.0
    %1390 = vmatmul.mubr.f32.gmra.mxu0 %v1294
    %v1391 = vpop.f32.mrf.mxu0
    %v1392 = vadd.f32 0.0, %v1391
    %v1393 = vpop.f32.mrf.mxu0
    %1394 = vmatprep.mubr.f32.mxu0 0.0
    %1395 = vmatmul.mubr.f32.gmra.mxu0 %v1297
    %v1396 = vpop.f32.mrf.mxu0
    %v1397 = vadd.f32 0.0, %v1396
    %v1398 = vpop.f32.mrf.mxu0
    %1399 = vmatprep.mubr.f32.mxu0 0.0
    %1400 = vmatmul.mubr.f32.gmra.mxu0 %v1300
    %v1401 = vpop.f32.mrf.mxu0
    %v1402 = vadd.f32 0.0, %v1401
    %v1403 = vpop.f32.mrf.mxu0
    %1404 = vmatprep.mubr.f32.mxu0 0.0
    %1405 = vmatmul.mubr.f32.gmra.mxu0 %v1303
    %v1406 = vpop.f32.mrf.mxu0
    %v1407 = vadd.f32 0.0, %v1406
    %v1408 = vpop.f32.mrf.mxu0
    %1409 = vmatprep.mubr.f32.mxu0 0.0
    %1410 = vmatmul.mubr.f32.gmra.mxu0 %v1306
    %v1411 = vpop.f32.mrf.mxu0
    %v1412 = vadd.f32 0.0, %v1411
    %v1413 = vpop.f32.mrf.mxu0
    %1414 = vmatprep.mubr.f32.mxu0 0.0
    %1415 = vmatmul.mubr.f32.gmra.mxu0 %v1309
    %v1416 = vpop.f32.mrf.mxu0
    %v1417 = vadd.f32 0.0, %v1416
    %v1418 = vpop.f32.mrf.mxu0
    %1419 = vmatprep.mubr.f32.mxu0 0.0
    %1420 = vmatmul.mubr.f32.gmra.mxu0 %v1312
    %v1421 = vpop.f32.mrf.mxu0
    %v1422 = vadd.f32 0.0, %v1421
    %v1423 = vpop.f32.mrf.mxu0
    %1424 = vmatprep.mubr.f32.mxu0 0.0
    %1425 = vmatmul.mubr.f32.gmra.mxu0 %v1315
    %v1426 = vpop.f32.mrf.mxu0
    %v1427 = vpop.f32.mrf.mxu0
    %1428 = vmatprep.mubr.f32.mxu0 0.0
    %1429 = vmatmul.mubr.f32.gmra.mxu0 %v1318
    %v1430 = vpop.f32.mrf.mxu0
    %v1431 = vpop.f32.mrf.mxu0
    %1432 = vdwg.mxu0
    %v1433 = vmul.f32 %v265, %v255
    %v1434 = vmul.f32 %v270, %v260
    %v1435 = vmul.f32 %v410, %v255
    %v1436 = vmul.f32 %v415, %v260
    %v1437 = vmul.f32 %v555, %v255
    %v1438 = vmul.f32 %v560, %v260
    %v1439 = vmul.f32 %v700, %v255
    %v1440 = vmul.f32 %v705, %v260
    %v1441 = vmul.f32 %v845, %v255
    %v1442 = vmul.f32 %v850, %v260
    %v1443 = vmul.f32 %v988, %v255
    %v1444 = vmul.f32 %v993, %v260
    %v1445 = vmul.f32 %v1131, %v255
    %v1446 = vmul.f32 %v1136, %v260
    %v1447 = vmul.f32 %v1274, %v255
    %v1448 = vmul.f32 %v1279, %v260
    %v1449 = vmul.f32 %v1417, %v255
    %v1450 = vmul.f32 %v1422, %v260
    %v1451 = vadd.f32 %v1433, %v1434
    %v1452 = vrot.slane %v1451, 4
    %v1453 = vadd.f32 %v1451, %v1452
    %v1454 = vrot.slane %v1453, 2
    %v1455 = vadd.f32 %v1453, %v1454
    %v1456 = vrot.slane %v1455, 1
    %v1457 = vadd.f32 %v1455, %v1456
    %v1458 = vadd.f32 %v1435, %v1436
    %v1459 = vrot.slane %v1458, 4
    %v1460 = vadd.f32 %v1458, %v1459
    %v1461 = vrot.slane %v1460, 2
    %v1462 = vadd.f32 %v1460, %v1461
    %v1463 = vrot.slane %v1462, 1
    %v1464 = vadd.f32 %v1462, %v1463
    %v1465 = vadd.f32 %v1437, %v1438
    %v1466 = vrot.slane %v1465, 4
    %v1467 = vadd.f32 %v1465, %v1466
    %v1468 = vrot.slane %v1467, 2
    %v1469 = vadd.f32 %v1467, %v1468
    %v1470 = vrot.slane %v1469, 1
    %v1471 = vadd.f32 %v1469, %v1470
    %v1472 = vadd.f32 %v1439, %v1440
    %v1473 = vrot.slane %v1472, 4
    %v1474 = vadd.f32 %v1472, %v1473
    %v1475 = vrot.slane %v1474, 2
    %v1476 = vadd.f32 %v1474, %v1475
    %v1477 = vrot.slane %v1476, 1
    %v1478 = vadd.f32 %v1476, %v1477
    %v1479 = vadd.f32 %v1441, %v1442
    %v1480 = vrot.slane %v1479, 4
    %v1481 = vadd.f32 %v1479, %v1480
    %v1482 = vrot.slane %v1481, 2
    %v1483 = vadd.f32 %v1481, %v1482
    %v1484 = vrot.slane %v1483, 1
    %v1485 = vadd.f32 %v1483, %v1484
    %v1486 = vadd.f32 %v1443, %v1444
    %v1487 = vrot.slane %v1486, 4
    %v1488 = vadd.f32 %v1486, %v1487
    %v1489 = vrot.slane %v1488, 2
    %v1490 = vadd.f32 %v1488, %v1489
    %v1491 = vrot.slane %v1490, 1
    %v1492 = vadd.f32 %v1490, %v1491
    %v1493 = vadd.f32 %v1445, %v1446
    %v1494 = vrot.slane %v1493, 4
    %v1495 = vadd.f32 %v1493, %v1494
    %v1496 = vrot.slane %v1495, 2
    %v1497 = vadd.f32 %v1495, %v1496
    %v1498 = vrot.slane %v1497, 1
    %v1499 = vadd.f32 %v1497, %v1498
    %v1500 = vadd.f32 %v1447, %v1448
    %v1501 = vrot.slane %v1500, 4
    %v1502 = vadd.f32 %v1500, %v1501
    %v1503 = vrot.slane %v1502, 2
    %v1504 = vadd.f32 %v1502, %v1503
    %v1505 = vrot.slane %v1504, 1
    %v1506 = vadd.f32 %v1504, %v1505
    %v1507 = vadd.f32 %v1449, %v1450
    %v1508 = vrot.slane %v1507, 4
    %v1509 = vadd.f32 %v1507, %v1508
    %v1510 = vrot.slane %v1509, 2
    %v1511 = vadd.f32 %v1509, %v1510
    %v1512 = vrot.slane %v1511, 1
    %v1513 = vadd.f32 %v1511, %v1512
    %v1514 = vmul.f32 %v1457, 0.25
    %v1515 = vmul.f32 %v1464, 0.25
    %v1516 = vmul.f32 %v1471, 0.25
    %v1517 = vmul.f32 %v1478, 0.25
    %v1518 = vmul.f32 %v1485, 0.25
    %v1519 = vmul.f32 %v1492, 0.25
    %v1520 = vmul.f32 %v1499, 0.25
    %v1521 = vmul.f32 %v1506, 0.25
    %v1522 = vmul.f32 %v1513, 0.25
    %v1523 = vmax.f32 %v1514, %v1518
    %v1524 = vmax.f32 %v1515, %v1519
    %v1525 = vmax.f32 %v1516, %v1520
    %v1526 = vmax.f32 %v1517, %v1521
    %v1527 = vmax.f32 %v1523, %v1522
    %v1528 = vmax.f32 %v1527, %v1524
    %v1529 = vmax.f32 %v1525, %v1526
    %v1530 = vmax.f32 %v1528, %v1529
    %v1531 = vsub.f32 %v1514, %v1530
    %v1532 = vsub.f32 %v1515, %v1530
    %v1533 = vsub.f32 %v1516, %v1530
    %v1534 = vsub.f32 %v1517, %v1530
    %v1535 = vsub.f32 %v1518, %v1530
    %v1536 = vsub.f32 %v1519, %v1530
    %v1537 = vsub.f32 %v1520, %v1530
    %v1538 = vsub.f32 %v1521, %v1530
    %v1539 = vsub.f32 %v1522, %v1530
    %v1540 = vmul.f32 %v1531, 1.442695
    %v1541 = vpow.pop %v1540
    %v1542 = vmul.f32 %v1532, 1.442695
    %v1543 = vpow.pop %v1542
    %v1544 = vmul.f32 %v1533, 1.442695
    %v1545 = vpow.pop %v1544
    %v1546 = vmul.f32 %v1534, 1.442695
    %v1547 = vpow.pop %v1546
    %v1548 = vmul.f32 %v1535, 1.442695
    %v1549 = vpow.pop %v1548
    %v1550 = vmul.f32 %v1536, 1.442695
    %v1551 = vpow.pop %v1550
    %v1552 = vmul.f32 %v1537, 1.442695
    %v1553 = vpow.pop %v1552
    %v1554 = vmul.f32 %v1538, 1.442695
    %v1555 = vpow.pop %v1554
    %v1556 = vmul.f32 %v1539, 1.442695
    %v1557 = vpow.pop %v1556
    %v1567 = vrot.slane %v1543, 7
    %vm1568 = vcmask 1041409
    %v1569 = vsel %vm1568, %v1567, %v1541
    %v1570 = vrot.slane %v1545, 6
    %vm1571 = vcmask 1042434
    %v1572 = vsel %vm1571, %v1570, %v1569
    %v1573 = vrot.slane %v1547, 5
    %vm1574 = vcmask 1043459
    %v1575 = vsel %vm1574, %v1573, %v1572
    %v1576 = vrot.slane %v1549, 4
    %vm1577 = vcmask 1044484
    %v1578 = vsel %vm1577, %v1576, %v1575
    %v1579 = vrot.slane %v1551, 3
    %vm1580 = vcmask 1045509
    %v1581 = vsel %vm1580, %v1579, %v1578
    %v1582 = vrot.slane %v1553, 2
    %vm1583 = vcmask 1046534
    %v1584 = vsel %vm1583, %v1582, %v1581
    %v1585 = vrot.slane %v1555, 1
    %vm1586 = vcmask 1047559
    %v1587 = vsel %vm1586, %v1585, %v1584
    %vm1590 = vcmask 1040384
    %v1591 = vsel %vm1590, %v1557, 0.0
    %v1592 = vadd.f32 %v1587, %v1591
    %v1593 = vrot.slane %v1592, 4
    %v1594 = vadd.f32 %v1592, %v1593
    %v1595 = vrot.slane %v1594, 2
    %v1596 = vadd.f32 %v1594, %v1595
    %v1597 = vrot.slane %v1596, 1
    %v1598 = vadd.f32 %v1596, %v1597
    %v1599 = vrcp.pop %v1598
    %v1600 = vmul.f32 %v1598, %v1599
    %v1601 = vsub.f32 2.0, %v1600
    %v1602 = vmul.f32 %v1599, %v1601
    %v1603 = vlaneseq
    %v1604 = vshrl.u32 %v1603, 7
    %v1605 = vsub.s32 0, %v1604
    %v1606 = vrot.slane %v1602, %v1605
    %v1607 = vmul.f32 %v1541, %v1606
    %v1608 = vmul.f32 %v1543, %v1606
    %v1609 = vmul.f32 %v1545, %v1606
    %v1610 = vmul.f32 %v1547, %v1606
    %v1611 = vmul.f32 %v1549, %v1606
    %v1612 = vmul.f32 %v1551, %v1606
    %v1613 = vmul.f32 %v1553, %v1606
    %v1614 = vmul.f32 %v1555, %v1606
    %v1615 = vmul.f32 %v1557, %v1606
    %v1616 = vadd.f32 %v1607, 0.0
    %v1617 = vadd.f32 %v1608, 0.0
    %v1618 = vadd.f32 %v1609, 0.0
    %v1619 = vadd.f32 %v1610, 0.0
    %v1620 = vadd.f32 %v1611, 0.0
    %v1621 = vadd.f32 %v1612, 0.0
    %v1622 = vadd.f32 %v1613, 0.0
    %v1623 = vadd.f32 %v1614, 0.0
    %v1624 = vadd.f32 %v1615, 0.0
    %v1625 = vmul.f32 %v265, %v400
    %v1626 = vmul.f32 %v270, %v405
    %v1627 = vmul.f32 %v410, %v400
    %v1628 = vmul.f32 %v415, %v405
    %v1629 = vmul.f32 %v555, %v400
    %v1630 = vmul.f32 %v560, %v405
    %v1631 = vmul.f32 %v700, %v400
    %v1632 = vmul.f32 %v705, %v405
    %v1633 = vmul.f32 %v845, %v400
    %v1634 = vmul.f32 %v850, %v405
    %v1635 = vmul.f32 %v988, %v400
    %v1636 = vmul.f32 %v993, %v405
    %v1637 = vmul.f32 %v1131, %v400
    %v1638 = vmul.f32 %v1136, %v405
    %v1639 = vmul.f32 %v1274, %v400
    %v1640 = vmul.f32 %v1279, %v405
    %v1641 = vmul.f32 %v1417, %v400
    %v1642 = vmul.f32 %v1422, %v405
    %v1643 = vadd.f32 %v1625, %v1626
    %v1644 = vrot.slane %v1643, 4
    %v1645 = vadd.f32 %v1643, %v1644
    %v1646 = vrot.slane %v1645, 2
    %v1647 = vadd.f32 %v1645, %v1646
    %v1648 = vrot.slane %v1647, 1
    %v1649 = vadd.f32 %v1647, %v1648
    %v1650 = vadd.f32 %v1627, %v1628
    %v1651 = vrot.slane %v1650, 4
    %v1652 = vadd.f32 %v1650, %v1651
    %v1653 = vrot.slane %v1652, 2
    %v1654 = vadd.f32 %v1652, %v1653
    %v1655 = vrot.slane %v1654, 1
    %v1656 = vadd.f32 %v1654, %v1655
    %v1657 = vadd.f32 %v1629, %v1630
    %v1658 = vrot.slane %v1657, 4
    %v1659 = vadd.f32 %v1657, %v1658
    %v1660 = vrot.slane %v1659, 2
    %v1661 = vadd.f32 %v1659, %v1660
    %v1662 = vrot.slane %v1661, 1
    %v1663 = vadd.f32 %v1661, %v1662
    %v1664 = vadd.f32 %v1631, %v1632
    %v1665 = vrot.slane %v1664, 4
    %v1666 = vadd.f32 %v1664, %v1665
    %v1667 = vrot.slane %v1666, 2
    %v1668 = vadd.f32 %v1666, %v1667
    %v1669 = vrot.slane %v1668, 1
    %v1670 = vadd.f32 %v1668, %v1669
    %v1671 = vadd.f32 %v1633, %v1634
    %v1672 = vrot.slane %v1671, 4
    %v1673 = vadd.f32 %v1671, %v1672
    %v1674 = vrot.slane %v1673, 2
    %v1675 = vadd.f32 %v1673, %v1674
    %v1676 = vrot.slane %v1675, 1
    %v1677 = vadd.f32 %v1675, %v1676
    %v1678 = vadd.f32 %v1635, %v1636
    %v1679 = vrot.slane %v1678, 4
    %v1680 = vadd.f32 %v1678, %v1679
    %v1681 = vrot.slane %v1680, 2
    %v1682 = vadd.f32 %v1680, %v1681
    %v1683 = vrot.slane %v1682, 1
    %v1684 = vadd.f32 %v1682, %v1683
    %v1685 = vadd.f32 %v1637, %v1638
    %v1686 = vrot.slane %v1685, 4
    %v1687 = vadd.f32 %v1685, %v1686
    %v1688 = vrot.slane %v1687, 2
    %v1689 = vadd.f32 %v1687, %v1688
    %v1690 = vrot.slane %v1689, 1
    %v1691 = vadd.f32 %v1689, %v1690
    %v1692 = vadd.f32 %v1639, %v1640
    %v1693 = vrot.slane %v1692, 4
    %v1694 = vadd.f32 %v1692, %v1693
    %v1695 = vrot.slane %v1694, 2
    %v1696 = vadd.f32 %v1694, %v1695
    %v1697 = vrot.slane %v1696, 1
    %v1698 = vadd.f32 %v1696, %v1697
    %v1699 = vadd.f32 %v1641, %v1642
    %v1700 = vrot.slane %v1699, 4
    %v1701 = vadd.f32 %v1699, %v1700
    %v1702 = vrot.slane %v1701, 2
    %v1703 = vadd.f32 %v1701, %v1702
    %v1704 = vrot.slane %v1703, 1
    %v1705 = vadd.f32 %v1703, %v1704
    %v1706 = vmul.f32 %v1649, 0.25
    %v1707 = vmul.f32 %v1656, 0.25
    %v1708 = vmul.f32 %v1663, 0.25
    %v1709 = vmul.f32 %v1670, 0.25
    %v1710 = vmul.f32 %v1677, 0.25
    %v1711 = vmul.f32 %v1684, 0.25
    %v1712 = vmul.f32 %v1691, 0.25
    %v1713 = vmul.f32 %v1698, 0.25
    %v1714 = vmul.f32 %v1705, 0.25
    %v1715 = vmax.f32 %v1706, %v1710
    %v1716 = vmax.f32 %v1707, %v1711
    %v1717 = vmax.f32 %v1708, %v1712
    %v1718 = vmax.f32 %v1709, %v1713
    %v1719 = vmax.f32 %v1715, %v1714
    %v1720 = vmax.f32 %v1719, %v1716
    %v1721 = vmax.f32 %v1717, %v1718
    %v1722 = vmax.f32 %v1720, %v1721
    %v1723 = vsub.f32 %v1706, %v1722
    %v1724 = vsub.f32 %v1707, %v1722
    %v1725 = vsub.f32 %v1708, %v1722
    %v1726 = vsub.f32 %v1709, %v1722
    %v1727 = vsub.f32 %v1710, %v1722
    %v1728 = vsub.f32 %v1711, %v1722
    %v1729 = vsub.f32 %v1712, %v1722
    %v1730 = vsub.f32 %v1713, %v1722
    %v1731 = vsub.f32 %v1714, %v1722
    %v1732 = vmul.f32 %v1723, 1.442695
    %v1733 = vpow.pop %v1732
    %v1734 = vmul.f32 %v1724, 1.442695
    %v1735 = vpow.pop %v1734
    %v1736 = vmul.f32 %v1725, 1.442695
    %v1737 = vpow.pop %v1736
    %v1738 = vmul.f32 %v1726, 1.442695
    %v1739 = vpow.pop %v1738
    %v1740 = vmul.f32 %v1727, 1.442695
    %v1741 = vpow.pop %v1740
    %v1742 = vmul.f32 %v1728, 1.442695
    %v1743 = vpow.pop %v1742
    %v1744 = vmul.f32 %v1729, 1.442695
    %v1745 = vpow.pop %v1744
    %v1746 = vmul.f32 %v1730, 1.442695
    %v1747 = vpow.pop %v1746
    %v1748 = vmul.f32 %v1731, 1.442695
    %v1749 = vpow.pop %v1748
    %v1759 = vrot.slane %v1735, 7
    %v1760 = vsel %vm1568, %v1759, %v1733
    %v1761 = vrot.slane %v1737, 6
    %v1762 = vsel %vm1571, %v1761, %v1760
    %v1763 = vrot.slane %v1739, 5
    %v1764 = vsel %vm1574, %v1763, %v1762
    %v1765 = vrot.slane %v1741, 4
    %v1766 = vsel %vm1577, %v1765, %v1764
    %v1767 = vrot.slane %v1743, 3
    %v1768 = vsel %vm1580, %v1767, %v1766
    %v1769 = vrot.slane %v1745, 2
    %v1770 = vsel %vm1583, %v1769, %v1768
    %v1771 = vrot.slane %v1747, 1
    %v1772 = vsel %vm1586, %v1771, %v1770
    %v1775 = vsel %vm1590, %v1749, 0.0
    %v1776 = vadd.f32 %v1772, %v1775
    %v1777 = vrot.slane %v1776, 4
    %v1778 = vadd.f32 %v1776, %v1777
    %v1779 = vrot.slane %v1778, 2
    %v1780 = vadd.f32 %v1778, %v1779
    %v1781 = vrot.slane %v1780, 1
    %v1782 = vadd.f32 %v1780, %v1781
    %v1783 = vrcp.pop %v1782
    %v1784 = vmul.f32 %v1782, %v1783
    %v1785 = vsub.f32 2.0, %v1784
    %v1786 = vmul.f32 %v1783, %v1785
    %v1787 = vlaneseq
    %v1788 = vshrl.u32 %v1787, 7
    %v1789 = vsub.s32 0, %v1788
    %v1790 = vrot.slane %v1786, %v1789
    %v1791 = vmul.f32 %v1733, %v1790
    %v1792 = vmul.f32 %v1735, %v1790
    %v1793 = vmul.f32 %v1737, %v1790
    %v1794 = vmul.f32 %v1739, %v1790
    %v1795 = vmul.f32 %v1741, %v1790
    %v1796 = vmul.f32 %v1743, %v1790
    %v1797 = vmul.f32 %v1745, %v1790
    %v1798 = vmul.f32 %v1747, %v1790
    %v1799 = vmul.f32 %v1749, %v1790
    %v1800 = vadd.f32 %v1616, %v1791
    %v1801 = vadd.f32 %v1617, %v1792
    %v1802 = vadd.f32 %v1618, %v1793
    %v1803 = vadd.f32 %v1619, %v1794
    %v1804 = vadd.f32 %v1620, %v1795
    %v1805 = vadd.f32 %v1621, %v1796
    %v1806 = vadd.f32 %v1622, %v1797
    %v1807 = vadd.f32 %v1623, %v1798
    %v1808 = vadd.f32 %v1624, %v1799
    %v1809 = vmul.f32 %v265, %v545
    %v1810 = vmul.f32 %v270, %v550
    %v1811 = vmul.f32 %v410, %v545
    %v1812 = vmul.f32 %v415, %v550
    %v1813 = vmul.f32 %v555, %v545
    %v1814 = vmul.f32 %v560, %v550
    %v1815 = vmul.f32 %v700, %v545
    %v1816 = vmul.f32 %v705, %v550
    %v1817 = vmul.f32 %v845, %v545
    %v1818 = vmul.f32 %v850, %v550
    %v1819 = vmul.f32 %v988, %v545
    %v1820 = vmul.f32 %v993, %v550
    %v1821 = vmul.f32 %v1131, %v545
    %v1822 = vmul.f32 %v1136, %v550
    %v1823 = vmul.f32 %v1274, %v545
    %v1824 = vmul.f32 %v1279, %v550
    %v1825 = vmul.f32 %v1417, %v545
    %v1826 = vmul.f32 %v1422, %v550
    %v1827 = vadd.f32 %v1809, %v1810
    %v1828 = vrot.slane %v1827, 4
    %v1829 = vadd.f32 %v1827, %v1828
    %v1830 = vrot.slane %v1829, 2
    %v1831 = vadd.f32 %v1829, %v1830
    %v1832 = vrot.slane %v1831, 1
    %v1833 = vadd.f32 %v1831, %v1832
    %v1834 = vadd.f32 %v1811, %v1812
    %v1835 = vrot.slane %v1834, 4
    %v1836 = vadd.f32 %v1834, %v1835
    %v1837 = vrot.slane %v1836, 2
    %v1838 = vadd.f32 %v1836, %v1837
    %v1839 = vrot.slane %v1838, 1
    %v1840 = vadd.f32 %v1838, %v1839
    %v1841 = vadd.f32 %v1813, %v1814
    %v1842 = vrot.slane %v1841, 4
    %v1843 = vadd.f32 %v1841, %v1842
    %v1844 = vrot.slane %v1843, 2
    %v1845 = vadd.f32 %v1843, %v1844
    %v1846 = vrot.slane %v1845, 1
    %v1847 = vadd.f32 %v1845, %v1846
    %v1848 = vadd.f32 %v1815, %v1816
    %v1849 = vrot.slane %v1848, 4
    %v1850 = vadd.f32 %v1848, %v1849
    %v1851 = vrot.slane %v1850, 2
    %v1852 = vadd.f32 %v1850, %v1851
    %v1853 = vrot.slane %v1852, 1
    %v1854 = vadd.f32 %v1852, %v1853
    %v1855 = vadd.f32 %v1817, %v1818
    %v1856 = vrot.slane %v1855, 4
    %v1857 = vadd.f32 %v1855, %v1856
    %v1858 = vrot.slane %v1857, 2
    %v1859 = vadd.f32 %v1857, %v1858
    %v1860 = vrot.slane %v1859, 1
    %v1861 = vadd.f32 %v1859, %v1860
    %v1862 = vadd.f32 %v1819, %v1820
    %v1863 = vrot.slane %v1862, 4
    %v1864 = vadd.f32 %v1862, %v1863
    %v1865 = vrot.slane %v1864, 2
    %v1866 = vadd.f32 %v1864, %v1865
    %v1867 = vrot.slane %v1866, 1
    %v1868 = vadd.f32 %v1866, %v1867
    %v1869 = vadd.f32 %v1821, %v1822
    %v1870 = vrot.slane %v1869, 4
    %v1871 = vadd.f32 %v1869, %v1870
    %v1872 = vrot.slane %v1871, 2
    %v1873 = vadd.f32 %v1871, %v1872
    %v1874 = vrot.slane %v1873, 1
    %v1875 = vadd.f32 %v1873, %v1874
    %v1876 = vadd.f32 %v1823, %v1824
    %v1877 = vrot.slane %v1876, 4
    %v1878 = vadd.f32 %v1876, %v1877
    %v1879 = vrot.slane %v1878, 2
    %v1880 = vadd.f32 %v1878, %v1879
    %v1881 = vrot.slane %v1880, 1
    %v1882 = vadd.f32 %v1880, %v1881
    %v1883 = vadd.f32 %v1825, %v1826
    %v1884 = vrot.slane %v1883, 4
    %v1885 = vadd.f32 %v1883, %v1884
    %v1886 = vrot.slane %v1885, 2
    %v1887 = vadd.f32 %v1885, %v1886
    %v1888 = vrot.slane %v1887, 1
    %v1889 = vadd.f32 %v1887, %v1888
    %v1890 = vmul.f32 %v1833, 0.25
    %v1891 = vmul.f32 %v1840, 0.25
    %v1892 = vmul.f32 %v1847, 0.25
    %v1893 = vmul.f32 %v1854, 0.25
    %v1894 = vmul.f32 %v1861, 0.25
    %v1895 = vmul.f32 %v1868, 0.25
    %v1896 = vmul.f32 %v1875, 0.25
    %v1897 = vmul.f32 %v1882, 0.25
    %v1898 = vmul.f32 %v1889, 0.25
    %v1899 = vmax.f32 %v1890, %v1894
    %v1900 = vmax.f32 %v1891, %v1895
    %v1901 = vmax.f32 %v1892, %v1896
    %v1902 = vmax.f32 %v1893, %v1897
    %v1903 = vmax.f32 %v1899, %v1898
    %v1904 = vmax.f32 %v1903, %v1900
    %v1905 = vmax.f32 %v1901, %v1902
    %v1906 = vmax.f32 %v1904, %v1905
    %v1907 = vsub.f32 %v1890, %v1906
    %v1908 = vsub.f32 %v1891, %v1906
    %v1909 = vsub.f32 %v1892, %v1906
    %v1910 = vsub.f32 %v1893, %v1906
    %v1911 = vsub.f32 %v1894, %v1906
    %v1912 = vsub.f32 %v1895, %v1906
    %v1913 = vsub.f32 %v1896, %v1906
    %v1914 = vsub.f32 %v1897, %v1906
    %v1915 = vsub.f32 %v1898, %v1906
    %v1916 = vmul.f32 %v1907, 1.442695
    %v1917 = vpow.pop %v1916
    %v1918 = vmul.f32 %v1908, 1.442695
    %v1919 = vpow.pop %v1918
    %v1920 = vmul.f32 %v1909, 1.442695
    %v1921 = vpow.pop %v1920
    %v1922 = vmul.f32 %v1910, 1.442695
    %v1923 = vpow.pop %v1922
    %v1924 = vmul.f32 %v1911, 1.442695
    %v1925 = vpow.pop %v1924
    %v1926 = vmul.f32 %v1912, 1.442695
    %v1927 = vpow.pop %v1926
    %v1928 = vmul.f32 %v1913, 1.442695
    %v1929 = vpow.pop %v1928
    %v1930 = vmul.f32 %v1914, 1.442695
    %v1931 = vpow.pop %v1930
    %v1932 = vmul.f32 %v1915, 1.442695
    %v1933 = vpow.pop %v1932
    %v1943 = vrot.slane %v1919, 7
    %v1944 = vsel %vm1568, %v1943, %v1917
    %v1945 = vrot.slane %v1921, 6
    %v1946 = vsel %vm1571, %v1945, %v1944
    %v1947 = vrot.slane %v1923, 5
    %v1948 = vsel %vm1574, %v1947, %v1946
    %v1949 = vrot.slane %v1925, 4
    %v1950 = vsel %vm1577, %v1949, %v1948
    %v1951 = vrot.slane %v1927, 3
    %v1952 = vsel %vm1580, %v1951, %v1950
    %v1953 = vrot.slane %v1929, 2
    %v1954 = vsel %vm1583, %v1953, %v1952
    %v1955 = vrot.slane %v1931, 1
    %v1956 = vsel %vm1586, %v1955, %v1954
    %v1959 = vsel %vm1590, %v1933, 0.0
    %v1960 = vadd.f32 %v1956, %v1959
    %v1961 = vrot.slane %v1960, 4
    %v1962 = vadd.f32 %v1960, %v1961
    %v1963 = vrot.slane %v1962, 2
    %v1964 = vadd.f32 %v1962, %v1963
    %v1965 = vrot.slane %v1964, 1
    %v1966 = vadd.f32 %v1964, %v1965
    %v1967 = vrcp.pop %v1966
    %v1968 = vmul.f32 %v1966, %v1967
    %v1969 = vsub.f32 2.0, %v1968
    %v1970 = vmul.f32 %v1967, %v1969
    %v1971 = vlaneseq
    %v1972 = vshrl.u32 %v1971, 7
    %v1973 = vsub.s32 0, %v1972
    %v1974 = vrot.slane %v1970, %v1973
    %v1975 = vmul.f32 %v1917, %v1974
    %v1976 = vmul.f32 %v1919, %v1974
    %v1977 = vmul.f32 %v1921, %v1974
    %v1978 = vmul.f32 %v1923, %v1974
    %v1979 = vmul.f32 %v1925, %v1974
    %v1980 = vmul.f32 %v1927, %v1974
    %v1981 = vmul.f32 %v1929, %v1974
    %v1982 = vmul.f32 %v1931, %v1974
    %v1983 = vmul.f32 %v1933, %v1974
    %v1984 = vadd.f32 %v1800, %v1975
    %v1985 = vadd.f32 %v1801, %v1976
    %v1986 = vadd.f32 %v1802, %v1977
    %v1987 = vadd.f32 %v1803, %v1978
    %v1988 = vadd.f32 %v1804, %v1979
    %v1989 = vadd.f32 %v1805, %v1980
    %v1990 = vadd.f32 %v1806, %v1981
    %v1991 = vadd.f32 %v1807, %v1982
    %v1992 = vadd.f32 %v1808, %v1983
    %v1993 = vmul.f32 %v265, %v690
    %v1994 = vmul.f32 %v270, %v695
    %v1995 = vmul.f32 %v410, %v690
    %v1996 = vmul.f32 %v415, %v695
    %v1997 = vmul.f32 %v555, %v690
    %v1998 = vmul.f32 %v560, %v695
    %v1999 = vmul.f32 %v700, %v690
    %v2000 = vmul.f32 %v705, %v695
    %v2001 = vmul.f32 %v845, %v690
    %v2002 = vmul.f32 %v850, %v695
    %v2003 = vmul.f32 %v988, %v690
    %v2004 = vmul.f32 %v993, %v695
    %v2005 = vmul.f32 %v1131, %v690
    %v2006 = vmul.f32 %v1136, %v695
    %v2007 = vmul.f32 %v1274, %v690
    %v2008 = vmul.f32 %v1279, %v695
    %v2009 = vmul.f32 %v1417, %v690
    %v2010 = vmul.f32 %v1422, %v695
    %v2011 = vadd.f32 %v1993, %v1994
    %v2012 = vrot.slane %v2011, 4
    %v2013 = vadd.f32 %v2011, %v2012
    %v2014 = vrot.slane %v2013, 2
    %v2015 = vadd.f32 %v2013, %v2014
    %v2016 = vrot.slane %v2015, 1
    %v2017 = vadd.f32 %v2015, %v2016
    %v2018 = vadd.f32 %v1995, %v1996
    %v2019 = vrot.slane %v2018, 4
    %v2020 = vadd.f32 %v2018, %v2019
    %v2021 = vrot.slane %v2020, 2
    %v2022 = vadd.f32 %v2020, %v2021
    %v2023 = vrot.slane %v2022, 1
    %v2024 = vadd.f32 %v2022, %v2023
    %v2025 = vadd.f32 %v1997, %v1998
    %v2026 = vrot.slane %v2025, 4
    %v2027 = vadd.f32 %v2025, %v2026
    %v2028 = vrot.slane %v2027, 2
    %v2029 = vadd.f32 %v2027, %v2028
    %v2030 = vrot.slane %v2029, 1
    %v2031 = vadd.f32 %v2029, %v2030
    %v2032 = vadd.f32 %v1999, %v2000
    %v2033 = vrot.slane %v2032, 4
    %v2034 = vadd.f32 %v2032, %v2033
    %v2035 = vrot.slane %v2034, 2
    %v2036 = vadd.f32 %v2034, %v2035
    %v2037 = vrot.slane %v2036, 1
    %v2038 = vadd.f32 %v2036, %v2037
    %v2039 = vadd.f32 %v2001, %v2002
    %v2040 = vrot.slane %v2039, 4
    %v2041 = vadd.f32 %v2039, %v2040
    %v2042 = vrot.slane %v2041, 2
    %v2043 = vadd.f32 %v2041, %v2042
    %v2044 = vrot.slane %v2043, 1
    %v2045 = vadd.f32 %v2043, %v2044
    %v2046 = vadd.f32 %v2003, %v2004
    %v2047 = vrot.slane %v2046, 4
    %v2048 = vadd.f32 %v2046, %v2047
    %v2049 = vrot.slane %v2048, 2
    %v2050 = vadd.f32 %v2048, %v2049
    %v2051 = vrot.slane %v2050, 1
    %v2052 = vadd.f32 %v2050, %v2051
    %v2053 = vadd.f32 %v2005, %v2006
    %v2054 = vrot.slane %v2053, 4
    %v2055 = vadd.f32 %v2053, %v2054
    %v2056 = vrot.slane %v2055, 2
    %v2057 = vadd.f32 %v2055, %v2056
    %v2058 = vrot.slane %v2057, 1
    %v2059 = vadd.f32 %v2057, %v2058
    %v2060 = vadd.f32 %v2007, %v2008
    %v2061 = vrot.slane %v2060, 4
    %v2062 = vadd.f32 %v2060, %v2061
    %v2063 = vrot.slane %v2062, 2
    %v2064 = vadd.f32 %v2062, %v2063
    %v2065 = vrot.slane %v2064, 1
    %v2066 = vadd.f32 %v2064, %v2065
    %v2067 = vadd.f32 %v2009, %v2010
    %v2068 = vrot.slane %v2067, 4
    %v2069 = vadd.f32 %v2067, %v2068
    %v2070 = vrot.slane %v2069, 2
    %v2071 = vadd.f32 %v2069, %v2070
    %v2072 = vrot.slane %v2071, 1
    %v2073 = vadd.f32 %v2071, %v2072
    %v2074 = vmul.f32 %v2017, 0.25
    %v2075 = vmul.f32 %v2024, 0.25
    %v2076 = vmul.f32 %v2031, 0.25
    %v2077 = vmul.f32 %v2038, 0.25
    %v2078 = vmul.f32 %v2045, 0.25
    %v2079 = vmul.f32 %v2052, 0.25
    %v2080 = vmul.f32 %v2059, 0.25
    %v2081 = vmul.f32 %v2066, 0.25
    %v2082 = vmul.f32 %v2073, 0.25
    %v2083 = vmax.f32 %v2074, %v2078
    %v2084 = vmax.f32 %v2075, %v2079
    %v2085 = vmax.f32 %v2076, %v2080
    %v2086 = vmax.f32 %v2077, %v2081
    %v2087 = vmax.f32 %v2083, %v2082
    %v2088 = vmax.f32 %v2087, %v2084
    %v2089 = vmax.f32 %v2085, %v2086
    %v2090 = vmax.f32 %v2088, %v2089
    %v2091 = vsub.f32 %v2074, %v2090
    %v2092 = vsub.f32 %v2075, %v2090
    %v2093 = vsub.f32 %v2076, %v2090
    %v2094 = vsub.f32 %v2077, %v2090
    %v2095 = vsub.f32 %v2078, %v2090
    %v2096 = vsub.f32 %v2079, %v2090
    %v2097 = vsub.f32 %v2080, %v2090
    %v2098 = vsub.f32 %v2081, %v2090
    %v2099 = vsub.f32 %v2082, %v2090
    %v2100 = vmul.f32 %v2091, 1.442695
    %v2101 = vpow.pop %v2100
    %v2102 = vmul.f32 %v2092, 1.442695
    %v2103 = vpow.pop %v2102
    %v2104 = vmul.f32 %v2093, 1.442695
    %v2105 = vpow.pop %v2104
    %v2106 = vmul.f32 %v2094, 1.442695
    %v2107 = vpow.pop %v2106
    %v2108 = vmul.f32 %v2095, 1.442695
    %v2109 = vpow.pop %v2108
    %v2110 = vmul.f32 %v2096, 1.442695
    %v2111 = vpow.pop %v2110
    %v2112 = vmul.f32 %v2097, 1.442695
    %v2113 = vpow.pop %v2112
    %v2114 = vmul.f32 %v2098, 1.442695
    %v2115 = vpow.pop %v2114
    %v2116 = vmul.f32 %v2099, 1.442695
    %v2117 = vpow.pop %v2116
    %v2127 = vrot.slane %v2103, 7
    %v2128 = vsel %vm1568, %v2127, %v2101
    %v2129 = vrot.slane %v2105, 6
    %v2130 = vsel %vm1571, %v2129, %v2128
    %v2131 = vrot.slane %v2107, 5
    %v2132 = vsel %vm1574, %v2131, %v2130
    %v2133 = vrot.slane %v2109, 4
    %v2134 = vsel %vm1577, %v2133, %v2132
    %v2135 = vrot.slane %v2111, 3
    %v2136 = vsel %vm1580, %v2135, %v2134
    %v2137 = vrot.slane %v2113, 2
    %v2138 = vsel %vm1583, %v2137, %v2136
    %v2139 = vrot.slane %v2115, 1
    %v2140 = vsel %vm1586, %v2139, %v2138
    %v2143 = vsel %vm1590, %v2117, 0.0
    %v2144 = vadd.f32 %v2140, %v2143
    %v2145 = vrot.slane %v2144, 4
    %v2146 = vadd.f32 %v2144, %v2145
    %v2147 = vrot.slane %v2146, 2
    %v2148 = vadd.f32 %v2146, %v2147
    %v2149 = vrot.slane %v2148, 1
    %v2150 = vadd.f32 %v2148, %v2149
    %v2151 = vrcp.pop %v2150
    %v2152 = vmul.f32 %v2150, %v2151
    %v2153 = vsub.f32 2.0, %v2152
    %v2154 = vmul.f32 %v2151, %v2153
    %v2155 = vlaneseq
    %v2156 = vshrl.u32 %v2155, 7
    %v2157 = vsub.s32 0, %v2156
    %v2158 = vrot.slane %v2154, %v2157
    %v2159 = vmul.f32 %v2101, %v2158
    %v2160 = vmul.f32 %v2103, %v2158
    %v2161 = vmul.f32 %v2105, %v2158
    %v2162 = vmul.f32 %v2107, %v2158
    %v2163 = vmul.f32 %v2109, %v2158
    %v2164 = vmul.f32 %v2111, %v2158
    %v2165 = vmul.f32 %v2113, %v2158
    %v2166 = vmul.f32 %v2115, %v2158
    %v2167 = vmul.f32 %v2117, %v2158
    %v2168 = vadd.f32 %v1984, %v2159
    %v2169 = vadd.f32 %v1985, %v2160
    %v2170 = vadd.f32 %v1986, %v2161
    %v2171 = vadd.f32 %v1987, %v2162
    %v2172 = vadd.f32 %v1988, %v2163
    %v2173 = vadd.f32 %v1989, %v2164
    %v2174 = vadd.f32 %v1990, %v2165
    %v2175 = vadd.f32 %v1991, %v2166
    %v2176 = vadd.f32 %v1992, %v2167
    %v2177 = vmul.f32 %v265, %v835
    %v2178 = vmul.f32 %v270, %v840
    %v2179 = vmul.f32 %v410, %v835
    %v2180 = vmul.f32 %v415, %v840
    %v2181 = vmul.f32 %v555, %v835
    %v2182 = vmul.f32 %v560, %v840
    %v2183 = vmul.f32 %v700, %v835
    %v2184 = vmul.f32 %v705, %v840
    %v2185 = vmul.f32 %v845, %v835
    %v2186 = vmul.f32 %v850, %v840
    %v2187 = vmul.f32 %v988, %v835
    %v2188 = vmul.f32 %v993, %v840
    %v2189 = vmul.f32 %v1131, %v835
    %v2190 = vmul.f32 %v1136, %v840
    %v2191 = vmul.f32 %v1274, %v835
    %v2192 = vmul.f32 %v1279, %v840
    %v2193 = vmul.f32 %v1417, %v835
    %v2194 = vmul.f32 %v1422, %v840
    %v2195 = vadd.f32 %v2177, %v2178
    %v2196 = vrot.slane %v2195, 4
    %v2197 = vadd.f32 %v2195, %v2196
    %v2198 = vrot.slane %v2197, 2
    %v2199 = vadd.f32 %v2197, %v2198
    %v2200 = vrot.slane %v2199, 1
    %v2201 = vadd.f32 %v2199, %v2200
    %v2202 = vadd.f32 %v2179, %v2180
    %v2203 = vrot.slane %v2202, 4
    %v2204 = vadd.f32 %v2202, %v2203
    %v2205 = vrot.slane %v2204, 2
    %v2206 = vadd.f32 %v2204, %v2205
    %v2207 = vrot.slane %v2206, 1
    %v2208 = vadd.f32 %v2206, %v2207
    %v2209 = vadd.f32 %v2181, %v2182
    %v2210 = vrot.slane %v2209, 4
    %v2211 = vadd.f32 %v2209, %v2210
    %v2212 = vrot.slane %v2211, 2
    %v2213 = vadd.f32 %v2211, %v2212
    %v2214 = vrot.slane %v2213, 1
    %v2215 = vadd.f32 %v2213, %v2214
    %v2216 = vadd.f32 %v2183, %v2184
    %v2217 = vrot.slane %v2216, 4
    %v2218 = vadd.f32 %v2216, %v2217
    %v2219 = vrot.slane %v2218, 2
    %v2220 = vadd.f32 %v2218, %v2219
    %v2221 = vrot.slane %v2220, 1
    %v2222 = vadd.f32 %v2220, %v2221
    %v2223 = vadd.f32 %v2185, %v2186
    %v2224 = vrot.slane %v2223, 4
    %v2225 = vadd.f32 %v2223, %v2224
    %v2226 = vrot.slane %v2225, 2
    %v2227 = vadd.f32 %v2225, %v2226
    %v2228 = vrot.slane %v2227, 1
    %v2229 = vadd.f32 %v2227, %v2228
    %v2230 = vadd.f32 %v2187, %v2188
    %v2231 = vrot.slane %v2230, 4
    %v2232 = vadd.f32 %v2230, %v2231
    %v2233 = vrot.slane %v2232, 2
    %v2234 = vadd.f32 %v2232, %v2233
    %v2235 = vrot.slane %v2234, 1
    %v2236 = vadd.f32 %v2234, %v2235
    %v2237 = vadd.f32 %v2189, %v2190
    %v2238 = vrot.slane %v2237, 4
    %v2239 = vadd.f32 %v2237, %v2238
    %v2240 = vrot.slane %v2239, 2
    %v2241 = vadd.f32 %v2239, %v2240
    %v2242 = vrot.slane %v2241, 1
    %v2243 = vadd.f32 %v2241, %v2242
    %v2244 = vadd.f32 %v2191, %v2192
    %v2245 = vrot.slane %v2244, 4
    %v2246 = vadd.f32 %v2244, %v2245
    %v2247 = vrot.slane %v2246, 2
    %v2248 = vadd.f32 %v2246, %v2247
    %v2249 = vrot.slane %v2248, 1
    %v2250 = vadd.f32 %v2248, %v2249
    %v2251 = vadd.f32 %v2193, %v2194
    %v2252 = vrot.slane %v2251, 4
    %v2253 = vadd.f32 %v2251, %v2252
    %v2254 = vrot.slane %v2253, 2
    %v2255 = vadd.f32 %v2253, %v2254
    %v2256 = vrot.slane %v2255, 1
    %v2257 = vadd.f32 %v2255, %v2256
    %v2258 = vmul.f32 %v2201, 0.25
    %v2259 = vmul.f32 %v2208, 0.25
    %v2260 = vmul.f32 %v2215, 0.25
    %v2261 = vmul.f32 %v2222, 0.25
    %v2262 = vmul.f32 %v2229, 0.25
    %v2263 = vmul.f32 %v2236, 0.25
    %v2264 = vmul.f32 %v2243, 0.25
    %v2265 = vmul.f32 %v2250, 0.25
    %v2266 = vmul.f32 %v2257, 0.25
    %v2267 = vmax.f32 %v2258, %v2262
    %v2268 = vmax.f32 %v2259, %v2263
    %v2269 = vmax.f32 %v2260, %v2264
    %v2270 = vmax.f32 %v2261, %v2265
    %v2271 = vmax.f32 %v2267, %v2266
    %v2272 = vmax.f32 %v2271, %v2268
    %v2273 = vmax.f32 %v2269, %v2270
    %v2274 = vmax.f32 %v2272, %v2273
    %v2275 = vsub.f32 %v2258, %v2274
    %v2276 = vsub.f32 %v2259, %v2274
    %v2277 = vsub.f32 %v2260, %v2274
    %v2278 = vsub.f32 %v2261, %v2274
    %v2279 = vsub.f32 %v2262, %v2274
    %v2280 = vsub.f32 %v2263, %v2274
    %v2281 = vsub.f32 %v2264, %v2274
    %v2282 = vsub.f32 %v2265, %v2274
    %v2283 = vsub.f32 %v2266, %v2274
    %v2284 = vmul.f32 %v2275, 1.442695
    %v2285 = vpow.pop %v2284
    %v2286 = vmul.f32 %v2276, 1.442695
    %v2287 = vpow.pop %v2286
    %v2288 = vmul.f32 %v2277, 1.442695
    %v2289 = vpow.pop %v2288
    %v2290 = vmul.f32 %v2278, 1.442695
    %v2291 = vpow.pop %v2290
    %v2292 = vmul.f32 %v2279, 1.442695
    %v2293 = vpow.pop %v2292
    %v2294 = vmul.f32 %v2280, 1.442695
    %v2295 = vpow.pop %v2294
    %v2296 = vmul.f32 %v2281, 1.442695
    %v2297 = vpow.pop %v2296
    %v2298 = vmul.f32 %v2282, 1.442695
    %v2299 = vpow.pop %v2298
    %v2300 = vmul.f32 %v2283, 1.442695
    %v2301 = vpow.pop %v2300
    %v2311 = vrot.slane %v2287, 7
    %v2312 = vsel %vm1568, %v2311, %v2285
    %v2313 = vrot.slane %v2289, 6
    %v2314 = vsel %vm1571, %v2313, %v2312
    %v2315 = vrot.slane %v2291, 5
    %v2316 = vsel %vm1574, %v2315, %v2314
    %v2317 = vrot.slane %v2293, 4
    %v2318 = vsel %vm1577, %v2317, %v2316
    %v2319 = vrot.slane %v2295, 3
    %v2320 = vsel %vm1580, %v2319, %v2318
    %v2321 = vrot.slane %v2297, 2
    %v2322 = vsel %vm1583, %v2321, %v2320
    %v2323 = vrot.slane %v2299, 1
    %v2324 = vsel %vm1586, %v2323, %v2322
    %v2327 = vsel %vm1590, %v2301, 0.0
    %v2328 = vadd.f32 %v2324, %v2327
    %v2329 = vrot.slane %v2328, 4
    %v2330 = vadd.f32 %v2328, %v2329
    %v2331 = vrot.slane %v2330, 2
    %v2332 = vadd.f32 %v2330, %v2331
    %v2333 = vrot.slane %v2332, 1
    %v2334 = vadd.f32 %v2332, %v2333
    %v2335 = vrcp.pop %v2334
    %v2336 = vmul.f32 %v2334, %v2335
    %v2337 = vsub.f32 2.0, %v2336
    %v2338 = vmul.f32 %v2335, %v2337
    %v2339 = vlaneseq
    %v2340 = vshrl.u32 %v2339, 7
    %v2341 = vsub.s32 0, %v2340
    %v2342 = vrot.slane %v2338, %v2341
    %v2343 = vmul.f32 %v2285, %v2342
    %v2344 = vmul.f32 %v2287, %v2342
    %v2345 = vmul.f32 %v2289, %v2342
    %v2346 = vmul.f32 %v2291, %v2342
    %v2347 = vmul.f32 %v2293, %v2342
    %v2348 = vmul.f32 %v2295, %v2342
    %v2349 = vmul.f32 %v2297, %v2342
    %v2350 = vmul.f32 %v2299, %v2342
    %v2351 = vmul.f32 %v2301, %v2342
    %v2352 = vadd.f32 %v2168, %v2343
    %v2353 = vadd.f32 %v2169, %v2344
    %v2354 = vadd.f32 %v2170, %v2345
    %v2355 = vadd.f32 %v2171, %v2346
    %v2356 = vadd.f32 %v2172, %v2347
    %v2357 = vadd.f32 %v2173, %v2348
    %v2358 = vadd.f32 %v2174, %v2349
    %v2359 = vadd.f32 %v2175, %v2350
    %v2360 = vadd.f32 %v2176, %v2351
    %v2361 = vmul.f32 %v265, %v978
    %v2362 = vmul.f32 %v270, %v983
    %v2363 = vmul.f32 %v410, %v978
    %v2364 = vmul.f32 %v415, %v983
    %v2365 = vmul.f32 %v555, %v978
    %v2366 = vmul.f32 %v560, %v983
    %v2367 = vmul.f32 %v700, %v978
    %v2368 = vmul.f32 %v705, %v983
    %v2369 = vmul.f32 %v845, %v978
    %v2370 = vmul.f32 %v850, %v983
    %v2371 = vmul.f32 %v988, %v978
    %v2372 = vmul.f32 %v993, %v983
    %v2373 = vmul.f32 %v1131, %v978
    %v2374 = vmul.f32 %v1136, %v983
    %v2375 = vmul.f32 %v1274, %v978
    %v2376 = vmul.f32 %v1279, %v983
    %v2377 = vmul.f32 %v1417, %v978
    %v2378 = vmul.f32 %v1422, %v983
    %v2379 = vadd.f32 %v2361, %v2362
    %v2380 = vrot.slane %v2379, 4
    %v2381 = vadd.f32 %v2379, %v2380
    %v2382 = vrot.slane %v2381, 2
    %v2383 = vadd.f32 %v2381, %v2382
    %v2384 = vrot.slane %v2383, 1
    %v2385 = vadd.f32 %v2383, %v2384
    %v2386 = vadd.f32 %v2363, %v2364
    %v2387 = vrot.slane %v2386, 4
    %v2388 = vadd.f32 %v2386, %v2387
    %v2389 = vrot.slane %v2388, 2
    %v2390 = vadd.f32 %v2388, %v2389
    %v2391 = vrot.slane %v2390, 1
    %v2392 = vadd.f32 %v2390, %v2391
    %v2393 = vadd.f32 %v2365, %v2366
    %v2394 = vrot.slane %v2393, 4
    %v2395 = vadd.f32 %v2393, %v2394
    %v2396 = vrot.slane %v2395, 2
    %v2397 = vadd.f32 %v2395, %v2396
    %v2398 = vrot.slane %v2397, 1
    %v2399 = vadd.f32 %v2397, %v2398
    %v2400 = vadd.f32 %v2367, %v2368
    %v2401 = vrot.slane %v2400, 4
    %v2402 = vadd.f32 %v2400, %v2401
    %v2403 = vrot.slane %v2402, 2
    %v2404 = vadd.f32 %v2402, %v2403
    %v2405 = vrot.slane %v2404, 1
    %v2406 = vadd.f32 %v2404, %v2405
    %v2407 = vadd.f32 %v2369, %v2370
    %v2408 = vrot.slane %v2407, 4
    %v2409 = vadd.f32 %v2407, %v2408
    %v2410 = vrot.slane %v2409, 2
    %v2411 = vadd.f32 %v2409, %v2410
    %v2412 = vrot.slane %v2411, 1
    %v2413 = vadd.f32 %v2411, %v2412
    %v2414 = vadd.f32 %v2371, %v2372
    %v2415 = vrot.slane %v2414, 4
    %v2416 = vadd.f32 %v2414, %v2415
    %v2417 = vrot.slane %v2416, 2
    %v2418 = vadd.f32 %v2416, %v2417
    %v2419 = vrot.slane %v2418, 1
    %v2420 = vadd.f32 %v2418, %v2419
    %v2421 = vadd.f32 %v2373, %v2374
    %v2422 = vrot.slane %v2421, 4
    %v2423 = vadd.f32 %v2421, %v2422
    %v2424 = vrot.slane %v2423, 2
    %v2425 = vadd.f32 %v2423, %v2424
    %v2426 = vrot.slane %v2425, 1
    %v2427 = vadd.f32 %v2425, %v2426
    %v2428 = vadd.f32 %v2375, %v2376
    %v2429 = vrot.slane %v2428, 4
    %v2430 = vadd.f32 %v2428, %v2429
    %v2431 = vrot.slane %v2430, 2
    %v2432 = vadd.f32 %v2430, %v2431
    %v2433 = vrot.slane %v2432, 1
    %v2434 = vadd.f32 %v2432, %v2433
    %v2435 = vadd.f32 %v2377, %v2378
    %v2436 = vrot.slane %v2435, 4
    %v2437 = vadd.f32 %v2435, %v2436
    %v2438 = vrot.slane %v2437, 2
    %v2439 = vadd.f32 %v2437, %v2438
    %v2440 = vrot.slane %v2439, 1
    %v2441 = vadd.f32 %v2439, %v2440
    %v2442 = vmul.f32 %v2385, 0.25
    %v2443 = vmul.f32 %v2392, 0.25
    %v2444 = vmul.f32 %v2399, 0.25
    %v2445 = vmul.f32 %v2406, 0.25
    %v2446 = vmul.f32 %v2413, 0.25
    %v2447 = vmul.f32 %v2420, 0.25
    %v2448 = vmul.f32 %v2427, 0.25
    %v2449 = vmul.f32 %v2434, 0.25
    %v2450 = vmul.f32 %v2441, 0.25
    %v2451 = vmax.f32 %v2442, %v2446
    %v2452 = vmax.f32 %v2443, %v2447
    %v2453 = vmax.f32 %v2444, %v2448
    %v2454 = vmax.f32 %v2445, %v2449
    %v2455 = vmax.f32 %v2451, %v2450
    %v2456 = vmax.f32 %v2455, %v2452
    %v2457 = vmax.f32 %v2453, %v2454
    %v2458 = vmax.f32 %v2456, %v2457
    %v2459 = vsub.f32 %v2442, %v2458
    %v2460 = vsub.f32 %v2443, %v2458
    %v2461 = vsub.f32 %v2444, %v2458
    %v2462 = vsub.f32 %v2445, %v2458
    %v2463 = vsub.f32 %v2446, %v2458
    %v2464 = vsub.f32 %v2447, %v2458
    %v2465 = vsub.f32 %v2448, %v2458
    %v2466 = vsub.f32 %v2449, %v2458
    %v2467 = vsub.f32 %v2450, %v2458
    %v2468 = vmul.f32 %v2459, 1.442695
    %v2469 = vpow.pop %v2468
    %v2470 = vmul.f32 %v2460, 1.442695
    %v2471 = vpow.pop %v2470
    %v2472 = vmul.f32 %v2461, 1.442695
    %v2473 = vpow.pop %v2472
    %v2474 = vmul.f32 %v2462, 1.442695
    %v2475 = vpow.pop %v2474
    %v2476 = vmul.f32 %v2463, 1.442695
    %v2477 = vpow.pop %v2476
    %v2478 = vmul.f32 %v2464, 1.442695
    %v2479 = vpow.pop %v2478
    %v2480 = vmul.f32 %v2465, 1.442695
    %v2481 = vpow.pop %v2480
    %v2482 = vmul.f32 %v2466, 1.442695
    %v2483 = vpow.pop %v2482
    %v2484 = vmul.f32 %v2467, 1.442695
    %v2485 = vpow.pop %v2484
    %v2495 = vrot.slane %v2471, 7
    %v2496 = vsel %vm1568, %v2495, %v2469
    %v2497 = vrot.slane %v2473, 6
    %v2498 = vsel %vm1571, %v2497, %v2496
    %v2499 = vrot.slane %v2475, 5
    %v2500 = vsel %vm1574, %v2499, %v2498
    %v2501 = vrot.slane %v2477, 4
    %v2502 = vsel %vm1577, %v2501, %v2500
    %v2503 = vrot.slane %v2479, 3
    %v2504 = vsel %vm1580, %v2503, %v2502
    %v2505 = vrot.slane %v2481, 2
    %v2506 = vsel %vm1583, %v2505, %v2504
    %v2507 = vrot.slane %v2483, 1
    %v2508 = vsel %vm1586, %v2507, %v2506
    %v2511 = vsel %vm1590, %v2485, 0.0
    %v2512 = vadd.f32 %v2508, %v2511
    %v2513 = vrot.slane %v2512, 4
    %v2514 = vadd.f32 %v2512, %v2513
    %v2515 = vrot.slane %v2514, 2
    %v2516 = vadd.f32 %v2514, %v2515
    %v2517 = vrot.slane %v2516, 1
    %v2518 = vadd.f32 %v2516, %v2517
    %v2519 = vrcp.pop %v2518
    %v2520 = vmul.f32 %v2518, %v2519
    %v2521 = vsub.f32 2.0, %v2520
    %v2522 = vmul.f32 %v2519, %v2521
    %v2523 = vlaneseq
    %v2524 = vshrl.u32 %v2523, 7
    %v2525 = vsub.s32 0, %v2524
    %v2526 = vrot.slane %v2522, %v2525
    %v2527 = vmul.f32 %v2469, %v2526
    %v2528 = vmul.f32 %v2471, %v2526
    %v2529 = vmul.f32 %v2473, %v2526
    %v2530 = vmul.f32 %v2475, %v2526
    %v2531 = vmul.f32 %v2477, %v2526
    %v2532 = vmul.f32 %v2479, %v2526
    %v2533 = vmul.f32 %v2481, %v2526
    %v2534 = vmul.f32 %v2483, %v2526
    %v2535 = vmul.f32 %v2485, %v2526
    %v2536 = vadd.f32 %v2352, %v2527
    %v2537 = vadd.f32 %v2353, %v2528
    %v2538 = vadd.f32 %v2354, %v2529
    %v2539 = vadd.f32 %v2355, %v2530
    %v2540 = vadd.f32 %v2356, %v2531
    %v2541 = vadd.f32 %v2357, %v2532
    %v2542 = vadd.f32 %v2358, %v2533
    %v2543 = vadd.f32 %v2359, %v2534
    %v2544 = vadd.f32 %v2360, %v2535
    %v2545 = vmul.f32 %v265, %v1121
    %v2546 = vmul.f32 %v270, %v1126
    %v2547 = vmul.f32 %v410, %v1121
    %v2548 = vmul.f32 %v415, %v1126
    %v2549 = vmul.f32 %v555, %v1121
    %v2550 = vmul.f32 %v560, %v1126
    %v2551 = vmul.f32 %v700, %v1121
    %v2552 = vmul.f32 %v705, %v1126
    %v2553 = vmul.f32 %v845, %v1121
    %v2554 = vmul.f32 %v850, %v1126
    %v2555 = vmul.f32 %v988, %v1121
    %v2556 = vmul.f32 %v993, %v1126
    %v2557 = vmul.f32 %v1131, %v1121
    %v2558 = vmul.f32 %v1136, %v1126
    %v2559 = vmul.f32 %v1274, %v1121
    %v2560 = vmul.f32 %v1279, %v1126
    %v2561 = vmul.f32 %v1417, %v1121
    %v2562 = vmul.f32 %v1422, %v1126
    %v2563 = vadd.f32 %v2545, %v2546
    %v2564 = vrot.slane %v2563, 4
    %v2565 = vadd.f32 %v2563, %v2564
    %v2566 = vrot.slane %v2565, 2
    %v2567 = vadd.f32 %v2565, %v2566
    %v2568 = vrot.slane %v2567, 1
    %v2569 = vadd.f32 %v2567, %v2568
    %v2570 = vadd.f32 %v2547, %v2548
    %v2571 = vrot.slane %v2570, 4
    %v2572 = vadd.f32 %v2570, %v2571
    %v2573 = vrot.slane %v2572, 2
    %v2574 = vadd.f32 %v2572, %v2573
    %v2575 = vrot.slane %v2574, 1
    %v2576 = vadd.f32 %v2574, %v2575
    %v2577 = vadd.f32 %v2549, %v2550
    %v2578 = vrot.slane %v2577, 4
    %v2579 = vadd.f32 %v2577, %v2578
    %v2580 = vrot.slane %v2579, 2
    %v2581 = vadd.f32 %v2579, %v2580
    %v2582 = vrot.slane %v2581, 1
    %v2583 = vadd.f32 %v2581, %v2582
    %v2584 = vadd.f32 %v2551, %v2552
    %v2585 = vrot.slane %v2584, 4
    %v2586 = vadd.f32 %v2584, %v2585
    %v2587 = vrot.slane %v2586, 2
    %v2588 = vadd.f32 %v2586, %v2587
    %v2589 = vrot.slane %v2588, 1
    %v2590 = vadd.f32 %v2588, %v2589
    %v2591 = vadd.f32 %v2553, %v2554
    %v2592 = vrot.slane %v2591, 4
    %v2593 = vadd.f32 %v2591, %v2592
    %v2594 = vrot.slane %v2593, 2
    %v2595 = vadd.f32 %v2593, %v2594
    %v2596 = vrot.slane %v2595, 1
    %v2597 = vadd.f32 %v2595, %v2596
    %v2598 = vadd.f32 %v2555, %v2556
    %v2599 = vrot.slane %v2598, 4
    %v2600 = vadd.f32 %v2598, %v2599
    %v2601 = vrot.slane %v2600, 2
    %v2602 = vadd.f32 %v2600, %v2601
    %v2603 = vrot.slane %v2602, 1
    %v2604 = vadd.f32 %v2602, %v2603
    %v2605 = vadd.f32 %v2557, %v2558
    %v2606 = vrot.slane %v2605, 4
    %v2607 = vadd.f32 %v2605, %v2606
    %v2608 = vrot.slane %v2607, 2
    %v2609 = vadd.f32 %v2607, %v2608
    %v2610 = vrot.slane %v2609, 1
    %v2611 = vadd.f32 %v2609, %v2610
    %v2612 = vadd.f32 %v2559, %v2560
    %v2613 = vrot.slane %v2612, 4
    %v2614 = vadd.f32 %v2612, %v2613
    %v2615 = vrot.slane %v2614, 2
    %v2616 = vadd.f32 %v2614, %v2615
    %v2617 = vrot.slane %v2616, 1
    %v2618 = vadd.f32 %v2616, %v2617
    %v2619 = vadd.f32 %v2561, %v2562
    %v2620 = vrot.slane %v2619, 4
    %v2621 = vadd.f32 %v2619, %v2620
    %v2622 = vrot.slane %v2621, 2
    %v2623 = vadd.f32 %v2621, %v2622
    %v2624 = vrot.slane %v2623, 1
    %v2625 = vadd.f32 %v2623, %v2624
    %v2626 = vmul.f32 %v2569, 0.25
    %v2627 = vmul.f32 %v2576, 0.25
    %v2628 = vmul.f32 %v2583, 0.25
    %v2629 = vmul.f32 %v2590, 0.25
    %v2630 = vmul.f32 %v2597, 0.25
    %v2631 = vmul.f32 %v2604, 0.25
    %v2632 = vmul.f32 %v2611, 0.25
    %v2633 = vmul.f32 %v2618, 0.25
    %v2634 = vmul.f32 %v2625, 0.25
    %v2635 = vmax.f32 %v2626, %v2630
    %v2636 = vmax.f32 %v2627, %v2631
    %v2637 = vmax.f32 %v2628, %v2632
    %v2638 = vmax.f32 %v2629, %v2633
    %v2639 = vmax.f32 %v2635, %v2634
    %v2640 = vmax.f32 %v2639, %v2636
    %v2641 = vmax.f32 %v2637, %v2638
    %v2642 = vmax.f32 %v2640, %v2641
    %v2643 = vsub.f32 %v2626, %v2642
    %v2644 = vsub.f32 %v2627, %v2642
    %v2645 = vsub.f32 %v2628, %v2642
    %v2646 = vsub.f32 %v2629, %v2642
    %v2647 = vsub.f32 %v2630, %v2642
    %v2648 = vsub.f32 %v2631, %v2642
    %v2649 = vsub.f32 %v2632, %v2642
    %v2650 = vsub.f32 %v2633, %v2642
    %v2651 = vsub.f32 %v2634, %v2642
    %v2652 = vmul.f32 %v2643, 1.442695
    %v2653 = vpow.pop %v2652
    %v2654 = vmul.f32 %v2644, 1.442695
    %v2655 = vpow.pop %v2654
    %v2656 = vmul.f32 %v2645, 1.442695
    %v2657 = vpow.pop %v2656
    %v2658 = vmul.f32 %v2646, 1.442695
    %v2659 = vpow.pop %v2658
    %v2660 = vmul.f32 %v2647, 1.442695
    %v2661 = vpow.pop %v2660
    %v2662 = vmul.f32 %v2648, 1.442695
    %v2663 = vpow.pop %v2662
    %v2664 = vmul.f32 %v2649, 1.442695
    %v2665 = vpow.pop %v2664
    %v2666 = vmul.f32 %v2650, 1.442695
    %v2667 = vpow.pop %v2666
    %v2668 = vmul.f32 %v2651, 1.442695
    %v2669 = vpow.pop %v2668
    %v2679 = vrot.slane %v2655, 7
    %v2680 = vsel %vm1568, %v2679, %v2653
    %v2681 = vrot.slane %v2657, 6
    %v2682 = vsel %vm1571, %v2681, %v2680
    %v2683 = vrot.slane %v2659, 5
    %v2684 = vsel %vm1574, %v2683, %v2682
    %v2685 = vrot.slane %v2661, 4
    %v2686 = vsel %vm1577, %v2685, %v2684
    %v2687 = vrot.slane %v2663, 3
    %v2688 = vsel %vm1580, %v2687, %v2686
    %v2689 = vrot.slane %v2665, 2
    %v2690 = vsel %vm1583, %v2689, %v2688
    %v2691 = vrot.slane %v2667, 1
    %v2692 = vsel %vm1586, %v2691, %v2690
    %v2695 = vsel %vm1590, %v2669, 0.0
    %v2696 = vadd.f32 %v2692, %v2695
    %v2697 = vrot.slane %v2696, 4
    %v2698 = vadd.f32 %v2696, %v2697
    %v2699 = vrot.slane %v2698, 2
    %v2700 = vadd.f32 %v2698, %v2699
    %v2701 = vrot.slane %v2700, 1
    %v2702 = vadd.f32 %v2700, %v2701
    %v2703 = vrcp.pop %v2702
    %v2704 = vmul.f32 %v2702, %v2703
    %v2705 = vsub.f32 2.0, %v2704
    %v2706 = vmul.f32 %v2703, %v2705
    %v2707 = vlaneseq
    %v2708 = vshrl.u32 %v2707, 7
    %v2709 = vsub.s32 0, %v2708
    %v2710 = vrot.slane %v2706, %v2709
    %v2711 = vmul.f32 %v2653, %v2710
    %v2712 = vmul.f32 %v2655, %v2710
    %v2713 = vmul.f32 %v2657, %v2710
    %v2714 = vmul.f32 %v2659, %v2710
    %v2715 = vmul.f32 %v2661, %v2710
    %v2716 = vmul.f32 %v2663, %v2710
    %v2717 = vmul.f32 %v2665, %v2710
    %v2718 = vmul.f32 %v2667, %v2710
    %v2719 = vmul.f32 %v2669, %v2710
    %v2720 = vadd.f32 %v2536, %v2711
    %v2721 = vadd.f32 %v2537, %v2712
    %v2722 = vadd.f32 %v2538, %v2713
    %v2723 = vadd.f32 %v2539, %v2714
    %v2724 = vadd.f32 %v2540, %v2715
    %v2725 = vadd.f32 %v2541, %v2716
    %v2726 = vadd.f32 %v2542, %v2717
    %v2727 = vadd.f32 %v2543, %v2718
    %v2728 = vadd.f32 %v2544, %v2719
    %v2729 = vmul.f32 %v265, %v1264
    %v2730 = vmul.f32 %v270, %v1269
    %v2731 = vmul.f32 %v410, %v1264
    %v2732 = vmul.f32 %v415, %v1269
    %v2733 = vmul.f32 %v555, %v1264
    %v2734 = vmul.f32 %v560, %v1269
    %v2735 = vmul.f32 %v700, %v1264
    %v2736 = vmul.f32 %v705, %v1269
    %v2737 = vmul.f32 %v845, %v1264
    %v2738 = vmul.f32 %v850, %v1269
    %v2739 = vmul.f32 %v988, %v1264
    %v2740 = vmul.f32 %v993, %v1269
    %v2741 = vmul.f32 %v1131, %v1264
    %v2742 = vmul.f32 %v1136, %v1269
    %v2743 = vmul.f32 %v1274, %v1264
    %v2744 = vmul.f32 %v1279, %v1269
    %v2745 = vmul.f32 %v1417, %v1264
    %v2746 = vmul.f32 %v1422, %v1269
    %v2747 = vadd.f32 %v2729, %v2730
    %v2748 = vrot.slane %v2747, 4
    %v2749 = vadd.f32 %v2747, %v2748
    %v2750 = vrot.slane %v2749, 2
    %v2751 = vadd.f32 %v2749, %v2750
    %v2752 = vrot.slane %v2751, 1
    %v2753 = vadd.f32 %v2751, %v2752
    %v2754 = vadd.f32 %v2731, %v2732
    %v2755 = vrot.slane %v2754, 4
    %v2756 = vadd.f32 %v2754, %v2755
    %v2757 = vrot.slane %v2756, 2
    %v2758 = vadd.f32 %v2756, %v2757
    %v2759 = vrot.slane %v2758, 1
    %v2760 = vadd.f32 %v2758, %v2759
    %v2761 = vadd.f32 %v2733, %v2734
    %v2762 = vrot.slane %v2761, 4
    %v2763 = vadd.f32 %v2761, %v2762
    %v2764 = vrot.slane %v2763, 2
    %v2765 = vadd.f32 %v2763, %v2764
    %v2766 = vrot.slane %v2765, 1
    %v2767 = vadd.f32 %v2765, %v2766
    %v2768 = vadd.f32 %v2735, %v2736
    %v2769 = vrot.slane %v2768, 4
    %v2770 = vadd.f32 %v2768, %v2769
    %v2771 = vrot.slane %v2770, 2
    %v2772 = vadd.f32 %v2770, %v2771
    %v2773 = vrot.slane %v2772, 1
    %v2774 = vadd.f32 %v2772, %v2773
    %v2775 = vadd.f32 %v2737, %v2738
    %v2776 = vrot.slane %v2775, 4
    %v2777 = vadd.f32 %v2775, %v2776
    %v2778 = vrot.slane %v2777, 2
    %v2779 = vadd.f32 %v2777, %v2778
    %v2780 = vrot.slane %v2779, 1
    %v2781 = vadd.f32 %v2779, %v2780
    %v2782 = vadd.f32 %v2739, %v2740
    %v2783 = vrot.slane %v2782, 4
    %v2784 = vadd.f32 %v2782, %v2783
    %v2785 = vrot.slane %v2784, 2
    %v2786 = vadd.f32 %v2784, %v2785
    %v2787 = vrot.slane %v2786, 1
    %v2788 = vadd.f32 %v2786, %v2787
    %v2789 = vadd.f32 %v2741, %v2742
    %v2790 = vrot.slane %v2789, 4
    %v2791 = vadd.f32 %v2789, %v2790
    %v2792 = vrot.slane %v2791, 2
    %v2793 = vadd.f32 %v2791, %v2792
    %v2794 = vrot.slane %v2793, 1
    %v2795 = vadd.f32 %v2793, %v2794
    %v2796 = vadd.f32 %v2743, %v2744
    %v2797 = vrot.slane %v2796, 4
    %v2798 = vadd.f32 %v2796, %v2797
    %v2799 = vrot.slane %v2798, 2
    %v2800 = vadd.f32 %v2798, %v2799
    %v2801 = vrot.slane %v2800, 1
    %v2802 = vadd.f32 %v2800, %v2801
    %v2803 = vadd.f32 %v2745, %v2746
    %v2804 = vrot.slane %v2803, 4
    %v2805 = vadd.f32 %v2803, %v2804
    %v2806 = vrot.slane %v2805, 2
    %v2807 = vadd.f32 %v2805, %v2806
    %v2808 = vrot.slane %v2807, 1
    %v2809 = vadd.f32 %v2807, %v2808
    %v2810 = vmul.f32 %v2753, 0.25
    %v2811 = vmul.f32 %v2760, 0.25
    %v2812 = vmul.f32 %v2767, 0.25
    %v2813 = vmul.f32 %v2774, 0.25
    %v2814 = vmul.f32 %v2781, 0.25
    %v2815 = vmul.f32 %v2788, 0.25
    %v2816 = vmul.f32 %v2795, 0.25
    %v2817 = vmul.f32 %v2802, 0.25
    %v2818 = vmul.f32 %v2809, 0.25
    %v2819 = vmax.f32 %v2810, %v2814
    %v2820 = vmax.f32 %v2811, %v2815
    %v2821 = vmax.f32 %v2812, %v2816
    %v2822 = vmax.f32 %v2813, %v2817
    %v2823 = vmax.f32 %v2819, %v2818
    %v2824 = vmax.f32 %v2823, %v2820
    %v2825 = vmax.f32 %v2821, %v2822
    %v2826 = vmax.f32 %v2824, %v2825
    %v2827 = vsub.f32 %v2810, %v2826
    %v2828 = vsub.f32 %v2811, %v2826
    %v2829 = vsub.f32 %v2812, %v2826
    %v2830 = vsub.f32 %v2813, %v2826
    %v2831 = vsub.f32 %v2814, %v2826
    %v2832 = vsub.f32 %v2815, %v2826
    %v2833 = vsub.f32 %v2816, %v2826
    %v2834 = vsub.f32 %v2817, %v2826
    %v2835 = vsub.f32 %v2818, %v2826
    %v2836 = vmul.f32 %v2827, 1.442695
    %v2837 = vpow.pop %v2836
    %v2838 = vmul.f32 %v2828, 1.442695
    %v2839 = vpow.pop %v2838
    %v2840 = vmul.f32 %v2829, 1.442695
    %v2841 = vpow.pop %v2840
    %v2842 = vmul.f32 %v2830, 1.442695
    %v2843 = vpow.pop %v2842
    %v2844 = vmul.f32 %v2831, 1.442695
    %v2845 = vpow.pop %v2844
    %v2846 = vmul.f32 %v2832, 1.442695
    %v2847 = vpow.pop %v2846
    %v2848 = vmul.f32 %v2833, 1.442695
    %v2849 = vpow.pop %v2848
    %v2850 = vmul.f32 %v2834, 1.442695
    %v2851 = vpow.pop %v2850
    %v2852 = vmul.f32 %v2835, 1.442695
    %v2853 = vpow.pop %v2852
    %v2863 = vrot.slane %v2839, 7
    %v2864 = vsel %vm1568, %v2863, %v2837
    %v2865 = vrot.slane %v2841, 6
    %v2866 = vsel %vm1571, %v2865, %v2864
    %v2867 = vrot.slane %v2843, 5
    %v2868 = vsel %vm1574, %v2867, %v2866
    %v2869 = vrot.slane %v2845, 4
    %v2870 = vsel %vm1577, %v2869, %v2868
    %v2871 = vrot.slane %v2847, 3
    %v2872 = vsel %vm1580, %v2871, %v2870
    %v2873 = vrot.slane %v2849, 2
    %v2874 = vsel %vm1583, %v2873, %v2872
    %v2875 = vrot.slane %v2851, 1
    %v2876 = vsel %vm1586, %v2875, %v2874
    %v2879 = vsel %vm1590, %v2853, 0.0
    %v2880 = vadd.f32 %v2876, %v2879
    %v2881 = vrot.slane %v2880, 4
    %v2882 = vadd.f32 %v2880, %v2881
    %v2883 = vrot.slane %v2882, 2
    %v2884 = vadd.f32 %v2882, %v2883
    %v2885 = vrot.slane %v2884, 1
    %v2886 = vadd.f32 %v2884, %v2885
    %v2887 = vrcp.pop %v2886
    %v2888 = vmul.f32 %v2886, %v2887
    %v2889 = vsub.f32 2.0, %v2888
    %v2890 = vmul.f32 %v2887, %v2889
    %v2891 = vlaneseq
    %v2892 = vshrl.u32 %v2891, 7
    %v2893 = vsub.s32 0, %v2892
    %v2894 = vrot.slane %v2890, %v2893
    %v2895 = vmul.f32 %v2837, %v2894
    %v2896 = vmul.f32 %v2839, %v2894
    %v2897 = vmul.f32 %v2841, %v2894
    %v2898 = vmul.f32 %v2843, %v2894
    %v2899 = vmul.f32 %v2845, %v2894
    %v2900 = vmul.f32 %v2847, %v2894
    %v2901 = vmul.f32 %v2849, %v2894
    %v2902 = vmul.f32 %v2851, %v2894
    %v2903 = vmul.f32 %v2853, %v2894
    %v2904 = vadd.f32 %v2720, %v2895
    %v2905 = vadd.f32 %v2721, %v2896
    %v2906 = vadd.f32 %v2722, %v2897
    %v2907 = vadd.f32 %v2723, %v2898
    %v2908 = vadd.f32 %v2724, %v2899
    %v2909 = vadd.f32 %v2725, %v2900
    %v2910 = vadd.f32 %v2726, %v2901
    %v2911 = vadd.f32 %v2727, %v2902
    %v2912 = vadd.f32 %v2728, %v2903
    %v2913 = vmul.f32 %v265, %v1407
    %v2914 = vmul.f32 %v270, %v1412
    %v2915 = vmul.f32 %v410, %v1407
    %v2916 = vmul.f32 %v415, %v1412
    %v2917 = vmul.f32 %v555, %v1407
    %v2918 = vmul.f32 %v560, %v1412
    %v2919 = vmul.f32 %v700, %v1407
    %v2920 = vmul.f32 %v705, %v1412
    %v2921 = vmul.f32 %v845, %v1407
    %v2922 = vmul.f32 %v850, %v1412
    %v2923 = vmul.f32 %v988, %v1407
    %v2924 = vmul.f32 %v993, %v1412
    %v2925 = vmul.f32 %v1131, %v1407
    %v2926 = vmul.f32 %v1136, %v1412
    %v2927 = vmul.f32 %v1274, %v1407
    %v2928 = vmul.f32 %v1279, %v1412
    %v2929 = vmul.f32 %v1417, %v1407
    %v2930 = vmul.f32 %v1422, %v1412
    %v2931 = vadd.f32 %v2913, %v2914
    %v2932 = vrot.slane %v2931, 4
    %v2933 = vadd.f32 %v2931, %v2932
    %v2934 = vrot.slane %v2933, 2
    %v2935 = vadd.f32 %v2933, %v2934
    %v2936 = vrot.slane %v2935, 1
    %v2937 = vadd.f32 %v2935, %v2936
    %v2938 = vadd.f32 %v2915, %v2916
    %v2939 = vrot.slane %v2938, 4
    %v2940 = vadd.f32 %v2938, %v2939
    %v2941 = vrot.slane %v2940, 2
    %v2942 = vadd.f32 %v2940, %v2941
    %v2943 = vrot.slane %v2942, 1
    %v2944 = vadd.f32 %v2942, %v2943
    %v2945 = vadd.f32 %v2917, %v2918
    %v2946 = vrot.slane %v2945, 4
    %v2947 = vadd.f32 %v2945, %v2946
    %v2948 = vrot.slane %v2947, 2
    %v2949 = vadd.f32 %v2947, %v2948
    %v2950 = vrot.slane %v2949, 1
    %v2951 = vadd.f32 %v2949, %v2950
    %v2952 = vadd.f32 %v2919, %v2920
    %v2953 = vrot.slane %v2952, 4
    %v2954 = vadd.f32 %v2952, %v2953
    %v2955 = vrot.slane %v2954, 2
    %v2956 = vadd.f32 %v2954, %v2955
    %v2957 = vrot.slane %v2956, 1
    %v2958 = vadd.f32 %v2956, %v2957
    %v2959 = vadd.f32 %v2921, %v2922
    %v2960 = vrot.slane %v2959, 4
    %v2961 = vadd.f32 %v2959, %v2960
    %v2962 = vrot.slane %v2961, 2
    %v2963 = vadd.f32 %v2961, %v2962
    %v2964 = vrot.slane %v2963, 1
    %v2965 = vadd.f32 %v2963, %v2964
    %v2966 = vadd.f32 %v2923, %v2924
    %v2967 = vrot.slane %v2966, 4
    %v2968 = vadd.f32 %v2966, %v2967
    %v2969 = vrot.slane %v2968, 2
    %v2970 = vadd.f32 %v2968, %v2969
    %v2971 = vrot.slane %v2970, 1
    %v2972 = vadd.f32 %v2970, %v2971
    %v2973 = vadd.f32 %v2925, %v2926
    %v2974 = vrot.slane %v2973, 4
    %v2975 = vadd.f32 %v2973, %v2974
    %v2976 = vrot.slane %v2975, 2
    %v2977 = vadd.f32 %v2975, %v2976
    %v2978 = vrot.slane %v2977, 1
    %v2979 = vadd.f32 %v2977, %v2978
    %v2980 = vadd.f32 %v2927, %v2928
    %v2981 = vrot.slane %v2980, 4
    %v2982 = vadd.f32 %v2980, %v2981
    %v2983 = vrot.slane %v2982, 2
    %v2984 = vadd.f32 %v2982, %v2983
    %v2985 = vrot.slane %v2984, 1
    %v2986 = vadd.f32 %v2984, %v2985
    %v2987 = vadd.f32 %v2929, %v2930
    %v2988 = vrot.slane %v2987, 4
    %v2989 = vadd.f32 %v2987, %v2988
    %v2990 = vrot.slane %v2989, 2
    %v2991 = vadd.f32 %v2989, %v2990
    %v2992 = vrot.slane %v2991, 1
    %v2993 = vadd.f32 %v2991, %v2992
    %v2994 = vmul.f32 %v2937, 0.25
    %v2995 = vmul.f32 %v2944, 0.25
    %v2996 = vmul.f32 %v2951, 0.25
    %v2997 = vmul.f32 %v2958, 0.25
    %v2998 = vmul.f32 %v2965, 0.25
    %v2999 = vmul.f32 %v2972, 0.25
    %v3000 = vmul.f32 %v2979, 0.25
    %v3001 = vmul.f32 %v2986, 0.25
    %v3002 = vmul.f32 %v2993, 0.25
    %v3003 = vmax.f32 %v2994, %v2998
    %v3004 = vmax.f32 %v2995, %v2999
    %v3005 = vmax.f32 %v2996, %v3000
    %v3006 = vmax.f32 %v2997, %v3001
    %v3007 = vmax.f32 %v3003, %v3002
    %v3008 = vmax.f32 %v3007, %v3004
    %v3009 = vmax.f32 %v3005, %v3006
    %v3010 = vmax.f32 %v3008, %v3009
    %v3011 = vsub.f32 %v2994, %v3010
    %v3012 = vsub.f32 %v2995, %v3010
    %v3013 = vsub.f32 %v2996, %v3010
    %v3014 = vsub.f32 %v2997, %v3010
    %v3015 = vsub.f32 %v2998, %v3010
    %v3016 = vsub.f32 %v2999, %v3010
    %v3017 = vsub.f32 %v3000, %v3010
    %v3018 = vsub.f32 %v3001, %v3010
    %v3019 = vsub.f32 %v3002, %v3010
    %v3020 = vmul.f32 %v3011, 1.442695
    %v3021 = vpow.pop %v3020
    %v3022 = vmul.f32 %v3012, 1.442695
    %v3023 = vpow.pop %v3022
    %v3024 = vmul.f32 %v3013, 1.442695
    %v3025 = vpow.pop %v3024
    %v3026 = vmul.f32 %v3014, 1.442695
    %v3027 = vpow.pop %v3026
    %v3028 = vmul.f32 %v3015, 1.442695
    %v3029 = vpow.pop %v3028
    %v3030 = vmul.f32 %v3016, 1.442695
    %v3031 = vpow.pop %v3030
    %v3032 = vmul.f32 %v3017, 1.442695
    %v3033 = vpow.pop %v3032
    %v3034 = vmul.f32 %v3018, 1.442695
    %v3035 = vpow.pop %v3034
    %v3036 = vmul.f32 %v3019, 1.442695
    %v3037 = vpow.pop %v3036
    %v3047 = vrot.slane %v3023, 7
    %v3048 = vsel %vm1568, %v3047, %v3021
    %v3049 = vrot.slane %v3025, 6
    %v3050 = vsel %vm1571, %v3049, %v3048
    %v3051 = vrot.slane %v3027, 5
    %v3052 = vsel %vm1574, %v3051, %v3050
    %v3053 = vrot.slane %v3029, 4
    %v3054 = vsel %vm1577, %v3053, %v3052
    %v3055 = vrot.slane %v3031, 3
    %v3056 = vsel %vm1580, %v3055, %v3054
    %v3057 = vrot.slane %v3033, 2
    %v3058 = vsel %vm1583, %v3057, %v3056
    %v3059 = vrot.slane %v3035, 1
    %v3060 = vsel %vm1586, %v3059, %v3058
    %v3063 = vsel %vm1590, %v3037, 0.0
    %v3064 = vadd.f32 %v3060, %v3063
    %v3065 = vrot.slane %v3064, 4
    %v3066 = vadd.f32 %v3064, %v3065
    %v3067 = vrot.slane %v3066, 2
    %v3068 = vadd.f32 %v3066, %v3067
    %v3069 = vrot.slane %v3068, 1
    %v3070 = vadd.f32 %v3068, %v3069
    %v3071 = vrcp.pop %v3070
    %v3072 = vmul.f32 %v3070, %v3071
    %v3073 = vsub.f32 2.0, %v3072
    %v3074 = vmul.f32 %v3071, %v3073
    %v3075 = vlaneseq
    %v3076 = vshrl.u32 %v3075, 7
    %v3077 = vsub.s32 0, %v3076
    %v3078 = vrot.slane %v3074, %v3077
    %v3079 = vmul.f32 %v3021, %v3078
    %v3080 = vmul.f32 %v3023, %v3078
    %v3081 = vmul.f32 %v3025, %v3078
    %v3082 = vmul.f32 %v3027, %v3078
    %v3083 = vmul.f32 %v3029, %v3078
    %v3084 = vmul.f32 %v3031, %v3078
    %v3085 = vmul.f32 %v3033, %v3078
    %v3086 = vmul.f32 %v3035, %v3078
    %v3087 = vmul.f32 %v3037, %v3078
    %v3088 = vadd.f32 %v2904, %v3079
    %v3089 = vadd.f32 %v2905, %v3080
    %v3090 = vadd.f32 %v2906, %v3081
    %v3091 = vadd.f32 %v2907, %v3082
    %v3092 = vadd.f32 %v2908, %v3083
    %v3093 = vadd.f32 %v2909, %v3084
    %v3094 = vadd.f32 %v2910, %v3085
    %v3095 = vadd.f32 %v2911, %v3086
    %v3096 = vadd.f32 %v2912, %v3087
    %v3097 = vlaneseq
    %v3098 = vshrl.u32 %v3097, 7
    %v3099 = vsub.s32 0, %v3098
    %v3100 = vrot.slane %v3088, %v3099
    %v3101 = vlaneseq
    %v3102 = vshrl.u32 %v3101, 7
    %v3103 = vsub.s32 0, %v3102
    %v3104 = vrot.slane %v3089, %v3103
    %v3105 = vlaneseq
    %v3106 = vshrl.u32 %v3105, 7
    %v3107 = vsub.s32 0, %v3106
    %v3108 = vrot.slane %v3090, %v3107
    %v3109 = vlaneseq
    %v3110 = vshrl.u32 %v3109, 7
    %v3111 = vsub.s32 0, %v3110
    %v3112 = vrot.slane %v3091, %v3111
    %v3113 = vlaneseq
    %v3114 = vshrl.u32 %v3113, 7
    %v3115 = vsub.s32 0, %v3114
    %v3116 = vrot.slane %v3092, %v3115
    %v3117 = vlaneseq
    %v3118 = vshrl.u32 %v3117, 7
    %v3119 = vsub.s32 0, %v3118
    %v3120 = vrot.slane %v3093, %v3119
    %v3121 = vlaneseq
    %v3122 = vshrl.u32 %v3121, 7
    %v3123 = vsub.s32 0, %v3122
    %v3124 = vrot.slane %v3094, %v3123
    %v3125 = vlaneseq
    %v3126 = vshrl.u32 %v3125, 7
    %v3127 = vsub.s32 0, %v3126
    %v3128 = vrot.slane %v3095, %v3127
    %v3129 = vlaneseq
    %v3130 = vshrl.u32 %v3129, 7
    %v3131 = vsub.s32 0, %v3130
    %v3132 = vrot.slane %v3096, %v3131
    %v3133 = vmul.f32 %v235, %v3100
    %v3134 = vmul.f32 %v240, %v3100
    %v3135 = vmul.f32 %v245, %v3100
    %v3136 = vmul.f32 %v250, %v3100
    %v3137 = vmul.f32 %v380, %v3104
    %v3138 = vmul.f32 %v385, %v3104
    %v3139 = vmul.f32 %v390, %v3104
    %v3140 = vmul.f32 %v395, %v3104
    %v3141 = vmul.f32 %v525, %v3108
    %v3142 = vmul.f32 %v530, %v3108
    %v3143 = vmul.f32 %v535, %v3108
    %v3144 = vmul.f32 %v540, %v3108
    %v3145 = vmul.f32 %v670, %v3112
    %v3146 = vmul.f32 %v675, %v3112
    %v3147 = vmul.f32 %v680, %v3112
    %v3148 = vmul.f32 %v685, %v3112
    %v3149 = vmul.f32 %v815, %v3116
    %v3150 = vmul.f32 %v820, %v3116
    %v3151 = vmul.f32 %v825, %v3116
    %v3152 = vmul.f32 %v830, %v3116
    %v3153 = vmul.f32 %v958, %v3120
    %v3154 = vmul.f32 %v963, %v3120
    %v3155 = vmul.f32 %v968, %v3120
    %v3156 = vmul.f32 %v973, %v3120
    %v3157 = vmul.f32 %v1101, %v3124
    %v3158 = vmul.f32 %v1106, %v3124
    %v3159 = vmul.f32 %v1111, %v3124
    %v3160 = vmul.f32 %v1116, %v3124
    %v3161 = vmul.f32 %v1244, %v3128
    %v3162 = vmul.f32 %v1249, %v3128
    %v3163 = vmul.f32 %v1254, %v3128
    %v3164 = vmul.f32 %v1259, %v3128
    %v3165 = vmul.f32 %v1387, %v3132
    %v3166 = vmul.f32 %v1392, %v3132
    %v3167 = vmul.f32 %v1397, %v3132
    %v3168 = vmul.f32 %v1402, %v3132
    %v3169 = vadd.f32 %v3133, %v3137
    %v3170 = vadd.f32 %v3169, %v3141
    %v3171 = vadd.f32 %v3170, %v3145
    %v3172 = vadd.f32 %v3171, %v3149
    %v3173 = vadd.f32 %v3172, %v3153
    %v3174 = vadd.f32 %v3173, %v3157
    %v3175 = vadd.f32 %v3174, %v3161
    %v3176 = vadd.f32 %v3175, %v3165
    %v3177 = vadd.f32 %v3134, %v3138
    %v3178 = vadd.f32 %v3177, %v3142
    %v3179 = vadd.f32 %v3178, %v3146
    %v3180 = vadd.f32 %v3179, %v3150
    %v3181 = vadd.f32 %v3180, %v3154
    %v3182 = vadd.f32 %v3181, %v3158
    %v3183 = vadd.f32 %v3182, %v3162
    %v3184 = vadd.f32 %v3183, %v3166
    %v3185 = vadd.f32 %v3135, %v3139
    %v3186 = vadd.f32 %v3185, %v3143
    %v3187 = vadd.f32 %v3186, %v3147
    %v3188 = vadd.f32 %v3187, %v3151
    %v3189 = vadd.f32 %v3188, %v3155
    %v3190 = vadd.f32 %v3189, %v3159
    %v3191 = vadd.f32 %v3190, %v3163
    %v3192 = vadd.f32 %v3191, %v3167
    %v3193 = vadd.f32 %v3136, %v3140
    %v3194 = vadd.f32 %v3193, %v3144
    %v3195 = vadd.f32 %v3194, %v3148
    %v3196 = vadd.f32 %v3195, %v3152
    %v3197 = vadd.f32 %v3196, %v3156
    %v3198 = vadd.f32 %v3197, %v3160
    %v3199 = vadd.f32 %v3198, %v3164
    %v3200 = vadd.f32 %v3199, %v3168
    %v3201 = vmul.f32 %v3176, 0.11111111
    %v3202 = vmul.f32 %v3184, 0.11111111
    %v3203 = vmul.f32 %v3192, 0.11111111
    %v3204 = vmul.f32 %v3200, 0.11111111
    %v3205 = vld [vmem:[%s3] sm:$0xff]
    %v3206 = vld [vmem:[%s3 + $0x8] sm:$0xff]
    %v3207 = vld [vmem:[%s3 + $0x10] sm:$0xff]
    %v3208 = vld [vmem:[%s3 + $0x18] sm:$0xff]
    %v3209 = vld [vmem:[%s3 + $0x20] sm:$0xff]
    %v3210 = vld [vmem:[%s3 + $0x28] sm:$0xff]
    %v3211 = vld [vmem:[%s4] sm:$0xff]
    %v3212 = vld [vmem:[%s4 + $0x8] sm:$0xff]
    %v3213 = vld [vmem:[%s4 + $0x10] sm:$0xff]
    %v3214 = vld [vmem:[%s4 + $0x18] sm:$0xff]
    %v3215 = vld [vmem:[%s4 + $0x20] sm:$0xff]
    %v3216 = vld [vmem:[%s4 + $0x28] sm:$0xff]
    %3218 = vset.pattern.permute.xlu0 0
    %3219 = vperm.xlu0 %3218, %v3211
    %v3220 = vpop.permute.xlu0 %3219
    %3223 = vset.pattern.permute.xlu0 0
    %3224 = vperm.xlu0 %3223, %v3212
    %v3225 = vpop.permute.xlu0 %3224
    %3228 = vset.pattern.permute.xlu0 0
    %3229 = vperm.xlu0 %3228, %v3213
    %v3230 = vpop.permute.xlu0 %3229
    %3233 = vset.pattern.permute.xlu0 0
    %3234 = vperm.xlu0 %3233, %v3214
    %v3235 = vpop.permute.xlu0 %3234
    %3238 = vset.pattern.permute.xlu0 0
    %3239 = vperm.xlu0 %3238, %v3215
    %v3240 = vpop.permute.xlu0 %3239
    %3243 = vset.pattern.permute.xlu0 0
    %3244 = vperm.xlu0 %3243, %v3216
    %v3245 = vpop.permute.xlu0 %3244
    %vm3247 = vcmask 261120
    %v3249 = vsel %vm3247, %v3205, 0
    %v3252 = vsel %vm3247, %v3206, 0
    %v3255 = vsel %vm3247, %v3207, 0
    %v3258 = vsel %vm3247, %v3208, 0
    %v3261 = vsel %vm3247, %v3209, 0
    %v3264 = vsel %vm3247, %v3210, 0
    %3266 = vmatprep.subr.mxu0 0.0
    %3267 = vmatpush1.msra.mxu0 0.0
    %3268 = vmatprep.subr.mxu0 0.0
    %3269 = vmatpush1.msra.mxu0 0.0
    %3270 = vmatprep.subr.mxu0 0.0
    %3271 = vmatpush1.msra.mxu0 0.0
    %3272 = vmatprep.subr.mxu0 0.0
    %3273 = vmatpush1.msra.mxu0 0.0
    %3274 = vmatprep.subr.mxu0 0.0
    %3275 = vmatpush1.msra.mxu0 0.0
    %3276 = vmatprep.subr.mxu0 0.0
    %3277 = vmatpush1.msra.mxu0 0.0
    %3278 = vmatprep.subr.mxu0 0.0
    %3279 = vmatpush1.msra.mxu0 0.0
    %3280 = vmatprep.subr.mxu0 0.0
    %3281 = vmatpush1.msra.mxu0 0.0
    %3282 = vmatprep.subr.mxu0 0.0
    %3283 = vmatpush1.msra.mxu0 0.0
    %3284 = vmatprep.subr.mxu0 0.0
    %3285 = vmatpush1.msra.mxu0 0.0
    %3286 = vmatprep.subr.mxu0 0.0
    %3287 = vmatpush1.msra.mxu0 0.0
    %3288 = vmatprep.subr.mxu0 0.0
    %3289 = vmatpush1.msra.mxu0 0.0
    %3290 = vmatprep.subr.mxu0 0.0
    %3291 = vmatpush1.msra.mxu0 %v3204
    %3292 = vmatprep.subr.mxu0 0.0
    %3293 = vmatpush1.msra.mxu0 %v3203
    %3294 = vmatprep.subr.mxu0 0.0
    %3295 = vmatpush1.msra.mxu0 %v3202
    %3296 = vmatprep.subr.mxu0 0.0
    %3297 = vmatpush1.msra.mxu0 %v3201
    %3298 = vmatprep.subr.mxu0 0.0
    %3299 = vmatpush2.msra.mxu0 0.0
    %3300 = vmatprep.subr.mxu0 0.0
    %3301 = vmatpush2.msra.mxu0 0.0
    %3302 = vmatprep.subr.mxu0 0.0
    %3303 = vmatpush2.msra.mxu0 0.0
    %3304 = vmatprep.subr.mxu0 0.0
    %3305 = vmatpush2.msra.mxu0 0.0
    %3306 = vmatprep.subr.mxu0 0.0
    %3307 = vmatpush2.msra.mxu0 0.0
    %3308 = vmatprep.subr.mxu0 0.0
    %3309 = vmatpush2.msra.mxu0 0.0
    %3310 = vmatprep.subr.mxu0 0.0
    %3311 = vmatpush2.msra.mxu0 0.0
    %3312 = vmatprep.subr.mxu0 0.0
    %3313 = vmatpush2.msra.mxu0 0.0
    %3314 = vmatprep.subr.mxu0 0.0
    %3315 = vmatpush2.msra.mxu0 0.0
    %3316 = vmatprep.subr.mxu0 0.0
    %3317 = vmatpush2.msra.mxu0 0.0
    %3318 = vmatprep.subr.mxu0 0.0
    %3319 = vmatpush2.msra.mxu0 0.0
    %3320 = vmatprep.subr.mxu0 0.0
    %3321 = vmatpush2.msra.mxu0 0.0
    %3322 = vmatprep.subr.mxu0 0.0
    %3323 = vmatpush2.msra.mxu0 0.0
    %3324 = vmatprep.subr.mxu0 0.0
    %3325 = vmatpush2.msra.mxu0 0.0
    %3326 = vmatprep.subr.mxu0 0.0
    %3327 = vmatpush2.msra.mxu0 0.0
    %3328 = vmatprep.subr.mxu0 0.0
    %3329 = vmatpush2.msra.mxu0 0.0
    %3330 = vmatprep.mubr.f32.mxu0 0.0
    %3331 = vmatmul.mubr.f32.gmra.mxu0 %v3249
    %v3332 = vpop.f32.mrf.mxu0
    %v3333 = vadd.f32 %v3220, %v3332
    %v3334 = vpop.f32.mrf.mxu0
    %3335 = vmatprep.mubr.f32.mxu0 0.0
    %3336 = vmatmul.mubr.f32.gmra.mxu0 %v3252
    %v3337 = vpop.f32.mrf.mxu0
    %v3338 = vadd.f32 %v3225, %v3337
    %v3339 = vpop.f32.mrf.mxu0
    %3340 = vmatprep.mubr.f32.mxu0 0.0
    %3341 = vmatmul.mubr.f32.gmra.mxu0 %v3255
    %v3342 = vpop.f32.mrf.mxu0
    %v3343 = vadd.f32 %v3230, %v3342
    %v3344 = vpop.f32.mrf.mxu0
    %3345 = vmatprep.mubr.f32.mxu0 0.0
    %3346 = vmatmul.mubr.f32.gmra.mxu0 %v3258
    %v3347 = vpop.f32.mrf.mxu0
    %v3348 = vadd.f32 %v3235, %v3347
    %v3349 = vpop.f32.mrf.mxu0
    %3350 = vmatprep.mubr.f32.mxu0 0.0
    %3351 = vmatmul.mubr.f32.gmra.mxu0 %v3261
    %v3352 = vpop.f32.mrf.mxu0
    %v3353 = vadd.f32 %v3240, %v3352
    %v3354 = vpop.f32.mrf.mxu0
    %3355 = vmatprep.mubr.f32.mxu0 0.0
    %3356 = vmatmul.mubr.f32.gmra.mxu0 %v3264
    %v3357 = vpop.f32.mrf.mxu0
    %v3358 = vadd.f32 %v3245, %v3357
    %v3359 = vpop.f32.mrf.mxu0
    %3360 = vdwg.mxu0
    %vm3361 = vcmp.ge.f32.partialorder %v3333, 0.0
    %vm3362 = vcmp.ge.f32.partialorder %v3338, 0.0
    %vm3363 = vcmp.ge.f32.partialorder %v3343, 0.0
    %vm3364 = vcmp.ge.f32.partialorder %v3348, 0.0
    %v3365 = vmul.f32 %v3333, 0.01
    %v3366 = vmul.f32 %v3338, 0.01
    %v3367 = vmul.f32 %v3343, 0.01
    %v3368 = vmul.f32 %v3348, 0.01
    %v3369 = vsel %vm3361, %v3333, %v3365
    %v3370 = vsel %vm3362, %v3338, %v3366
    %v3371 = vsel %vm3363, %v3343, %v3367
    %v3372 = vsel %vm3364, %v3348, %v3368
    %v3373 = vld [vmem:[%s5] sm:$0xff]
    %v3374 = vld [vmem:[%s5 + $0x8] sm:$0xff]
    %v3375 = vld [vmem:[%s5 + $0x10] sm:$0xff]
    %v3376 = vld [vmem:[%s5 + $0x18] sm:$0xff]
    %3378 = vset.pattern.permute.xlu0 0
    %3379 = vperm.xlu0 %3378, %v3373
    %v3380 = vpop.permute.xlu0 %3379
    %3383 = vset.pattern.permute.xlu0 0
    %3384 = vperm.xlu0 %3383, %v3374
    %v3385 = vpop.permute.xlu0 %3384
    %3388 = vset.pattern.permute.xlu0 0
    %3389 = vperm.xlu0 %3388, %v3375
    %v3390 = vpop.permute.xlu0 %3389
    %3393 = vset.pattern.permute.xlu0 0
    %3394 = vperm.xlu0 %3393, %v3376
    %v3395 = vpop.permute.xlu0 %3394
    %v3397 = vmul.f32 %v3369, %v3380
    %v3398 = vmul.f32 %v3370, %v3385
    %v3399 = vmul.f32 %v3371, %v3390
    %v3400 = vmul.f32 %v3372, %v3395
    %v3401 = vadd.f32 %v3397, %v3398
    %v3402 = vadd.f32 %v3401, %v3399
    %v3403 = vadd.f32 %v3402, %v3400
    %v3404 = vrot.slane %v3403, 4
    %v3405 = vadd.f32 %v3403, %v3404
    %v3406 = vrot.slane %v3405, 2
    %v3407 = vadd.f32 %v3405, %v3406
    %v3408 = vrot.slane %v3407, 1
    %v3409 = vadd.f32 %v3407, %v3408
    %v3410 = vld [vmem:[#allocation2] sm:$0x1]
    %3412 = vset.pattern.permute.xlu0 0
    %3413 = vperm.xlu0 %3412, %v3410
    %v3414 = vpop.permute.xlu0 %3413
    %v3416 = vlaneseq
    %v3417 = vshrl.u32 %v3416, 7
    %v3418 = vsub.s32 0, %v3417
    %v3419 = vrot.slane %v3414, %v3418
    %v3420 = vadd.f32 %v3409, %v3419
    %v3421 = vadd.f32 %v3353, %v275
    %v3422 = vand.u32 2147483647, %v3421
    %v3423 = vadd.f32 %v3422, 1e-10
    %v3424 = vadd.f32 %v3358, %v280
    %v3425 = vand.u32 2147483647, %v3424
    %v3426 = vadd.f32 %v3425, 1e-10
    %v3427 = vmul.f32 %v3423, %v3426
    %v3428 = vsub.f32 %v3427, %v3423
    %v3429 = vld [vmem:[%s1] sm:$0xf]
    %v3430 = vlaneseq
    %v3431 = vshrl.u32 %v3430, 7
    %v3432 = vsub.s32 0, %v3431
    %v3433 = vrot.slane %v3427, %v3432
    %v3434 = vmul.f32 %v3429, %v3433
    %v3435 = vadd.f32 %v3434, 0.0
    %s3436 = scalar_lea.vmem %s1, 16
    %v3437 = vld [vmem:[%s3436] sm:$0xf]
    %v3438 = vlaneseq
    %v3439 = vshrl.u32 %v3438, 7
    %v3440 = vsub.s32 0, %v3439
    %v3441 = vrot.slane %v3428, %v3440
    %v3442 = vmul.f32 %v3437, %v3441
    %v3443 = vsub.f32 %v3435, %v3442
    %v3444 = vadd.f32 %v3353, %v420
    %v3445 = vand.u32 2147483647, %v3444
    %v3446 = vadd.f32 %v3445, 1e-10
    %v3447 = vadd.f32 %v3358, %v425
    %v3448 = vand.u32 2147483647, %v3447
    %v3449 = vadd.f32 %v3448, 1e-10
    %v3450 = vmul.f32 %v3446, %v3449
    %v3451 = vsub.f32 %v3450, %v3446
    %s3452 = scalar_lea.vmem %s1, 4
    %v3453 = vld [vmem:[%s3452] sm:$0xf]
    %v3454 = vlaneseq
    %v3455 = vshrl.u32 %v3454, 7
    %v3456 = vsub.s32 0, %v3455
    %v3457 = vrot.slane %v3450, %v3456
    %v3458 = vmul.f32 %v3453, %v3457
    %v3459 = vadd.f32 %v3443, %v3458
    %s3460 = scalar_lea.vmem %s1, 20
    %v3461 = vld [vmem:[%s3460] sm:$0xf]
    %v3462 = vlaneseq
    %v3463 = vshrl.u32 %v3462, 7
    %v3464 = vsub.s32 0, %v3463
    %v3465 = vrot.slane %v3451, %v3464
    %v3466 = vmul.f32 %v3461, %v3465
    %v3467 = vsub.f32 %v3459, %v3466
    %v3468 = vadd.f32 %v3353, %v565
    %v3469 = vand.u32 2147483647, %v3468
    %v3470 = vadd.f32 %v3469, 1e-10
    %v3471 = vadd.f32 %v3358, %v570
    %v3472 = vand.u32 2147483647, %v3471
    %v3473 = vadd.f32 %v3472, 1e-10
    %v3474 = vmul.f32 %v3470, %v3473
    %v3475 = vsub.f32 %v3474, %v3470
    %s3476 = scalar_lea.vmem %s1, 8
    %v3477 = vld [vmem:[%s3476] sm:$0xf]
    %v3478 = vlaneseq
    %v3479 = vshrl.u32 %v3478, 7
    %v3480 = vsub.s32 0, %v3479
    %v3481 = vrot.slane %v3474, %v3480
    %v3482 = vmul.f32 %v3477, %v3481
    %v3483 = vadd.f32 %v3467, %v3482
    %s3484 = scalar_lea.vmem %s1, 24
    %v3485 = vld [vmem:[%s3484] sm:$0xf]
    %v3486 = vlaneseq
    %v3487 = vshrl.u32 %v3486, 7
    %v3488 = vsub.s32 0, %v3487
    %v3489 = vrot.slane %v3475, %v3488
    %v3490 = vmul.f32 %v3485, %v3489
    %v3491 = vsub.f32 %v3483, %v3490
    %v3492 = vadd.f32 %v3353, %v710
    %v3493 = vand.u32 2147483647, %v3492
    %v3494 = vadd.f32 %v3493, 1e-10
    %v3495 = vadd.f32 %v3358, %v715
    %v3496 = vand.u32 2147483647, %v3495
    %v3497 = vadd.f32 %v3496, 1e-10
    %v3498 = vmul.f32 %v3494, %v3497
    %v3499 = vsub.f32 %v3498, %v3494
    %s3500 = scalar_lea.vmem %s1, 12
    %v3501 = vld [vmem:[%s3500] sm:$0xf]
    %v3502 = vlaneseq
    %v3503 = vshrl.u32 %v3502, 7
    %v3504 = vsub.s32 0, %v3503
    %v3505 = vrot.slane %v3498, %v3504
    %v3506 = vmul.f32 %v3501, %v3505
    %v3507 = vadd.f32 %v3491, %v3506
    %s3508 = scalar_lea.vmem %s1, 28
    %v3509 = vld [vmem:[%s3508] sm:$0xf]
    %v3510 = vlaneseq
    %v3511 = vshrl.u32 %v3510, 7
    %v3512 = vsub.s32 0, %v3511
    %v3513 = vrot.slane %v3499, %v3512
    %v3514 = vmul.f32 %v3509, %v3513
    %v3515 = vsub.f32 %v3507, %v3514
    %v3516 = vadd.f32 %v3515, %v3420
    %3517 = vst [vmem:[#allocation3] sm:$0xf] %v3516
    // Predicated region
    $region30: #{tpu_custom_call.1} parent=1 // pred_check
      _
    $region31: #{tpu_custom_call.1} parent=1 // pred_check_branch
      %3519 = sbr.rel (0) target = $region33
    $region32: #{tpu_custom_call.1} parent=1 // pred_region
      %s3521 = ssub.s32 64, 64
      %3522 = vsyncadd [#allocation4], %s3521
      %s3524 = sshll.u32 [#allocation3], 4
      %s3525 = int_to_ptr.vmem [resolvable:$true] %s3524
      %3527 = dma.vmem_to_hbm [thread:$0]  %s3525, 64, %s7, [#allocation4]
    $region33: #{tpu_custom_call.1} parent=1 // pred_fallthru
      _
    // Predicated region
    $region34: #{tpu_custom_call.1} parent=1 // pred_check
      _
    $region35: #{tpu_custom_call.1} parent=1 // pred_check_branch
      %3529 = sbr.rel (0) target = $region37
    $region36: #{tpu_custom_call.1} parent=1 // pred_region
      %3530 = dma.done [#allocation4], 64
    $region37: #{tpu_custom_call.1} parent=1 // pred_fallthru
      _
    %3531 = vsyncpa [#allocation4], 1

</llo_original>
